<compile_context>
chip_gen: v5e
topology: v5e:2x2
jax: 0.10.0
libtpu: 0.0.40
codegen_flags: <defaults>
</compile_context>

<pallas_src>
import functools

import jax
import jax.numpy as jnp
from jax import lax
from jax.experimental import pallas as pl
from jax.experimental.pallas import tpu as pltpu

EPS = 1e-5
# nn.PReLU() default init value; baked statically into the kernel epilogue.
# TODO(synk): a trained checkpoint's learned PReLU alpha (or per-channel
# nn.PReLU(num_parameters=C)) would be passed as a pack-time constant instead.
PRELU_ALPHA = 0.25

_VMEM_SPEC = pl.BlockSpec(memory_space=pltpu.MemorySpace.VMEM)


# ---------------------------------------------------------------------------
# In-kernel building blocks (MXU dots + iota selectors + VPU elementwise only)
# ---------------------------------------------------------------------------
def _prelu(y, alpha):
    return jnp.where(y >= 0.0, y, alpha * y)


def _selector(nrows, ncols, row_mult, col_mult, offset):
    """0/1 matrix S with S[r, c] = 1 where col_mult*c == row_mult*r + offset.

    Built from two broadcasted iotas and used as an MXU operand: strided
    gather, shift (zero padding) and even/odd interleave all become matmuls,
    avoiding strided memory ops / scatters / minor-dim reshapes entirely.
    """
    r = lax.broadcasted_iota(jnp.int32, (nrows, ncols), 0)
    c = lax.broadcasted_iota(jnp.int32, (nrows, ncols), 1)
    return (col_mult * c == row_mult * r + offset).astype(jnp.float32)


def _down_block(a, w_all, shift, alpha):
    """Conv1d(k=3, s=2, p=1) + folded BatchNorm(eval) + PReLU, one batch element.

    a: (L, Cin) f32.  w_all: (Cin, 3*Cout) bf16 (block k = W[:, :, k]^T, BN scale
    folded).  shift: (1, Cout) f32.  Returns (L//2, Cout) f32.
    """
    l_in, cin = a.shape
    cout = w_all.shape[1] // 3
    l_out = l_in // 2
    if cin == 1:  # first layer: the K=1 "matmul" is just a VPU outer product
        m = a * w_all.astype(jnp.float32)
    else:
        m = jnp.dot(a.astype(jnp.bfloat16), w_all,
                    preferred_element_type=jnp.float32)
    y = None
    for k in range(3):
        # Output t taps x[2*t + k - 1]; rows whose tap is out of range select
        # nothing, which implements the p=1 zero padding for free.
        sel = _selector(l_out, l_in, row_mult=2, col_mult=1, offset=k - 1)
        part = jnp.dot(sel, m[:, k * cout:(k + 1) * cout],
                       preferred_element_type=jnp.float32)
        y = part if y is None else y + part
    # Dropout(0.1) is identity in eval mode.
    return _prelu(y + shift, alpha)


def _up_block(a, w_all, shift, alpha):
    """ConvTranspose1d(k=4, s=2, p=1) + folded BatchNorm(eval) + PReLU.

    a: (L, Cin) f32.  w_all: (Cin, 4*Cout) bf16 (block j = W[:, :, j], BN scale
    folded).  shift: (1, Cout) f32.  Returns (2*L, Cout) f32.
    """
    l_in, cin = a.shape
    cout = w_all.shape[1] // 4
    l_out = 2 * l_in
    m = jnp.dot(a.astype(jnp.bfloat16), w_all, preferred_element_type=jnp.float32)
    y = None
    for j in range(4):
        # Output o receives x[(o + 1 - j)/2] through tap j; the selector is zero
        # where (o+1-j) is odd or the tap falls outside [0, L) (implicit pad).
        sel = _selector(l_out, l_in, row_mult=1, col_mult=2, offset=1 - j)
        part = jnp.dot(sel, m[:, j * cout:(j + 1) * cout],
                       preferred_element_type=jnp.float32)
        y = part if y is None else y + part
    # Dropout(0.1) is identity in eval mode.
    return _prelu(y + shift, alpha)


def _linear(a, w, b):
    return jnp.dot(a.astype(jnp.bfloat16), w, preferred_element_type=jnp.float32) + b


# ---------------------------------------------------------------------------
# The fused kernel: whole network, one launch, everything VMEM-resident
# ---------------------------------------------------------------------------
def _specklenet_kernel(
    xt_ref,
    wd1_ref, sd1_ref, wd2_ref, sd2_ref, wd3_ref, sd3_ref,
    wu3_ref, su3_ref, wu2_ref, su2_ref, wu1_ref, su1_ref,
    wf1_ref, bf1_ref, wf2_ref, bf2_ref, wf3_ref, bf3_ref,
    out_ref,
    *, alpha,
):
    xt = xt_ref[...]                                   # (L, B) f32
    wd1, sd1 = wd1_ref[...], sd1_ref[...]
    wd2, sd2 = wd2_ref[...], sd2_ref[...]
    wd3, sd3 = wd3_ref[...], sd3_ref[...]
    wu3, su3 = wu3_ref[...], su3_ref[...]
    wu2, su2 = wu2_ref[...], su2_ref[...]
    wu1, su1 = wu1_ref[...], su1_ref[...]
    wf1, bf1 = wf1_ref[...], bf1_ref[...]
    wf2, bf2 = wf2_ref[...], bf2_ref[...]
    wf3, bf3 = wf3_ref[...], bf3_ref[...]

    # B is tiny and static -> unrolled.  TODO(synk): for production B*L make the
    # batch a grid axis with dimension_semantics=("parallel",) (v7x 2-TC sharding)
    # and set vmem_limit_bytes once a block no longer fits scoped VMEM.
    for b in range(xt.shape[1]):
        x = xt[:, b:b + 1]                                         # (L, 1)
        d1 = _down_block(x, wd1, sd1, alpha)                       # (L/2, 32)
        d2 = _down_block(d1, wd2, sd2, alpha)                      # (L/4, 64)
        d3 = _down_block(d2, wd3, sd3, alpha)                      # (L/8, 128)
        u3 = _up_block(d3, wu3, su3, alpha)                        # (L/4, 64)
        u3 = jnp.concatenate([u3[:d2.shape[0], :], d2], axis=-1)   # (L/4, 128)
        u2 = _up_block(u3, wu2, su2, alpha)                        # (L/2, 32)
        u2 = jnp.concatenate([u2, d1], axis=-1)                    # (L/2, 64)
        u1 = _up_block(u2, wu1, su1, alpha)                        # (L, 16)
        pooled = jnp.mean(u1, axis=0, keepdims=True)               # (1, 16)
        h = _prelu(_linear(pooled, wf1, bf1), alpha)               # (1, outdim)
        h = _prelu(_linear(h, wf2, bf2), alpha)                    # fc Dropout = identity (eval)
        h = _linear(h, wf3, bf3)
        # Exact sigmoid; pl.reciprocal(..., approx=True) would push the divide to
        # the EUP but the exact form is kept to guarantee the [0, 1] range bitwise.
        out_ref[b:b + 1, :] = 1.0 / (1.0 + jnp.exp(-h))


def multiscale_specklenet_forward(x, params, *, alpha=PRELU_ALPHA):
    """x: (B, L) f32 -> (B, outdim) f32.  Whole network = ONE pallas_call."""
    bsz, _ = x.shape
    flat = (params["down1"] + params["down2"] + params["down3"]
            + params["up3"] + params["up2"] + params["up1"]
            + params["fc1"] + params["fc2"] + params["fc3"])
    outdim = params["fc3"][0].shape[1]
    xt = jnp.transpose(x).astype(jnp.float32)     # (L, B): per-batch column slices
    kernel = functools.partial(_specklenet_kernel, alpha=float(alpha))
    return pl.pallas_call(
        kernel,
        out_shape=jax.ShapeDtypeStruct((bsz, outdim), jnp.float32),
        in_specs=[_VMEM_SPEC] * (1 + len(flat)),
        out_specs=_VMEM_SPEC,
    )(xt, *flat)


# ---------------------------------------------------------------------------
# One-time weight packing (transpose / tap-concat / BN fold / bf16 cast)
# ---------------------------------------------------------------------------
def _fold_bn(bias, gamma, beta, running_mean, running_var):
    scale = gamma / jnp.sqrt(running_var + EPS)
    shift = beta + scale * (bias - running_mean)
    return scale, shift


def pack_down_block(w, bias, gamma, beta, running_mean, running_var):
    """Conv1d weight (Cout, Cin, K) -> (Cin, K*Cout) bf16 with BN scale folded."""
    cout, cin, k = w.shape
    scale, shift = _fold_bn(bias, gamma, beta, running_mean, running_var)
    w_all = jnp.transpose(w, (1, 2, 0)).reshape(cin, k * cout)   # [cin, (k, cout)]
    w_all = w_all * jnp.tile(scale, (k,))[None, :]
    return w_all.astype(jnp.bfloat16), shift.reshape(1, cout).astype(jnp.float32)


def pack_up_block(w, bias, gamma, beta, running_mean, running_var):
    """ConvTranspose1d weight (Cin, Cout, K) -> (Cin, K*Cout) bf16, BN folded."""
    cin, cout, k = w.shape
    scale, shift = _fold_bn(bias, gamma, beta, running_mean, running_var)
    w_all = jnp.transpose(w, (0, 2, 1)).reshape(cin, k * cout)   # [cin, (k, cout)]
    w_all = w_all * jnp.tile(scale, (k,))[None, :]
    return w_all.astype(jnp.bfloat16), shift.reshape(1, cout).astype(jnp.float32)


def pack_linear(w, bias):
    """nn.Linear weight (out, in) -> (in, out) bf16; bias -> (1, out) f32."""
    return (jnp.transpose(w).astype(jnp.bfloat16),
            bias.reshape(1, -1).astype(jnp.float32))


def init_params(key, outdim):
    keys = jax.random.split(key, 9)

    def bn_stats(k, c):
        k1, k2, k3, k4 = jax.random.split(k, 4)
        gamma = 1.0 + 0.1 * jax.random.normal(k1, (c,), jnp.float32)
        beta = 0.1 * jax.random.normal(k2, (c,), jnp.float32)
        rm = 0.1 * jax.random.normal(k3, (c,), jnp.float32)   # BN running_mean
        rv = jax.random.uniform(k4, (c,), jnp.float32, 0.5, 1.5)  # running_var
        return gamma, beta, rm, rv

    def down_init(k, cin, cout, ksz=3):
        kw, kb = jax.random.split(k)
        w = jax.random.normal(kw, (cout, cin, ksz), jnp.float32) / jnp.sqrt(cin * ksz)
        b = jnp.zeros((cout,), jnp.float32)
        return pack_down_block(w, b, *bn_stats(kb, cout))

    def up_init(k, cin, cout, ksz=4):
        kw, kb = jax.random.split(k)
        w = jax.random.normal(kw, (cin, cout, ksz), jnp.float32) / jnp.sqrt(cin * ksz)
        b = jnp.zeros((cout,), jnp.float32)
        return pack_up_block(w, b, *bn_stats(kb, cout))

    def linear_init(k, din, dout):
        w = jax.random.normal(k, (dout, din), jnp.float32) / jnp.sqrt(float(din))
        b = jnp.zeros((dout,), jnp.float32)
        return pack_linear(w, b)

    return {
        "down1": down_init(keys[0], 1, 32),
        "down2": down_init(keys[1], 32, 64),
        "down3": down_init(keys[2], 64, 128),
        "up3": up_init(keys[3], 128, 64),
        "up2": up_init(keys[4], 128, 32),
        "up1": up_init(keys[5], 64, 16),
        "fc1": linear_init(keys[6], 16, outdim),
        "fc2": linear_init(keys[7], outdim, outdim),
        "fc3": linear_init(keys[8], outdim, outdim),
    }


if __name__ == "__main__":
    B, L, OUTDIM = 2, 64, 8
    key = jax.random.PRNGKey(0)
    k_params, k_x = jax.random.split(key)
    params = init_params(k_params, OUTDIM)
    x = jax.random.normal(k_x, (B, L), jnp.float32)

    forward = jax.jit(multiscale_specklenet_forward)
    out = jax.block_until_ready(forward(x, params))

    assert out.shape == (B, OUTDIM), out.shape
    assert bool(jnp.all(jnp.isfinite(out)))
    assert bool(jnp.all((out >= 0.0) & (out <= 1.0)))  # sigmoid range
    print("KERNEL_OK")
</pallas_src>

<mosaic_0001>
module attributes {stable_mosaic.version = 11 : i64} {
  func.func @_specklenet_kernel(%arg0: memref<64x2xf32, #tpu.memory_space<vmem>>, %arg1: memref<1x96xbf16, #tpu.memory_space<vmem>>, %arg2: memref<1x32xf32, #tpu.memory_space<vmem>>, %arg3: memref<32x192xbf16, #tpu.memory_space<vmem>>, %arg4: memref<1x64xf32, #tpu.memory_space<vmem>>, %arg5: memref<64x384xbf16, #tpu.memory_space<vmem>>, %arg6: memref<1x128xf32, #tpu.memory_space<vmem>>, %arg7: memref<128x256xbf16, #tpu.memory_space<vmem>>, %arg8: memref<1x64xf32, #tpu.memory_space<vmem>>, %arg9: memref<128x128xbf16, #tpu.memory_space<vmem>>, %arg10: memref<1x32xf32, #tpu.memory_space<vmem>>, %arg11: memref<64x64xbf16, #tpu.memory_space<vmem>>, %arg12: memref<1x16xf32, #tpu.memory_space<vmem>>, %arg13: memref<16x8xbf16, #tpu.memory_space<vmem>>, %arg14: memref<1x8xf32, #tpu.memory_space<vmem>>, %arg15: memref<8x8xbf16, #tpu.memory_space<vmem>>, %arg16: memref<1x8xf32, #tpu.memory_space<vmem>>, %arg17: memref<8x8xbf16, #tpu.memory_space<vmem>>, %arg18: memref<1x8xf32, #tpu.memory_space<vmem>>, %arg19: memref<2x8xf32, #tpu.memory_space<vmem>>) attributes {dimension_semantics = [], scalar_prefetch = 0 : i64, scratch_operands = 0 : i64, tpu.core_type = #tpu.core_type<tc>} {
    %c0 = arith.constant 0 : index
    %c0_0 = arith.constant 0 : index
    %0 = vector.load %arg0[%c0, %c0_0] : memref<64x2xf32, #tpu.memory_space<vmem>>, vector<64x2xf32>
    %c0_1 = arith.constant 0 : index
    %c0_2 = arith.constant 0 : index
    %1 = vector.load %arg1[%c0_1, %c0_2] : memref<1x96xbf16, #tpu.memory_space<vmem>>, vector<1x96xbf16>
    %c0_3 = arith.constant 0 : index
    %c0_4 = arith.constant 0 : index
    %2 = vector.load %arg2[%c0_3, %c0_4] : memref<1x32xf32, #tpu.memory_space<vmem>>, vector<1x32xf32>
    %c0_5 = arith.constant 0 : index
    %c0_6 = arith.constant 0 : index
    %3 = vector.load %arg3[%c0_5, %c0_6] : memref<32x192xbf16, #tpu.memory_space<vmem>>, vector<32x192xbf16>
    %c0_7 = arith.constant 0 : index
    %c0_8 = arith.constant 0 : index
    %4 = vector.load %arg4[%c0_7, %c0_8] : memref<1x64xf32, #tpu.memory_space<vmem>>, vector<1x64xf32>
    %c0_9 = arith.constant 0 : index
    %c0_10 = arith.constant 0 : index
    %5 = vector.load %arg5[%c0_9, %c0_10] : memref<64x384xbf16, #tpu.memory_space<vmem>>, vector<64x384xbf16>
    %c0_11 = arith.constant 0 : index
    %c0_12 = arith.constant 0 : index
    %6 = vector.load %arg6[%c0_11, %c0_12] : memref<1x128xf32, #tpu.memory_space<vmem>>, vector<1x128xf32>
    %c0_13 = arith.constant 0 : index
    %c0_14 = arith.constant 0 : index
    %7 = vector.load %arg7[%c0_13, %c0_14] : memref<128x256xbf16, #tpu.memory_space<vmem>>, vector<128x256xbf16>
    %c0_15 = arith.constant 0 : index
    %c0_16 = arith.constant 0 : index
    %8 = vector.load %arg8[%c0_15, %c0_16] : memref<1x64xf32, #tpu.memory_space<vmem>>, vector<1x64xf32>
    %c0_17 = arith.constant 0 : index
    %c0_18 = arith.constant 0 : index
    %9 = vector.load %arg9[%c0_17, %c0_18] : memref<128x128xbf16, #tpu.memory_space<vmem>>, vector<128x128xbf16>
    %c0_19 = arith.constant 0 : index
    %c0_20 = arith.constant 0 : index
    %10 = vector.load %arg10[%c0_19, %c0_20] : memref<1x32xf32, #tpu.memory_space<vmem>>, vector<1x32xf32>
    %c0_21 = arith.constant 0 : index
    %c0_22 = arith.constant 0 : index
    %11 = vector.load %arg11[%c0_21, %c0_22] : memref<64x64xbf16, #tpu.memory_space<vmem>>, vector<64x64xbf16>
    %c0_23 = arith.constant 0 : index
    %c0_24 = arith.constant 0 : index
    %12 = vector.load %arg12[%c0_23, %c0_24] : memref<1x16xf32, #tpu.memory_space<vmem>>, vector<1x16xf32>
    %c0_25 = arith.constant 0 : index
    %c0_26 = arith.constant 0 : index
    %13 = vector.load %arg13[%c0_25, %c0_26] : memref<16x8xbf16, #tpu.memory_space<vmem>>, vector<16x8xbf16>
    %c0_27 = arith.constant 0 : index
    %c0_28 = arith.constant 0 : index
    %14 = vector.load %arg14[%c0_27, %c0_28] : memref<1x8xf32, #tpu.memory_space<vmem>>, vector<1x8xf32>
    %c0_29 = arith.constant 0 : index
    %c0_30 = arith.constant 0 : index
    %15 = vector.load %arg15[%c0_29, %c0_30] : memref<8x8xbf16, #tpu.memory_space<vmem>>, vector<8x8xbf16>
    %c0_31 = arith.constant 0 : index
    %c0_32 = arith.constant 0 : index
    %16 = vector.load %arg16[%c0_31, %c0_32] : memref<1x8xf32, #tpu.memory_space<vmem>>, vector<1x8xf32>
    %c0_33 = arith.constant 0 : index
    %c0_34 = arith.constant 0 : index
    %17 = vector.load %arg17[%c0_33, %c0_34] : memref<8x8xbf16, #tpu.memory_space<vmem>>, vector<8x8xbf16>
    %c0_35 = arith.constant 0 : index
    %c0_36 = arith.constant 0 : index
    %18 = vector.load %arg18[%c0_35, %c0_36] : memref<1x8xf32, #tpu.memory_space<vmem>>, vector<1x8xf32>
    %19 = vector.extract_strided_slice %0 {offsets = [0, 0], sizes = [64, 1], strides = [1, 1]} : vector<64x2xf32> to vector<64x1xf32>
    %20 = arith.extf %1 : vector<1x96xbf16> to vector<1x96xf32>
    %21 = vector.broadcast %19 : vector<64x1xf32> to vector<64x96xf32>
    %22 = vector.broadcast %20 : vector<1x96xf32> to vector<64x96xf32>
    %23 = arith.mulf %21, %22 : vector<64x96xf32>
    %24 = tpu.iota {dimensions = array<i32: 0>} : vector<32x64xi32>
    %25 = tpu.iota {dimensions = array<i32: 1>} : vector<32x64xi32>
    %c1_i32 = arith.constant 1 : i32
    %26 = vector.broadcast %c1_i32 : i32 to vector<32x64xi32>
    %27 = arith.muli %26, %25 : vector<32x64xi32>
    %c2_i32 = arith.constant 2 : i32
    %28 = vector.broadcast %c2_i32 : i32 to vector<32x64xi32>
    %29 = arith.muli %28, %24 : vector<32x64xi32>
    %c-1_i32 = arith.constant -1 : i32
    %30 = vector.broadcast %c-1_i32 : i32 to vector<32x64xi32>
    %31 = arith.addi %29, %30 : vector<32x64xi32>
    %32 = arith.cmpi eq, %27, %31 : vector<32x64xi32>
    %33 = arith.extui %32 : vector<32x64xi1> to vector<32x64xi32>
    %34 = arith.sitofp %33 : vector<32x64xi32> to vector<32x64xf32>
    %35 = vector.extract_strided_slice %23 {offsets = [0, 0], sizes = [64, 32], strides = [1, 1]} : vector<64x96xf32> to vector<64x32xf32>
    %cst = arith.constant dense<0.000000e+00> : vector<32x32xf32>
    %36 = tpu.matmul %34, %35, %cst {dimension_numbers = #tpu.dot_dimension_numbers<[1], [0], [0], [1], [0, 0, 1, 1], [], []>} : vector<32x64xf32>, vector<64x32xf32>, vector<32x32xf32> -> vector<32x32xf32>
    %37 = tpu.iota {dimensions = array<i32: 0>} : vector<32x64xi32>
    %38 = tpu.iota {dimensions = array<i32: 1>} : vector<32x64xi32>
    %c1_i32_37 = arith.constant 1 : i32
    %39 = vector.broadcast %c1_i32_37 : i32 to vector<32x64xi32>
    %40 = arith.muli %39, %38 : vector<32x64xi32>
    %c2_i32_38 = arith.constant 2 : i32
    %41 = vector.broadcast %c2_i32_38 : i32 to vector<32x64xi32>
    %42 = arith.muli %41, %37 : vector<32x64xi32>
    %c0_i32 = arith.constant 0 : i32
    %43 = vector.broadcast %c0_i32 : i32 to vector<32x64xi32>
    %44 = arith.addi %42, %43 : vector<32x64xi32>
    %45 = arith.cmpi eq, %40, %44 : vector<32x64xi32>
    %46 = arith.extui %45 : vector<32x64xi1> to vector<32x64xi32>
    %47 = arith.sitofp %46 : vector<32x64xi32> to vector<32x64xf32>
    %48 = vector.extract_strided_slice %23 {offsets = [0, 32], sizes = [64, 32], strides = [1, 1]} : vector<64x96xf32> to vector<64x32xf32>
    %cst_39 = arith.constant dense<0.000000e+00> : vector<32x32xf32>
    %49 = tpu.matmul %47, %48, %cst_39 {dimension_numbers = #tpu.dot_dimension_numbers<[1], [0], [0], [1], [0, 0, 1, 1], [], []>} : vector<32x64xf32>, vector<64x32xf32>, vector<32x32xf32> -> vector<32x32xf32>
    %50 = arith.addf %36, %49 : vector<32x32xf32>
    %51 = tpu.iota {dimensions = array<i32: 0>} : vector<32x64xi32>
    %52 = tpu.iota {dimensions = array<i32: 1>} : vector<32x64xi32>
    %c1_i32_40 = arith.constant 1 : i32
    %53 = vector.broadcast %c1_i32_40 : i32 to vector<32x64xi32>
    %54 = arith.muli %53, %52 : vector<32x64xi32>
    %c2_i32_41 = arith.constant 2 : i32
    %55 = vector.broadcast %c2_i32_41 : i32 to vector<32x64xi32>
    %56 = arith.muli %55, %51 : vector<32x64xi32>
    %c1_i32_42 = arith.constant 1 : i32
    %57 = vector.broadcast %c1_i32_42 : i32 to vector<32x64xi32>
    %58 = arith.addi %56, %57 : vector<32x64xi32>
    %59 = arith.cmpi eq, %54, %58 : vector<32x64xi32>
    %60 = arith.extui %59 : vector<32x64xi1> to vector<32x64xi32>
    %61 = arith.sitofp %60 : vector<32x64xi32> to vector<32x64xf32>
    %62 = vector.extract_strided_slice %23 {offsets = [0, 64], sizes = [64, 32], strides = [1, 1]} : vector<64x96xf32> to vector<64x32xf32>
    %cst_43 = arith.constant dense<0.000000e+00> : vector<32x32xf32>
    %63 = tpu.matmul %61, %62, %cst_43 {dimension_numbers = #tpu.dot_dimension_numbers<[1], [0], [0], [1], [0, 0, 1, 1], [], []>} : vector<32x64xf32>, vector<64x32xf32>, vector<32x32xf32> -> vector<32x32xf32>
    %64 = arith.addf %50, %63 : vector<32x32xf32>
    %65 = vector.broadcast %2 : vector<1x32xf32> to vector<32x32xf32>
    %66 = arith.addf %64, %65 : vector<32x32xf32>
    %cst_44 = arith.constant 0.000000e+00 : f32
    %67 = vector.broadcast %cst_44 : f32 to vector<32x32xf32>
    %68 = arith.cmpf oge, %66, %67 : vector<32x32xf32>
    %cst_45 = arith.constant 2.500000e-01 : f32
    %69 = vector.broadcast %cst_45 : f32 to vector<32x32xf32>
    %70 = arith.mulf %69, %66 : vector<32x32xf32>
    %71 = arith.select %68, %66, %70 : vector<32x32xi1>, vector<32x32xf32>
    %72 = arith.truncf %71 : vector<32x32xf32> to vector<32x32xbf16>
    %cst_46 = arith.constant dense<0.000000e+00> : vector<32x192xf32>
    %73 = tpu.matmul %72, %3, %cst_46 {dimension_numbers = #tpu.dot_dimension_numbers<[1], [0], [0], [1], [0, 0, 1, 1], [], []>} : vector<32x32xbf16>, vector<32x192xbf16>, vector<32x192xf32> -> vector<32x192xf32>
    %74 = tpu.iota {dimensions = array<i32: 0>} : vector<16x32xi32>
    %75 = tpu.iota {dimensions = array<i32: 1>} : vector<16x32xi32>
    %c1_i32_47 = arith.constant 1 : i32
    %76 = vector.broadcast %c1_i32_47 : i32 to vector<16x32xi32>
    %77 = arith.muli %76, %75 : vector<16x32xi32>
    %c2_i32_48 = arith.constant 2 : i32
    %78 = vector.broadcast %c2_i32_48 : i32 to vector<16x32xi32>
    %79 = arith.muli %78, %74 : vector<16x32xi32>
    %c-1_i32_49 = arith.constant -1 : i32
    %80 = vector.broadcast %c-1_i32_49 : i32 to vector<16x32xi32>
    %81 = arith.addi %79, %80 : vector<16x32xi32>
    %82 = arith.cmpi eq, %77, %81 : vector<16x32xi32>
    %83 = arith.extui %82 : vector<16x32xi1> to vector<16x32xi32>
    %84 = arith.sitofp %83 : vector<16x32xi32> to vector<16x32xf32>
    %85 = vector.extract_strided_slice %73 {offsets = [0, 0], sizes = [32, 64], strides = [1, 1]} : vector<32x192xf32> to vector<32x64xf32>
    %cst_50 = arith.constant dense<0.000000e+00> : vector<16x64xf32>
    %86 = tpu.matmul %84, %85, %cst_50 {dimension_numbers = #tpu.dot_dimension_numbers<[1], [0], [0], [1], [0, 0, 1, 1], [], []>} : vector<16x32xf32>, vector<32x64xf32>, vector<16x64xf32> -> vector<16x64xf32>
    %87 = tpu.iota {dimensions = array<i32: 0>} : vector<16x32xi32>
    %88 = tpu.iota {dimensions = array<i32: 1>} : vector<16x32xi32>
    %c1_i32_51 = arith.constant 1 : i32
    %89 = vector.broadcast %c1_i32_51 : i32 to vector<16x32xi32>
    %90 = arith.muli %89, %88 : vector<16x32xi32>
    %c2_i32_52 = arith.constant 2 : i32
    %91 = vector.broadcast %c2_i32_52 : i32 to vector<16x32xi32>
    %92 = arith.muli %91, %87 : vector<16x32xi32>
    %c0_i32_53 = arith.constant 0 : i32
    %93 = vector.broadcast %c0_i32_53 : i32 to vector<16x32xi32>
    %94 = arith.addi %92, %93 : vector<16x32xi32>
    %95 = arith.cmpi eq, %90, %94 : vector<16x32xi32>
    %96 = arith.extui %95 : vector<16x32xi1> to vector<16x32xi32>
    %97 = arith.sitofp %96 : vector<16x32xi32> to vector<16x32xf32>
    %98 = vector.extract_strided_slice %73 {offsets = [0, 64], sizes = [32, 64], strides = [1, 1]} : vector<32x192xf32> to vector<32x64xf32>
    %cst_54 = arith.constant dense<0.000000e+00> : vector<16x64xf32>
    %99 = tpu.matmul %97, %98, %cst_54 {dimension_numbers = #tpu.dot_dimension_numbers<[1], [0], [0], [1], [0, 0, 1, 1], [], []>} : vector<16x32xf32>, vector<32x64xf32>, vector<16x64xf32> -> vector<16x64xf32>
    %100 = arith.addf %86, %99 : vector<16x64xf32>
    %101 = tpu.iota {dimensions = array<i32: 0>} : vector<16x32xi32>
    %102 = tpu.iota {dimensions = array<i32: 1>} : vector<16x32xi32>
    %c1_i32_55 = arith.constant 1 : i32
    %103 = vector.broadcast %c1_i32_55 : i32 to vector<16x32xi32>
    %104 = arith.muli %103, %102 : vector<16x32xi32>
    %c2_i32_56 = arith.constant 2 : i32
    %105 = vector.broadcast %c2_i32_56 : i32 to vector<16x32xi32>
    %106 = arith.muli %105, %101 : vector<16x32xi32>
    %c1_i32_57 = arith.constant 1 : i32
    %107 = vector.broadcast %c1_i32_57 : i32 to vector<16x32xi32>
    %108 = arith.addi %106, %107 : vector<16x32xi32>
    %109 = arith.cmpi eq, %104, %108 : vector<16x32xi32>
    %110 = arith.extui %109 : vector<16x32xi1> to vector<16x32xi32>
    %111 = arith.sitofp %110 : vector<16x32xi32> to vector<16x32xf32>
    %112 = vector.extract_strided_slice %73 {offsets = [0, 128], sizes = [32, 64], strides = [1, 1]} : vector<32x192xf32> to vector<32x64xf32>
    %cst_58 = arith.constant dense<0.000000e+00> : vector<16x64xf32>
    %113 = tpu.matmul %111, %112, %cst_58 {dimension_numbers = #tpu.dot_dimension_numbers<[1], [0], [0], [1], [0, 0, 1, 1], [], []>} : vector<16x32xf32>, vector<32x64xf32>, vector<16x64xf32> -> vector<16x64xf32>
    %114 = arith.addf %100, %113 : vector<16x64xf32>
    %115 = vector.broadcast %4 : vector<1x64xf32> to vector<16x64xf32>
    %116 = arith.addf %114, %115 : vector<16x64xf32>
    %cst_59 = arith.constant 0.000000e+00 : f32
    %117 = vector.broadcast %cst_59 : f32 to vector<16x64xf32>
    %118 = arith.cmpf oge, %116, %117 : vector<16x64xf32>
    %cst_60 = arith.constant 2.500000e-01 : f32
    %119 = vector.broadcast %cst_60 : f32 to vector<16x64xf32>
    %120 = arith.mulf %119, %116 : vector<16x64xf32>
    %121 = arith.select %118, %116, %120 : vector<16x64xi1>, vector<16x64xf32>
    %122 = arith.truncf %121 : vector<16x64xf32> to vector<16x64xbf16>
    %cst_61 = arith.constant dense<0.000000e+00> : vector<16x384xf32>
    %123 = tpu.matmul %122, %5, %cst_61 {dimension_numbers = #tpu.dot_dimension_numbers<[1], [0], [0], [1], [0, 0, 1, 1], [], []>} : vector<16x64xbf16>, vector<64x384xbf16>, vector<16x384xf32> -> vector<16x384xf32>
    %124 = tpu.iota {dimensions = array<i32: 0>} : vector<8x16xi32>
    %125 = tpu.iota {dimensions = array<i32: 1>} : vector<8x16xi32>
    %c1_i32_62 = arith.constant 1 : i32
    %126 = vector.broadcast %c1_i32_62 : i32 to vector<8x16xi32>
    %127 = arith.muli %126, %125 : vector<8x16xi32>
    %c2_i32_63 = arith.constant 2 : i32
    %128 = vector.broadcast %c2_i32_63 : i32 to vector<8x16xi32>
    %129 = arith.muli %128, %124 : vector<8x16xi32>
    %c-1_i32_64 = arith.constant -1 : i32
    %130 = vector.broadcast %c-1_i32_64 : i32 to vector<8x16xi32>
    %131 = arith.addi %129, %130 : vector<8x16xi32>
    %132 = arith.cmpi eq, %127, %131 : vector<8x16xi32>
    %133 = arith.extui %132 : vector<8x16xi1> to vector<8x16xi32>
    %134 = arith.sitofp %133 : vector<8x16xi32> to vector<8x16xf32>
    %135 = vector.extract_strided_slice %123 {offsets = [0, 0], sizes = [16, 128], strides = [1, 1]} : vector<16x384xf32> to vector<16x128xf32>
    %cst_65 = arith.constant dense<0.000000e+00> : vector<8x128xf32>
    %136 = tpu.matmul %134, %135, %cst_65 {dimension_numbers = #tpu.dot_dimension_numbers<[1], [0], [0], [1], [0, 0, 1, 1], [], []>} : vector<8x16xf32>, vector<16x128xf32>, vector<8x128xf32> -> vector<8x128xf32>
    %137 = tpu.iota {dimensions = array<i32: 0>} : vector<8x16xi32>
    %138 = tpu.iota {dimensions = array<i32: 1>} : vector<8x16xi32>
    %c1_i32_66 = arith.constant 1 : i32
    %139 = vector.broadcast %c1_i32_66 : i32 to vector<8x16xi32>
    %140 = arith.muli %139, %138 : vector<8x16xi32>
    %c2_i32_67 = arith.constant 2 : i32
    %141 = vector.broadcast %c2_i32_67 : i32 to vector<8x16xi32>
    %142 = arith.muli %141, %137 : vector<8x16xi32>
    %c0_i32_68 = arith.constant 0 : i32
    %143 = vector.broadcast %c0_i32_68 : i32 to vector<8x16xi32>
    %144 = arith.addi %142, %143 : vector<8x16xi32>
    %145 = arith.cmpi eq, %140, %144 : vector<8x16xi32>
    %146 = arith.extui %145 : vector<8x16xi1> to vector<8x16xi32>
    %147 = arith.sitofp %146 : vector<8x16xi32> to vector<8x16xf32>
    %148 = vector.extract_strided_slice %123 {offsets = [0, 128], sizes = [16, 128], strides = [1, 1]} : vector<16x384xf32> to vector<16x128xf32>
    %cst_69 = arith.constant dense<0.000000e+00> : vector<8x128xf32>
    %149 = tpu.matmul %147, %148, %cst_69 {dimension_numbers = #tpu.dot_dimension_numbers<[1], [0], [0], [1], [0, 0, 1, 1], [], []>} : vector<8x16xf32>, vector<16x128xf32>, vector<8x128xf32> -> vector<8x128xf32>
    %150 = arith.addf %136, %149 : vector<8x128xf32>
    %151 = tpu.iota {dimensions = array<i32: 0>} : vector<8x16xi32>
    %152 = tpu.iota {dimensions = array<i32: 1>} : vector<8x16xi32>
    %c1_i32_70 = arith.constant 1 : i32
    %153 = vector.broadcast %c1_i32_70 : i32 to vector<8x16xi32>
    %154 = arith.muli %153, %152 : vector<8x16xi32>
    %c2_i32_71 = arith.constant 2 : i32
    %155 = vector.broadcast %c2_i32_71 : i32 to vector<8x16xi32>
    %156 = arith.muli %155, %151 : vector<8x16xi32>
    %c1_i32_72 = arith.constant 1 : i32
    %157 = vector.broadcast %c1_i32_72 : i32 to vector<8x16xi32>
    %158 = arith.addi %156, %157 : vector<8x16xi32>
    %159 = arith.cmpi eq, %154, %158 : vector<8x16xi32>
    %160 = arith.extui %159 : vector<8x16xi1> to vector<8x16xi32>
    %161 = arith.sitofp %160 : vector<8x16xi32> to vector<8x16xf32>
    %162 = vector.extract_strided_slice %123 {offsets = [0, 256], sizes = [16, 128], strides = [1, 1]} : vector<16x384xf32> to vector<16x128xf32>
    %cst_73 = arith.constant dense<0.000000e+00> : vector<8x128xf32>
    %163 = tpu.matmul %161, %162, %cst_73 {dimension_numbers = #tpu.dot_dimension_numbers<[1], [0], [0], [1], [0, 0, 1, 1], [], []>} : vector<8x16xf32>, vector<16x128xf32>, vector<8x128xf32> -> vector<8x128xf32>
    %164 = arith.addf %150, %163 : vector<8x128xf32>
    %165 = vector.broadcast %6 : vector<1x128xf32> to vector<8x128xf32>
    %166 = arith.addf %164, %165 : vector<8x128xf32>
    %cst_74 = arith.constant 0.000000e+00 : f32
    %167 = vector.broadcast %cst_74 : f32 to vector<8x128xf32>
    %168 = arith.cmpf oge, %166, %167 : vector<8x128xf32>
    %cst_75 = arith.constant 2.500000e-01 : f32
    %169 = vector.broadcast %cst_75 : f32 to vector<8x128xf32>
    %170 = arith.mulf %169, %166 : vector<8x128xf32>
    %171 = arith.select %168, %166, %170 : vector<8x128xi1>, vector<8x128xf32>
    %172 = arith.truncf %171 : vector<8x128xf32> to vector<8x128xbf16>
    %cst_76 = arith.constant dense<0.000000e+00> : vector<8x256xf32>
    %173 = tpu.matmul %172, %7, %cst_76 {dimension_numbers = #tpu.dot_dimension_numbers<[1], [0], [0], [1], [0, 0, 1, 1], [], []>} : vector<8x128xbf16>, vector<128x256xbf16>, vector<8x256xf32> -> vector<8x256xf32>
    %174 = tpu.iota {dimensions = array<i32: 0>} : vector<16x8xi32>
    %175 = tpu.iota {dimensions = array<i32: 1>} : vector<16x8xi32>
    %c2_i32_77 = arith.constant 2 : i32
    %176 = vector.broadcast %c2_i32_77 : i32 to vector<16x8xi32>
    %177 = arith.muli %176, %175 : vector<16x8xi32>
    %c1_i32_78 = arith.constant 1 : i32
    %178 = vector.broadcast %c1_i32_78 : i32 to vector<16x8xi32>
    %179 = arith.muli %178, %174 : vector<16x8xi32>
    %c1_i32_79 = arith.constant 1 : i32
    %180 = vector.broadcast %c1_i32_79 : i32 to vector<16x8xi32>
    %181 = arith.addi %179, %180 : vector<16x8xi32>
    %182 = arith.cmpi eq, %177, %181 : vector<16x8xi32>
    %183 = arith.extui %182 : vector<16x8xi1> to vector<16x8xi32>
    %184 = arith.sitofp %183 : vector<16x8xi32> to vector<16x8xf32>
    %185 = vector.extract_strided_slice %173 {offsets = [0, 0], sizes = [8, 64], strides = [1, 1]} : vector<8x256xf32> to vector<8x64xf32>
    %cst_80 = arith.constant dense<0.000000e+00> : vector<16x64xf32>
    %186 = tpu.matmul %184, %185, %cst_80 {dimension_numbers = #tpu.dot_dimension_numbers<[1], [0], [0], [1], [0, 0, 1, 1], [], []>} : vector<16x8xf32>, vector<8x64xf32>, vector<16x64xf32> -> vector<16x64xf32>
    %187 = tpu.iota {dimensions = array<i32: 0>} : vector<16x8xi32>
    %188 = tpu.iota {dimensions = array<i32: 1>} : vector<16x8xi32>
    %c2_i32_81 = arith.constant 2 : i32
    %189 = vector.broadcast %c2_i32_81 : i32 to vector<16x8xi32>
    %190 = arith.muli %189, %188 : vector<16x8xi32>
    %c1_i32_82 = arith.constant 1 : i32
    %191 = vector.broadcast %c1_i32_82 : i32 to vector<16x8xi32>
    %192 = arith.muli %191, %187 : vector<16x8xi32>
    %c0_i32_83 = arith.constant 0 : i32
    %193 = vector.broadcast %c0_i32_83 : i32 to vector<16x8xi32>
    %194 = arith.addi %192, %193 : vector<16x8xi32>
    %195 = arith.cmpi eq, %190, %194 : vector<16x8xi32>
    %196 = arith.extui %195 : vector<16x8xi1> to vector<16x8xi32>
    %197 = arith.sitofp %196 : vector<16x8xi32> to vector<16x8xf32>
    %198 = vector.extract_strided_slice %173 {offsets = [0, 64], sizes = [8, 64], strides = [1, 1]} : vector<8x256xf32> to vector<8x64xf32>
    %cst_84 = arith.constant dense<0.000000e+00> : vector<16x64xf32>
    %199 = tpu.matmul %197, %198, %cst_84 {dimension_numbers = #tpu.dot_dimension_numbers<[1], [0], [0], [1], [0, 0, 1, 1], [], []>} : vector<16x8xf32>, vector<8x64xf32>, vector<16x64xf32> -> vector<16x64xf32>
    %200 = arith.addf %186, %199 : vector<16x64xf32>
    %201 = tpu.iota {dimensions = array<i32: 0>} : vector<16x8xi32>
    %202 = tpu.iota {dimensions = array<i32: 1>} : vector<16x8xi32>
    %c2_i32_85 = arith.constant 2 : i32
    %203 = vector.broadcast %c2_i32_85 : i32 to vector<16x8xi32>
    %204 = arith.muli %203, %202 : vector<16x8xi32>
    %c1_i32_86 = arith.constant 1 : i32
    %205 = vector.broadcast %c1_i32_86 : i32 to vector<16x8xi32>
    %206 = arith.muli %205, %201 : vector<16x8xi32>
    %c-1_i32_87 = arith.constant -1 : i32
    %207 = vector.broadcast %c-1_i32_87 : i32 to vector<16x8xi32>
    %208 = arith.addi %206, %207 : vector<16x8xi32>
    %209 = arith.cmpi eq, %204, %208 : vector<16x8xi32>
    %210 = arith.extui %209 : vector<16x8xi1> to vector<16x8xi32>
    %211 = arith.sitofp %210 : vector<16x8xi32> to vector<16x8xf32>
    %212 = vector.extract_strided_slice %173 {offsets = [0, 128], sizes = [8, 64], strides = [1, 1]} : vector<8x256xf32> to vector<8x64xf32>
    %cst_88 = arith.constant dense<0.000000e+00> : vector<16x64xf32>
    %213 = tpu.matmul %211, %212, %cst_88 {dimension_numbers = #tpu.dot_dimension_numbers<[1], [0], [0], [1], [0, 0, 1, 1], [], []>} : vector<16x8xf32>, vector<8x64xf32>, vector<16x64xf32> -> vector<16x64xf32>
    %214 = arith.addf %200, %213 : vector<16x64xf32>
    %215 = tpu.iota {dimensions = array<i32: 0>} : vector<16x8xi32>
    %216 = tpu.iota {dimensions = array<i32: 1>} : vector<16x8xi32>
    %c2_i32_89 = arith.constant 2 : i32
    %217 = vector.broadcast %c2_i32_89 : i32 to vector<16x8xi32>
    %218 = arith.muli %217, %216 : vector<16x8xi32>
    %c1_i32_90 = arith.constant 1 : i32
    %219 = vector.broadcast %c1_i32_90 : i32 to vector<16x8xi32>
    %220 = arith.muli %219, %215 : vector<16x8xi32>
    %c-2_i32 = arith.constant -2 : i32
    %221 = vector.broadcast %c-2_i32 : i32 to vector<16x8xi32>
    %222 = arith.addi %220, %221 : vector<16x8xi32>
    %223 = arith.cmpi eq, %218, %222 : vector<16x8xi32>
    %224 = arith.extui %223 : vector<16x8xi1> to vector<16x8xi32>
    %225 = arith.sitofp %224 : vector<16x8xi32> to vector<16x8xf32>
    %226 = vector.extract_strided_slice %173 {offsets = [0, 192], sizes = [8, 64], strides = [1, 1]} : vector<8x256xf32> to vector<8x64xf32>
    %cst_91 = arith.constant dense<0.000000e+00> : vector<16x64xf32>
    %227 = tpu.matmul %225, %226, %cst_91 {dimension_numbers = #tpu.dot_dimension_numbers<[1], [0], [0], [1], [0, 0, 1, 1], [], []>} : vector<16x8xf32>, vector<8x64xf32>, vector<16x64xf32> -> vector<16x64xf32>
    %228 = arith.addf %214, %227 : vector<16x64xf32>
    %229 = vector.broadcast %8 : vector<1x64xf32> to vector<16x64xf32>
    %230 = arith.addf %228, %229 : vector<16x64xf32>
    %cst_92 = arith.constant 0.000000e+00 : f32
    %231 = vector.broadcast %cst_92 : f32 to vector<16x64xf32>
    %232 = arith.cmpf oge, %230, %231 : vector<16x64xf32>
    %cst_93 = arith.constant 2.500000e-01 : f32
    %233 = vector.broadcast %cst_93 : f32 to vector<16x64xf32>
    %234 = arith.mulf %233, %230 : vector<16x64xf32>
    %235 = arith.select %232, %230, %234 : vector<16x64xi1>, vector<16x64xf32>
    %236 = tpu.concatenate %235, %121 in 1 : vector<16x64xf32>, vector<16x64xf32> -> vector<16x128xf32>
    %237 = arith.truncf %236 : vector<16x128xf32> to vector<16x128xbf16>
    %cst_94 = arith.constant dense<0.000000e+00> : vector<16x128xf32>
    %238 = tpu.matmul %237, %9, %cst_94 {dimension_numbers = #tpu.dot_dimension_numbers<[1], [0], [0], [1], [0, 0, 1, 1], [], []>} : vector<16x128xbf16>, vector<128x128xbf16>, vector<16x128xf32> -> vector<16x128xf32>
    %239 = tpu.iota {dimensions = array<i32: 0>} : vector<32x16xi32>
    %240 = tpu.iota {dimensions = array<i32: 1>} : vector<32x16xi32>
    %c2_i32_95 = arith.constant 2 : i32
    %241 = vector.broadcast %c2_i32_95 : i32 to vector<32x16xi32>
    %242 = arith.muli %241, %240 : vector<32x16xi32>
    %c1_i32_96 = arith.constant 1 : i32
    %243 = vector.broadcast %c1_i32_96 : i32 to vector<32x16xi32>
    %244 = arith.muli %243, %239 : vector<32x16xi32>
    %c1_i32_97 = arith.constant 1 : i32
    %245 = vector.broadcast %c1_i32_97 : i32 to vector<32x16xi32>
    %246 = arith.addi %244, %245 : vector<32x16xi32>
    %247 = arith.cmpi eq, %242, %246 : vector<32x16xi32>
    %248 = arith.extui %247 : vector<32x16xi1> to vector<32x16xi32>
    %249 = arith.sitofp %248 : vector<32x16xi32> to vector<32x16xf32>
    %250 = vector.extract_strided_slice %238 {offsets = [0, 0], sizes = [16, 32], strides = [1, 1]} : vector<16x128xf32> to vector<16x32xf32>
    %cst_98 = arith.constant dense<0.000000e+00> : vector<32x32xf32>
    %251 = tpu.matmul %249, %250, %cst_98 {dimension_numbers = #tpu.dot_dimension_numbers<[1], [0], [0], [1], [0, 0, 1, 1], [], []>} : vector<32x16xf32>, vector<16x32xf32>, vector<32x32xf32> -> vector<32x32xf32>
    %252 = tpu.iota {dimensions = array<i32: 0>} : vector<32x16xi32>
    %253 = tpu.iota {dimensions = array<i32: 1>} : vector<32x16xi32>
    %c2_i32_99 = arith.constant 2 : i32
    %254 = vector.broadcast %c2_i32_99 : i32 to vector<32x16xi32>
    %255 = arith.muli %254, %253 : vector<32x16xi32>
    %c1_i32_100 = arith.constant 1 : i32
    %256 = vector.broadcast %c1_i32_100 : i32 to vector<32x16xi32>
    %257 = arith.muli %256, %252 : vector<32x16xi32>
    %c0_i32_101 = arith.constant 0 : i32
    %258 = vector.broadcast %c0_i32_101 : i32 to vector<32x16xi32>
    %259 = arith.addi %257, %258 : vector<32x16xi32>
    %260 = arith.cmpi eq, %255, %259 : vector<32x16xi32>
    %261 = arith.extui %260 : vector<32x16xi1> to vector<32x16xi32>
    %262 = arith.sitofp %261 : vector<32x16xi32> to vector<32x16xf32>
    %263 = vector.extract_strided_slice %238 {offsets = [0, 32], sizes = [16, 32], strides = [1, 1]} : vector<16x128xf32> to vector<16x32xf32>
    %cst_102 = arith.constant dense<0.000000e+00> : vector<32x32xf32>
    %264 = tpu.matmul %262, %263, %cst_102 {dimension_numbers = #tpu.dot_dimension_numbers<[1], [0], [0], [1], [0, 0, 1, 1], [], []>} : vector<32x16xf32>, vector<16x32xf32>, vector<32x32xf32> -> vector<32x32xf32>
    %265 = arith.addf %251, %264 : vector<32x32xf32>
    %266 = tpu.iota {dimensions = array<i32: 0>} : vector<32x16xi32>
    %267 = tpu.iota {dimensions = array<i32: 1>} : vector<32x16xi32>
    %c2_i32_103 = arith.constant 2 : i32
    %268 = vector.broadcast %c2_i32_103 : i32 to vector<32x16xi32>
    %269 = arith.muli %268, %267 : vector<32x16xi32>
    %c1_i32_104 = arith.constant 1 : i32
    %270 = vector.broadcast %c1_i32_104 : i32 to vector<32x16xi32>
    %271 = arith.muli %270, %266 : vector<32x16xi32>
    %c-1_i32_105 = arith.constant -1 : i32
    %272 = vector.broadcast %c-1_i32_105 : i32 to vector<32x16xi32>
    %273 = arith.addi %271, %272 : vector<32x16xi32>
    %274 = arith.cmpi eq, %269, %273 : vector<32x16xi32>
    %275 = arith.extui %274 : vector<32x16xi1> to vector<32x16xi32>
    %276 = arith.sitofp %275 : vector<32x16xi32> to vector<32x16xf32>
    %277 = vector.extract_strided_slice %238 {offsets = [0, 64], sizes = [16, 32], strides = [1, 1]} : vector<16x128xf32> to vector<16x32xf32>
    %cst_106 = arith.constant dense<0.000000e+00> : vector<32x32xf32>
    %278 = tpu.matmul %276, %277, %cst_106 {dimension_numbers = #tpu.dot_dimension_numbers<[1], [0], [0], [1], [0, 0, 1, 1], [], []>} : vector<32x16xf32>, vector<16x32xf32>, vector<32x32xf32> -> vector<32x32xf32>
    %279 = arith.addf %265, %278 : vector<32x32xf32>
    %280 = tpu.iota {dimensions = array<i32: 0>} : vector<32x16xi32>
    %281 = tpu.iota {dimensions = array<i32: 1>} : vector<32x16xi32>
    %c2_i32_107 = arith.constant 2 : i32
    %282 = vector.broadcast %c2_i32_107 : i32 to vector<32x16xi32>
    %283 = arith.muli %282, %281 : vector<32x16xi32>
    %c1_i32_108 = arith.constant 1 : i32
    %284 = vector.broadcast %c1_i32_108 : i32 to vector<32x16xi32>
    %285 = arith.muli %284, %280 : vector<32x16xi32>
    %c-2_i32_109 = arith.constant -2 : i32
    %286 = vector.broadcast %c-2_i32_109 : i32 to vector<32x16xi32>
    %287 = arith.addi %285, %286 : vector<32x16xi32>
    %288 = arith.cmpi eq, %283, %287 : vector<32x16xi32>
    %289 = arith.extui %288 : vector<32x16xi1> to vector<32x16xi32>
    %290 = arith.sitofp %289 : vector<32x16xi32> to vector<32x16xf32>
    %291 = vector.extract_strided_slice %238 {offsets = [0, 96], sizes = [16, 32], strides = [1, 1]} : vector<16x128xf32> to vector<16x32xf32>
    %cst_110 = arith.constant dense<0.000000e+00> : vector<32x32xf32>
    %292 = tpu.matmul %290, %291, %cst_110 {dimension_numbers = #tpu.dot_dimension_numbers<[1], [0], [0], [1], [0, 0, 1, 1], [], []>} : vector<32x16xf32>, vector<16x32xf32>, vector<32x32xf32> -> vector<32x32xf32>
    %293 = arith.addf %279, %292 : vector<32x32xf32>
    %294 = vector.broadcast %10 : vector<1x32xf32> to vector<32x32xf32>
    %295 = arith.addf %293, %294 : vector<32x32xf32>
    %cst_111 = arith.constant 0.000000e+00 : f32
    %296 = vector.broadcast %cst_111 : f32 to vector<32x32xf32>
    %297 = arith.cmpf oge, %295, %296 : vector<32x32xf32>
    %cst_112 = arith.constant 2.500000e-01 : f32
    %298 = vector.broadcast %cst_112 : f32 to vector<32x32xf32>
    %299 = arith.mulf %298, %295 : vector<32x32xf32>
    %300 = arith.select %297, %295, %299 : vector<32x32xi1>, vector<32x32xf32>
    %301 = tpu.concatenate %300, %71 in 1 : vector<32x32xf32>, vector<32x32xf32> -> vector<32x64xf32>
    %302 = arith.truncf %301 : vector<32x64xf32> to vector<32x64xbf16>
    %cst_113 = arith.constant dense<0.000000e+00> : vector<32x64xf32>
    %303 = tpu.matmul %302, %11, %cst_113 {dimension_numbers = #tpu.dot_dimension_numbers<[1], [0], [0], [1], [0, 0, 1, 1], [], []>} : vector<32x64xbf16>, vector<64x64xbf16>, vector<32x64xf32> -> vector<32x64xf32>
    %304 = tpu.iota {dimensions = array<i32: 0>} : vector<64x32xi32>
    %305 = tpu.iota {dimensions = array<i32: 1>} : vector<64x32xi32>
    %c2_i32_114 = arith.constant 2 : i32
    %306 = vector.broadcast %c2_i32_114 : i32 to vector<64x32xi32>
    %307 = arith.muli %306, %305 : vector<64x32xi32>
    %c1_i32_115 = arith.constant 1 : i32
    %308 = vector.broadcast %c1_i32_115 : i32 to vector<64x32xi32>
    %309 = arith.muli %308, %304 : vector<64x32xi32>
    %c1_i32_116 = arith.constant 1 : i32
    %310 = vector.broadcast %c1_i32_116 : i32 to vector<64x32xi32>
    %311 = arith.addi %309, %310 : vector<64x32xi32>
    %312 = arith.cmpi eq, %307, %311 : vector<64x32xi32>
    %313 = arith.extui %312 : vector<64x32xi1> to vector<64x32xi32>
    %314 = arith.sitofp %313 : vector<64x32xi32> to vector<64x32xf32>
    %315 = vector.extract_strided_slice %303 {offsets = [0, 0], sizes = [32, 16], strides = [1, 1]} : vector<32x64xf32> to vector<32x16xf32>
    %cst_117 = arith.constant dense<0.000000e+00> : vector<64x16xf32>
    %316 = tpu.matmul %314, %315, %cst_117 {dimension_numbers = #tpu.dot_dimension_numbers<[1], [0], [0], [1], [0, 0, 1, 1], [], []>} : vector<64x32xf32>, vector<32x16xf32>, vector<64x16xf32> -> vector<64x16xf32>
    %317 = tpu.iota {dimensions = array<i32: 0>} : vector<64x32xi32>
    %318 = tpu.iota {dimensions = array<i32: 1>} : vector<64x32xi32>
    %c2_i32_118 = arith.constant 2 : i32
    %319 = vector.broadcast %c2_i32_118 : i32 to vector<64x32xi32>
    %320 = arith.muli %319, %318 : vector<64x32xi32>
    %c1_i32_119 = arith.constant 1 : i32
    %321 = vector.broadcast %c1_i32_119 : i32 to vector<64x32xi32>
    %322 = arith.muli %321, %317 : vector<64x32xi32>
    %c0_i32_120 = arith.constant 0 : i32
    %323 = vector.broadcast %c0_i32_120 : i32 to vector<64x32xi32>
    %324 = arith.addi %322, %323 : vector<64x32xi32>
    %325 = arith.cmpi eq, %320, %324 : vector<64x32xi32>
    %326 = arith.extui %325 : vector<64x32xi1> to vector<64x32xi32>
    %327 = arith.sitofp %326 : vector<64x32xi32> to vector<64x32xf32>
    %328 = vector.extract_strided_slice %303 {offsets = [0, 16], sizes = [32, 16], strides = [1, 1]} : vector<32x64xf32> to vector<32x16xf32>
    %cst_121 = arith.constant dense<0.000000e+00> : vector<64x16xf32>
    %329 = tpu.matmul %327, %328, %cst_121 {dimension_numbers = #tpu.dot_dimension_numbers<[1], [0], [0], [1], [0, 0, 1, 1], [], []>} : vector<64x32xf32>, vector<32x16xf32>, vector<64x16xf32> -> vector<64x16xf32>
    %330 = arith.addf %316, %329 : vector<64x16xf32>
    %331 = tpu.iota {dimensions = array<i32: 0>} : vector<64x32xi32>
    %332 = tpu.iota {dimensions = array<i32: 1>} : vector<64x32xi32>
    %c2_i32_122 = arith.constant 2 : i32
    %333 = vector.broadcast %c2_i32_122 : i32 to vector<64x32xi32>
    %334 = arith.muli %333, %332 : vector<64x32xi32>
    %c1_i32_123 = arith.constant 1 : i32
    %335 = vector.broadcast %c1_i32_123 : i32 to vector<64x32xi32>
    %336 = arith.muli %335, %331 : vector<64x32xi32>
    %c-1_i32_124 = arith.constant -1 : i32
    %337 = vector.broadcast %c-1_i32_124 : i32 to vector<64x32xi32>
    %338 = arith.addi %336, %337 : vector<64x32xi32>
    %339 = arith.cmpi eq, %334, %338 : vector<64x32xi32>
    %340 = arith.extui %339 : vector<64x32xi1> to vector<64x32xi32>
    %341 = arith.sitofp %340 : vector<64x32xi32> to vector<64x32xf32>
    %342 = vector.extract_strided_slice %303 {offsets = [0, 32], sizes = [32, 16], strides = [1, 1]} : vector<32x64xf32> to vector<32x16xf32>
    %cst_125 = arith.constant dense<0.000000e+00> : vector<64x16xf32>
    %343 = tpu.matmul %341, %342, %cst_125 {dimension_numbers = #tpu.dot_dimension_numbers<[1], [0], [0], [1], [0, 0, 1, 1], [], []>} : vector<64x32xf32>, vector<32x16xf32>, vector<64x16xf32> -> vector<64x16xf32>
    %344 = arith.addf %330, %343 : vector<64x16xf32>
    %345 = tpu.iota {dimensions = array<i32: 0>} : vector<64x32xi32>
    %346 = tpu.iota {dimensions = array<i32: 1>} : vector<64x32xi32>
    %c2_i32_126 = arith.constant 2 : i32
    %347 = vector.broadcast %c2_i32_126 : i32 to vector<64x32xi32>
    %348 = arith.muli %347, %346 : vector<64x32xi32>
    %c1_i32_127 = arith.constant 1 : i32
    %349 = vector.broadcast %c1_i32_127 : i32 to vector<64x32xi32>
    %350 = arith.muli %349, %345 : vector<64x32xi32>
    %c-2_i32_128 = arith.constant -2 : i32
    %351 = vector.broadcast %c-2_i32_128 : i32 to vector<64x32xi32>
    %352 = arith.addi %350, %351 : vector<64x32xi32>
    %353 = arith.cmpi eq, %348, %352 : vector<64x32xi32>
    %354 = arith.extui %353 : vector<64x32xi1> to vector<64x32xi32>
    %355 = arith.sitofp %354 : vector<64x32xi32> to vector<64x32xf32>
    %356 = vector.extract_strided_slice %303 {offsets = [0, 48], sizes = [32, 16], strides = [1, 1]} : vector<32x64xf32> to vector<32x16xf32>
    %cst_129 = arith.constant dense<0.000000e+00> : vector<64x16xf32>
    %357 = tpu.matmul %355, %356, %cst_129 {dimension_numbers = #tpu.dot_dimension_numbers<[1], [0], [0], [1], [0, 0, 1, 1], [], []>} : vector<64x32xf32>, vector<32x16xf32>, vector<64x16xf32> -> vector<64x16xf32>
    %358 = arith.addf %344, %357 : vector<64x16xf32>
    %359 = vector.broadcast %12 : vector<1x16xf32> to vector<64x16xf32>
    %360 = arith.addf %358, %359 : vector<64x16xf32>
    %cst_130 = arith.constant 0.000000e+00 : f32
    %361 = vector.broadcast %cst_130 : f32 to vector<64x16xf32>
    %362 = arith.cmpf oge, %360, %361 : vector<64x16xf32>
    %cst_131 = arith.constant 2.500000e-01 : f32
    %363 = vector.broadcast %cst_131 : f32 to vector<64x16xf32>
    %364 = arith.mulf %363, %360 : vector<64x16xf32>
    %365 = arith.select %362, %360, %364 : vector<64x16xi1>, vector<64x16xf32>
    %cst_132 = arith.constant dense<0.000000e+00> : vector<16xf32>
    %366 = vector.multi_reduction <add>, %365, %cst_132 [0] : vector<64x16xf32> to vector<16xf32>
    %367 = vector.shape_cast %366 : vector<16xf32> to vector<1x16xf32>
    %cst_133 = arith.constant 6.400000e+01 : f32
    %368 = vector.broadcast %cst_133 : f32 to vector<1x16xf32>
    %369 = arith.divf %367, %368 : vector<1x16xf32>
    %370 = arith.truncf %369 : vector<1x16xf32> to vector<1x16xbf16>
    %cst_134 = arith.constant dense<0.000000e+00> : vector<1x8xf32>
    %371 = tpu.matmul %370, %13, %cst_134 {dimension_numbers = #tpu.dot_dimension_numbers<[1], [0], [0], [1], [0, 0, 1, 1], [], []>} : vector<1x16xbf16>, vector<16x8xbf16>, vector<1x8xf32> -> vector<1x8xf32>
    %372 = arith.addf %371, %14 : vector<1x8xf32>
    %cst_135 = arith.constant 0.000000e+00 : f32
    %373 = vector.broadcast %cst_135 : f32 to vector<1x8xf32>
    %374 = arith.cmpf oge, %372, %373 : vector<1x8xf32>
    %cst_136 = arith.constant 2.500000e-01 : f32
    %375 = vector.broadcast %cst_136 : f32 to vector<1x8xf32>
    %376 = arith.mulf %375, %372 : vector<1x8xf32>
    %377 = arith.select %374, %372, %376 : vector<1x8xi1>, vector<1x8xf32>
    %378 = arith.truncf %377 : vector<1x8xf32> to vector<1x8xbf16>
    %cst_137 = arith.constant dense<0.000000e+00> : vector<1x8xf32>
    %379 = tpu.matmul %378, %15, %cst_137 {dimension_numbers = #tpu.dot_dimension_numbers<[1], [0], [0], [1], [0, 0, 1, 1], [], []>} : vector<1x8xbf16>, vector<8x8xbf16>, vector<1x8xf32> -> vector<1x8xf32>
    %380 = arith.addf %379, %16 : vector<1x8xf32>
    %cst_138 = arith.constant 0.000000e+00 : f32
    %381 = vector.broadcast %cst_138 : f32 to vector<1x8xf32>
    %382 = arith.cmpf oge, %380, %381 : vector<1x8xf32>
    %cst_139 = arith.constant 2.500000e-01 : f32
    %383 = vector.broadcast %cst_139 : f32 to vector<1x8xf32>
    %384 = arith.mulf %383, %380 : vector<1x8xf32>
    %385 = arith.select %382, %380, %384 : vector<1x8xi1>, vector<1x8xf32>
    %386 = arith.truncf %385 : vector<1x8xf32> to vector<1x8xbf16>
    %cst_140 = arith.constant dense<0.000000e+00> : vector<1x8xf32>
    %387 = tpu.matmul %386, %17, %cst_140 {dimension_numbers = #tpu.dot_dimension_numbers<[1], [0], [0], [1], [0, 0, 1, 1], [], []>} : vector<1x8xbf16>, vector<8x8xbf16>, vector<1x8xf32> -> vector<1x8xf32>
    %388 = arith.addf %387, %18 : vector<1x8xf32>
    %cst_141 = arith.constant 0.000000e+00 : f32
    %389 = vector.broadcast %cst_141 : f32 to vector<1x8xf32>
    %390 = arith.subf %389, %388 : vector<1x8xf32>
    %391 = math.exp %390 : vector<1x8xf32>
    %cst_142 = arith.constant 1.000000e+00 : f32
    %392 = vector.broadcast %cst_142 : f32 to vector<1x8xf32>
    %393 = arith.addf %392, %391 : vector<1x8xf32>
    %cst_143 = arith.constant 1.000000e+00 : f32
    %394 = vector.broadcast %cst_143 : f32 to vector<1x8xf32>
    %395 = arith.divf %394, %393 : vector<1x8xf32>
    %c0_144 = arith.constant 0 : index
    %c0_145 = arith.constant 0 : index
    %396 = vector.load %arg19[%c0_144, %c0_145] : memref<2x8xf32, #tpu.memory_space<vmem>>, vector<1x8xf32>
    tpu.vector_store %arg19[%c0_144, %c0_145], %395 {strides = array<i32>} : memref<2x8xf32, #tpu.memory_space<vmem>>, vector<1x8xf32>,
    %397 = vector.extract_strided_slice %0 {offsets = [0, 1], sizes = [64, 1], strides = [1, 1]} : vector<64x2xf32> to vector<64x1xf32>
    %398 = arith.extf %1 : vector<1x96xbf16> to vector<1x96xf32>
    %399 = vector.broadcast %397 : vector<64x1xf32> to vector<64x96xf32>
    %400 = vector.broadcast %398 : vector<1x96xf32> to vector<64x96xf32>
    %401 = arith.mulf %399, %400 : vector<64x96xf32>
    %402 = tpu.iota {dimensions = array<i32: 0>} : vector<32x64xi32>
    %403 = tpu.iota {dimensions = array<i32: 1>} : vector<32x64xi32>
    %c1_i32_146 = arith.constant 1 : i32
    %404 = vector.broadcast %c1_i32_146 : i32 to vector<32x64xi32>
    %405 = arith.muli %404, %403 : vector<32x64xi32>
    %c2_i32_147 = arith.constant 2 : i32
    %406 = vector.broadcast %c2_i32_147 : i32 to vector<32x64xi32>
    %407 = arith.muli %406, %402 : vector<32x64xi32>
    %c-1_i32_148 = arith.constant -1 : i32
    %408 = vector.broadcast %c-1_i32_148 : i32 to vector<32x64xi32>
    %409 = arith.addi %407, %408 : vector<32x64xi32>
    %410 = arith.cmpi eq, %405, %409 : vector<32x64xi32>
    %411 = arith.extui %410 : vector<32x64xi1> to vector<32x64xi32>
    %412 = arith.sitofp %411 : vector<32x64xi32> to vector<32x64xf32>
    %413 = vector.extract_strided_slice %401 {offsets = [0, 0], sizes = [64, 32], strides = [1, 1]} : vector<64x96xf32> to vector<64x32xf32>
    %cst_149 = arith.constant dense<0.000000e+00> : vector<32x32xf32>
    %414 = tpu.matmul %412, %413, %cst_149 {dimension_numbers = #tpu.dot_dimension_numbers<[1], [0], [0], [1], [0, 0, 1, 1], [], []>} : vector<32x64xf32>, vector<64x32xf32>, vector<32x32xf32> -> vector<32x32xf32>
    %415 = tpu.iota {dimensions = array<i32: 0>} : vector<32x64xi32>
    %416 = tpu.iota {dimensions = array<i32: 1>} : vector<32x64xi32>
    %c1_i32_150 = arith.constant 1 : i32
    %417 = vector.broadcast %c1_i32_150 : i32 to vector<32x64xi32>
    %418 = arith.muli %417, %416 : vector<32x64xi32>
    %c2_i32_151 = arith.constant 2 : i32
    %419 = vector.broadcast %c2_i32_151 : i32 to vector<32x64xi32>
    %420 = arith.muli %419, %415 : vector<32x64xi32>
    %c0_i32_152 = arith.constant 0 : i32
    %421 = vector.broadcast %c0_i32_152 : i32 to vector<32x64xi32>
    %422 = arith.addi %420, %421 : vector<32x64xi32>
    %423 = arith.cmpi eq, %418, %422 : vector<32x64xi32>
    %424 = arith.extui %423 : vector<32x64xi1> to vector<32x64xi32>
    %425 = arith.sitofp %424 : vector<32x64xi32> to vector<32x64xf32>
    %426 = vector.extract_strided_slice %401 {offsets = [0, 32], sizes = [64, 32], strides = [1, 1]} : vector<64x96xf32> to vector<64x32xf32>
    %cst_153 = arith.constant dense<0.000000e+00> : vector<32x32xf32>
    %427 = tpu.matmul %425, %426, %cst_153 {dimension_numbers = #tpu.dot_dimension_numbers<[1], [0], [0], [1], [0, 0, 1, 1], [], []>} : vector<32x64xf32>, vector<64x32xf32>, vector<32x32xf32> -> vector<32x32xf32>
    %428 = arith.addf %414, %427 : vector<32x32xf32>
    %429 = tpu.iota {dimensions = array<i32: 0>} : vector<32x64xi32>
    %430 = tpu.iota {dimensions = array<i32: 1>} : vector<32x64xi32>
    %c1_i32_154 = arith.constant 1 : i32
    %431 = vector.broadcast %c1_i32_154 : i32 to vector<32x64xi32>
    %432 = arith.muli %431, %430 : vector<32x64xi32>
    %c2_i32_155 = arith.constant 2 : i32
    %433 = vector.broadcast %c2_i32_155 : i32 to vector<32x64xi32>
    %434 = arith.muli %433, %429 : vector<32x64xi32>
    %c1_i32_156 = arith.constant 1 : i32
    %435 = vector.broadcast %c1_i32_156 : i32 to vector<32x64xi32>
    %436 = arith.addi %434, %435 : vector<32x64xi32>
    %437 = arith.cmpi eq, %432, %436 : vector<32x64xi32>
    %438 = arith.extui %437 : vector<32x64xi1> to vector<32x64xi32>
    %439 = arith.sitofp %438 : vector<32x64xi32> to vector<32x64xf32>
    %440 = vector.extract_strided_slice %401 {offsets = [0, 64], sizes = [64, 32], strides = [1, 1]} : vector<64x96xf32> to vector<64x32xf32>
    %cst_157 = arith.constant dense<0.000000e+00> : vector<32x32xf32>
    %441 = tpu.matmul %439, %440, %cst_157 {dimension_numbers = #tpu.dot_dimension_numbers<[1], [0], [0], [1], [0, 0, 1, 1], [], []>} : vector<32x64xf32>, vector<64x32xf32>, vector<32x32xf32> -> vector<32x32xf32>
    %442 = arith.addf %428, %441 : vector<32x32xf32>
    %443 = vector.broadcast %2 : vector<1x32xf32> to vector<32x32xf32>
    %444 = arith.addf %442, %443 : vector<32x32xf32>
    %cst_158 = arith.constant 0.000000e+00 : f32
    %445 = vector.broadcast %cst_158 : f32 to vector<32x32xf32>
    %446 = arith.cmpf oge, %444, %445 : vector<32x32xf32>
    %cst_159 = arith.constant 2.500000e-01 : f32
    %447 = vector.broadcast %cst_159 : f32 to vector<32x32xf32>
    %448 = arith.mulf %447, %444 : vector<32x32xf32>
    %449 = arith.select %446, %444, %448 : vector<32x32xi1>, vector<32x32xf32>
    %450 = arith.truncf %449 : vector<32x32xf32> to vector<32x32xbf16>
    %cst_160 = arith.constant dense<0.000000e+00> : vector<32x192xf32>
    %451 = tpu.matmul %450, %3, %cst_160 {dimension_numbers = #tpu.dot_dimension_numbers<[1], [0], [0], [1], [0, 0, 1, 1], [], []>} : vector<32x32xbf16>, vector<32x192xbf16>, vector<32x192xf32> -> vector<32x192xf32>
    %452 = tpu.iota {dimensions = array<i32: 0>} : vector<16x32xi32>
    %453 = tpu.iota {dimensions = array<i32: 1>} : vector<16x32xi32>
    %c1_i32_161 = arith.constant 1 : i32
    %454 = vector.broadcast %c1_i32_161 : i32 to vector<16x32xi32>
    %455 = arith.muli %454, %453 : vector<16x32xi32>
    %c2_i32_162 = arith.constant 2 : i32
    %456 = vector.broadcast %c2_i32_162 : i32 to vector<16x32xi32>
    %457 = arith.muli %456, %452 : vector<16x32xi32>
    %c-1_i32_163 = arith.constant -1 : i32
    %458 = vector.broadcast %c-1_i32_163 : i32 to vector<16x32xi32>
    %459 = arith.addi %457, %458 : vector<16x32xi32>
    %460 = arith.cmpi eq, %455, %459 : vector<16x32xi32>
    %461 = arith.extui %460 : vector<16x32xi1> to vector<16x32xi32>
    %462 = arith.sitofp %461 : vector<16x32xi32> to vector<16x32xf32>
    %463 = vector.extract_strided_slice %451 {offsets = [0, 0], sizes = [32, 64], strides = [1, 1]} : vector<32x192xf32> to vector<32x64xf32>
    %cst_164 = arith.constant dense<0.000000e+00> : vector<16x64xf32>
    %464 = tpu.matmul %462, %463, %cst_164 {dimension_numbers = #tpu.dot_dimension_numbers<[1], [0], [0], [1], [0, 0, 1, 1], [], []>} : vector<16x32xf32>, vector<32x64xf32>, vector<16x64xf32> -> vector<16x64xf32>
    %465 = tpu.iota {dimensions = array<i32: 0>} : vector<16x32xi32>
    %466 = tpu.iota {dimensions = array<i32: 1>} : vector<16x32xi32>
    %c1_i32_165 = arith.constant 1 : i32
    %467 = vector.broadcast %c1_i32_165 : i32 to vector<16x32xi32>
    %468 = arith.muli %467, %466 : vector<16x32xi32>
    %c2_i32_166 = arith.constant 2 : i32
    %469 = vector.broadcast %c2_i32_166 : i32 to vector<16x32xi32>
    %470 = arith.muli %469, %465 : vector<16x32xi32>
    %c0_i32_167 = arith.constant 0 : i32
    %471 = vector.broadcast %c0_i32_167 : i32 to vector<16x32xi32>
    %472 = arith.addi %470, %471 : vector<16x32xi32>
    %473 = arith.cmpi eq, %468, %472 : vector<16x32xi32>
    %474 = arith.extui %473 : vector<16x32xi1> to vector<16x32xi32>
    %475 = arith.sitofp %474 : vector<16x32xi32> to vector<16x32xf32>
    %476 = vector.extract_strided_slice %451 {offsets = [0, 64], sizes = [32, 64], strides = [1, 1]} : vector<32x192xf32> to vector<32x64xf32>
    %cst_168 = arith.constant dense<0.000000e+00> : vector<16x64xf32>
    %477 = tpu.matmul %475, %476, %cst_168 {dimension_numbers = #tpu.dot_dimension_numbers<[1], [0], [0], [1], [0, 0, 1, 1], [], []>} : vector<16x32xf32>, vector<32x64xf32>, vector<16x64xf32> -> vector<16x64xf32>
    %478 = arith.addf %464, %477 : vector<16x64xf32>
    %479 = tpu.iota {dimensions = array<i32: 0>} : vector<16x32xi32>
    %480 = tpu.iota {dimensions = array<i32: 1>} : vector<16x32xi32>
    %c1_i32_169 = arith.constant 1 : i32
    %481 = vector.broadcast %c1_i32_169 : i32 to vector<16x32xi32>
    %482 = arith.muli %481, %480 : vector<16x32xi32>
    %c2_i32_170 = arith.constant 2 : i32
    %483 = vector.broadcast %c2_i32_170 : i32 to vector<16x32xi32>
    %484 = arith.muli %483, %479 : vector<16x32xi32>
    %c1_i32_171 = arith.constant 1 : i32
    %485 = vector.broadcast %c1_i32_171 : i32 to vector<16x32xi32>
    %486 = arith.addi %484, %485 : vector<16x32xi32>
    %487 = arith.cmpi eq, %482, %486 : vector<16x32xi32>
    %488 = arith.extui %487 : vector<16x32xi1> to vector<16x32xi32>
    %489 = arith.sitofp %488 : vector<16x32xi32> to vector<16x32xf32>
    %490 = vector.extract_strided_slice %451 {offsets = [0, 128], sizes = [32, 64], strides = [1, 1]} : vector<32x192xf32> to vector<32x64xf32>
    %cst_172 = arith.constant dense<0.000000e+00> : vector<16x64xf32>
    %491 = tpu.matmul %489, %490, %cst_172 {dimension_numbers = #tpu.dot_dimension_numbers<[1], [0], [0], [1], [0, 0, 1, 1], [], []>} : vector<16x32xf32>, vector<32x64xf32>, vector<16x64xf32> -> vector<16x64xf32>
    %492 = arith.addf %478, %491 : vector<16x64xf32>
    %493 = vector.broadcast %4 : vector<1x64xf32> to vector<16x64xf32>
    %494 = arith.addf %492, %493 : vector<16x64xf32>
    %cst_173 = arith.constant 0.000000e+00 : f32
    %495 = vector.broadcast %cst_173 : f32 to vector<16x64xf32>
    %496 = arith.cmpf oge, %494, %495 : vector<16x64xf32>
    %cst_174 = arith.constant 2.500000e-01 : f32
    %497 = vector.broadcast %cst_174 : f32 to vector<16x64xf32>
    %498 = arith.mulf %497, %494 : vector<16x64xf32>
    %499 = arith.select %496, %494, %498 : vector<16x64xi1>, vector<16x64xf32>
    %500 = arith.truncf %499 : vector<16x64xf32> to vector<16x64xbf16>
    %cst_175 = arith.constant dense<0.000000e+00> : vector<16x384xf32>
    %501 = tpu.matmul %500, %5, %cst_175 {dimension_numbers = #tpu.dot_dimension_numbers<[1], [0], [0], [1], [0, 0, 1, 1], [], []>} : vector<16x64xbf16>, vector<64x384xbf16>, vector<16x384xf32> -> vector<16x384xf32>
    %502 = tpu.iota {dimensions = array<i32: 0>} : vector<8x16xi32>
    %503 = tpu.iota {dimensions = array<i32: 1>} : vector<8x16xi32>
    %c1_i32_176 = arith.constant 1 : i32
    %504 = vector.broadcast %c1_i32_176 : i32 to vector<8x16xi32>
    %505 = arith.muli %504, %503 : vector<8x16xi32>
    %c2_i32_177 = arith.constant 2 : i32
    %506 = vector.broadcast %c2_i32_177 : i32 to vector<8x16xi32>
    %507 = arith.muli %506, %502 : vector<8x16xi32>
    %c-1_i32_178 = arith.constant -1 : i32
    %508 = vector.broadcast %c-1_i32_178 : i32 to vector<8x16xi32>
    %509 = arith.addi %507, %508 : vector<8x16xi32>
    %510 = arith.cmpi eq, %505, %509 : vector<8x16xi32>
    %511 = arith.extui %510 : vector<8x16xi1> to vector<8x16xi32>
    %512 = arith.sitofp %511 : vector<8x16xi32> to vector<8x16xf32>
    %513 = vector.extract_strided_slice %501 {offsets = [0, 0], sizes = [16, 128], strides = [1, 1]} : vector<16x384xf32> to vector<16x128xf32>
    %cst_179 = arith.constant dense<0.000000e+00> : vector<8x128xf32>
    %514 = tpu.matmul %512, %513, %cst_179 {dimension_numbers = #tpu.dot_dimension_numbers<[1], [0], [0], [1], [0, 0, 1, 1], [], []>} : vector<8x16xf32>, vector<16x128xf32>, vector<8x128xf32> -> vector<8x128xf32>
    %515 = tpu.iota {dimensions = array<i32: 0>} : vector<8x16xi32>
    %516 = tpu.iota {dimensions = array<i32: 1>} : vector<8x16xi32>
    %c1_i32_180 = arith.constant 1 : i32
    %517 = vector.broadcast %c1_i32_180 : i32 to vector<8x16xi32>
    %518 = arith.muli %517, %516 : vector<8x16xi32>
    %c2_i32_181 = arith.constant 2 : i32
    %519 = vector.broadcast %c2_i32_181 : i32 to vector<8x16xi32>
    %520 = arith.muli %519, %515 : vector<8x16xi32>
    %c0_i32_182 = arith.constant 0 : i32
    %521 = vector.broadcast %c0_i32_182 : i32 to vector<8x16xi32>
    %522 = arith.addi %520, %521 : vector<8x16xi32>
    %523 = arith.cmpi eq, %518, %522 : vector<8x16xi32>
    %524 = arith.extui %523 : vector<8x16xi1> to vector<8x16xi32>
    %525 = arith.sitofp %524 : vector<8x16xi32> to vector<8x16xf32>
    %526 = vector.extract_strided_slice %501 {offsets = [0, 128], sizes = [16, 128], strides = [1, 1]} : vector<16x384xf32> to vector<16x128xf32>
    %cst_183 = arith.constant dense<0.000000e+00> : vector<8x128xf32>
    %527 = tpu.matmul %525, %526, %cst_183 {dimension_numbers = #tpu.dot_dimension_numbers<[1], [0], [0], [1], [0, 0, 1, 1], [], []>} : vector<8x16xf32>, vector<16x128xf32>, vector<8x128xf32> -> vector<8x128xf32>
    %528 = arith.addf %514, %527 : vector<8x128xf32>
    %529 = tpu.iota {dimensions = array<i32: 0>} : vector<8x16xi32>
    %530 = tpu.iota {dimensions = array<i32: 1>} : vector<8x16xi32>
    %c1_i32_184 = arith.constant 1 : i32
    %531 = vector.broadcast %c1_i32_184 : i32 to vector<8x16xi32>
    %532 = arith.muli %531, %530 : vector<8x16xi32>
    %c2_i32_185 = arith.constant 2 : i32
    %533 = vector.broadcast %c2_i32_185 : i32 to vector<8x16xi32>
    %534 = arith.muli %533, %529 : vector<8x16xi32>
    %c1_i32_186 = arith.constant 1 : i32
    %535 = vector.broadcast %c1_i32_186 : i32 to vector<8x16xi32>
    %536 = arith.addi %534, %535 : vector<8x16xi32>
    %537 = arith.cmpi eq, %532, %536 : vector<8x16xi32>
    %538 = arith.extui %537 : vector<8x16xi1> to vector<8x16xi32>
    %539 = arith.sitofp %538 : vector<8x16xi32> to vector<8x16xf32>
    %540 = vector.extract_strided_slice %501 {offsets = [0, 256], sizes = [16, 128], strides = [1, 1]} : vector<16x384xf32> to vector<16x128xf32>
    %cst_187 = arith.constant dense<0.000000e+00> : vector<8x128xf32>
    %541 = tpu.matmul %539, %540, %cst_187 {dimension_numbers = #tpu.dot_dimension_numbers<[1], [0], [0], [1], [0, 0, 1, 1], [], []>} : vector<8x16xf32>, vector<16x128xf32>, vector<8x128xf32> -> vector<8x128xf32>
    %542 = arith.addf %528, %541 : vector<8x128xf32>
    %543 = vector.broadcast %6 : vector<1x128xf32> to vector<8x128xf32>
    %544 = arith.addf %542, %543 : vector<8x128xf32>
    %cst_188 = arith.constant 0.000000e+00 : f32
    %545 = vector.broadcast %cst_188 : f32 to vector<8x128xf32>
    %546 = arith.cmpf oge, %544, %545 : vector<8x128xf32>
    %cst_189 = arith.constant 2.500000e-01 : f32
    %547 = vector.broadcast %cst_189 : f32 to vector<8x128xf32>
    %548 = arith.mulf %547, %544 : vector<8x128xf32>
    %549 = arith.select %546, %544, %548 : vector<8x128xi1>, vector<8x128xf32>
    %550 = arith.truncf %549 : vector<8x128xf32> to vector<8x128xbf16>
    %cst_190 = arith.constant dense<0.000000e+00> : vector<8x256xf32>
    %551 = tpu.matmul %550, %7, %cst_190 {dimension_numbers = #tpu.dot_dimension_numbers<[1], [0], [0], [1], [0, 0, 1, 1], [], []>} : vector<8x128xbf16>, vector<128x256xbf16>, vector<8x256xf32> -> vector<8x256xf32>
    %552 = tpu.iota {dimensions = array<i32: 0>} : vector<16x8xi32>
    %553 = tpu.iota {dimensions = array<i32: 1>} : vector<16x8xi32>
    %c2_i32_191 = arith.constant 2 : i32
    %554 = vector.broadcast %c2_i32_191 : i32 to vector<16x8xi32>
    %555 = arith.muli %554, %553 : vector<16x8xi32>
    %c1_i32_192 = arith.constant 1 : i32
    %556 = vector.broadcast %c1_i32_192 : i32 to vector<16x8xi32>
    %557 = arith.muli %556, %552 : vector<16x8xi32>
    %c1_i32_193 = arith.constant 1 : i32
    %558 = vector.broadcast %c1_i32_193 : i32 to vector<16x8xi32>
    %559 = arith.addi %557, %558 : vector<16x8xi32>
    %560 = arith.cmpi eq, %555, %559 : vector<16x8xi32>
    %561 = arith.extui %560 : vector<16x8xi1> to vector<16x8xi32>
    %562 = arith.sitofp %561 : vector<16x8xi32> to vector<16x8xf32>
    %563 = vector.extract_strided_slice %551 {offsets = [0, 0], sizes = [8, 64], strides = [1, 1]} : vector<8x256xf32> to vector<8x64xf32>
    %cst_194 = arith.constant dense<0.000000e+00> : vector<16x64xf32>
    %564 = tpu.matmul %562, %563, %cst_194 {dimension_numbers = #tpu.dot_dimension_numbers<[1], [0], [0], [1], [0, 0, 1, 1], [], []>} : vector<16x8xf32>, vector<8x64xf32>, vector<16x64xf32> -> vector<16x64xf32>
    %565 = tpu.iota {dimensions = array<i32: 0>} : vector<16x8xi32>
    %566 = tpu.iota {dimensions = array<i32: 1>} : vector<16x8xi32>
    %c2_i32_195 = arith.constant 2 : i32
    %567 = vector.broadcast %c2_i32_195 : i32 to vector<16x8xi32>
    %568 = arith.muli %567, %566 : vector<16x8xi32>
    %c1_i32_196 = arith.constant 1 : i32
    %569 = vector.broadcast %c1_i32_196 : i32 to vector<16x8xi32>
    %570 = arith.muli %569, %565 : vector<16x8xi32>
    %c0_i32_197 = arith.constant 0 : i32
    %571 = vector.broadcast %c0_i32_197 : i32 to vector<16x8xi32>
    %572 = arith.addi %570, %571 : vector<16x8xi32>
    %573 = arith.cmpi eq, %568, %572 : vector<16x8xi32>
    %574 = arith.extui %573 : vector<16x8xi1> to vector<16x8xi32>
    %575 = arith.sitofp %574 : vector<16x8xi32> to vector<16x8xf32>
    %576 = vector.extract_strided_slice %551 {offsets = [0, 64], sizes = [8, 64], strides = [1, 1]} : vector<8x256xf32> to vector<8x64xf32>
    %cst_198 = arith.constant dense<0.000000e+00> : vector<16x64xf32>
    %577 = tpu.matmul %575, %576, %cst_198 {dimension_numbers = #tpu.dot_dimension_numbers<[1], [0], [0], [1], [0, 0, 1, 1], [], []>} : vector<16x8xf32>, vector<8x64xf32>, vector<16x64xf32> -> vector<16x64xf32>
    %578 = arith.addf %564, %577 : vector<16x64xf32>
    %579 = tpu.iota {dimensions = array<i32: 0>} : vector<16x8xi32>
    %580 = tpu.iota {dimensions = array<i32: 1>} : vector<16x8xi32>
    %c2_i32_199 = arith.constant 2 : i32
    %581 = vector.broadcast %c2_i32_199 : i32 to vector<16x8xi32>
    %582 = arith.muli %581, %580 : vector<16x8xi32>
    %c1_i32_200 = arith.constant 1 : i32
    %583 = vector.broadcast %c1_i32_200 : i32 to vector<16x8xi32>
    %584 = arith.muli %583, %579 : vector<16x8xi32>
    %c-1_i32_201 = arith.constant -1 : i32
    %585 = vector.broadcast %c-1_i32_201 : i32 to vector<16x8xi32>
    %586 = arith.addi %584, %585 : vector<16x8xi32>
    %587 = arith.cmpi eq, %582, %586 : vector<16x8xi32>
    %588 = arith.extui %587 : vector<16x8xi1> to vector<16x8xi32>
    %589 = arith.sitofp %588 : vector<16x8xi32> to vector<16x8xf32>
    %590 = vector.extract_strided_slice %551 {offsets = [0, 128], sizes = [8, 64], strides = [1, 1]} : vector<8x256xf32> to vector<8x64xf32>
    %cst_202 = arith.constant dense<0.000000e+00> : vector<16x64xf32>
    %591 = tpu.matmul %589, %590, %cst_202 {dimension_numbers = #tpu.dot_dimension_numbers<[1], [0], [0], [1], [0, 0, 1, 1], [], []>} : vector<16x8xf32>, vector<8x64xf32>, vector<16x64xf32> -> vector<16x64xf32>
    %592 = arith.addf %578, %591 : vector<16x64xf32>
    %593 = tpu.iota {dimensions = array<i32: 0>} : vector<16x8xi32>
    %594 = tpu.iota {dimensions = array<i32: 1>} : vector<16x8xi32>
    %c2_i32_203 = arith.constant 2 : i32
    %595 = vector.broadcast %c2_i32_203 : i32 to vector<16x8xi32>
    %596 = arith.muli %595, %594 : vector<16x8xi32>
    %c1_i32_204 = arith.constant 1 : i32
    %597 = vector.broadcast %c1_i32_204 : i32 to vector<16x8xi32>
    %598 = arith.muli %597, %593 : vector<16x8xi32>
    %c-2_i32_205 = arith.constant -2 : i32
    %599 = vector.broadcast %c-2_i32_205 : i32 to vector<16x8xi32>
    %600 = arith.addi %598, %599 : vector<16x8xi32>
    %601 = arith.cmpi eq, %596, %600 : vector<16x8xi32>
    %602 = arith.extui %601 : vector<16x8xi1> to vector<16x8xi32>
    %603 = arith.sitofp %602 : vector<16x8xi32> to vector<16x8xf32>
    %604 = vector.extract_strided_slice %551 {offsets = [0, 192], sizes = [8, 64], strides = [1, 1]} : vector<8x256xf32> to vector<8x64xf32>
    %cst_206 = arith.constant dense<0.000000e+00> : vector<16x64xf32>
    %605 = tpu.matmul %603, %604, %cst_206 {dimension_numbers = #tpu.dot_dimension_numbers<[1], [0], [0], [1], [0, 0, 1, 1], [], []>} : vector<16x8xf32>, vector<8x64xf32>, vector<16x64xf32> -> vector<16x64xf32>
    %606 = arith.addf %592, %605 : vector<16x64xf32>
    %607 = vector.broadcast %8 : vector<1x64xf32> to vector<16x64xf32>
    %608 = arith.addf %606, %607 : vector<16x64xf32>
    %cst_207 = arith.constant 0.000000e+00 : f32
    %609 = vector.broadcast %cst_207 : f32 to vector<16x64xf32>
    %610 = arith.cmpf oge, %608, %609 : vector<16x64xf32>
    %cst_208 = arith.constant 2.500000e-01 : f32
    %611 = vector.broadcast %cst_208 : f32 to vector<16x64xf32>
    %612 = arith.mulf %611, %608 : vector<16x64xf32>
    %613 = arith.select %610, %608, %612 : vector<16x64xi1>, vector<16x64xf32>
    %614 = tpu.concatenate %613, %499 in 1 : vector<16x64xf32>, vector<16x64xf32> -> vector<16x128xf32>
    %615 = arith.truncf %614 : vector<16x128xf32> to vector<16x128xbf16>
    %cst_209 = arith.constant dense<0.000000e+00> : vector<16x128xf32>
    %616 = tpu.matmul %615, %9, %cst_209 {dimension_numbers = #tpu.dot_dimension_numbers<[1], [0], [0], [1], [0, 0, 1, 1], [], []>} : vector<16x128xbf16>, vector<128x128xbf16>, vector<16x128xf32> -> vector<16x128xf32>
    %617 = tpu.iota {dimensions = array<i32: 0>} : vector<32x16xi32>
    %618 = tpu.iota {dimensions = array<i32: 1>} : vector<32x16xi32>
    %c2_i32_210 = arith.constant 2 : i32
    %619 = vector.broadcast %c2_i32_210 : i32 to vector<32x16xi32>
    %620 = arith.muli %619, %618 : vector<32x16xi32>
    %c1_i32_211 = arith.constant 1 : i32
    %621 = vector.broadcast %c1_i32_211 : i32 to vector<32x16xi32>
    %622 = arith.muli %621, %617 : vector<32x16xi32>
    %c1_i32_212 = arith.constant 1 : i32
    %623 = vector.broadcast %c1_i32_212 : i32 to vector<32x16xi32>
    %624 = arith.addi %622, %623 : vector<32x16xi32>
    %625 = arith.cmpi eq, %620, %624 : vector<32x16xi32>
    %626 = arith.extui %625 : vector<32x16xi1> to vector<32x16xi32>
    %627 = arith.sitofp %626 : vector<32x16xi32> to vector<32x16xf32>
    %628 = vector.extract_strided_slice %616 {offsets = [0, 0], sizes = [16, 32], strides = [1, 1]} : vector<16x128xf32> to vector<16x32xf32>
    %cst_213 = arith.constant dense<0.000000e+00> : vector<32x32xf32>
    %629 = tpu.matmul %627, %628, %cst_213 {dimension_numbers = #tpu.dot_dimension_numbers<[1], [0], [0], [1], [0, 0, 1, 1], [], []>} : vector<32x16xf32>, vector<16x32xf32>, vector<32x32xf32> -> vector<32x32xf32>
    %630 = tpu.iota {dimensions = array<i32: 0>} : vector<32x16xi32>
    %631 = tpu.iota {dimensions = array<i32: 1>} : vector<32x16xi32>
    %c2_i32_214 = arith.constant 2 : i32
    %632 = vector.broadcast %c2_i32_214 : i32 to vector<32x16xi32>
    %633 = arith.muli %632, %631 : vector<32x16xi32>
    %c1_i32_215 = arith.constant 1 : i32
    %634 = vector.broadcast %c1_i32_215 : i32 to vector<32x16xi32>
    %635 = arith.muli %634, %630 : vector<32x16xi32>
    %c0_i32_216 = arith.constant 0 : i32
    %636 = vector.broadcast %c0_i32_216 : i32 to vector<32x16xi32>
    %637 = arith.addi %635, %636 : vector<32x16xi32>
    %638 = arith.cmpi eq, %633, %637 : vector<32x16xi32>
    %639 = arith.extui %638 : vector<32x16xi1> to vector<32x16xi32>
    %640 = arith.sitofp %639 : vector<32x16xi32> to vector<32x16xf32>
    %641 = vector.extract_strided_slice %616 {offsets = [0, 32], sizes = [16, 32], strides = [1, 1]} : vector<16x128xf32> to vector<16x32xf32>
    %cst_217 = arith.constant dense<0.000000e+00> : vector<32x32xf32>
    %642 = tpu.matmul %640, %641, %cst_217 {dimension_numbers = #tpu.dot_dimension_numbers<[1], [0], [0], [1], [0, 0, 1, 1], [], []>} : vector<32x16xf32>, vector<16x32xf32>, vector<32x32xf32> -> vector<32x32xf32>
    %643 = arith.addf %629, %642 : vector<32x32xf32>
    %644 = tpu.iota {dimensions = array<i32: 0>} : vector<32x16xi32>
    %645 = tpu.iota {dimensions = array<i32: 1>} : vector<32x16xi32>
    %c2_i32_218 = arith.constant 2 : i32
    %646 = vector.broadcast %c2_i32_218 : i32 to vector<32x16xi32>
    %647 = arith.muli %646, %645 : vector<32x16xi32>
    %c1_i32_219 = arith.constant 1 : i32
    %648 = vector.broadcast %c1_i32_219 : i32 to vector<32x16xi32>
    %649 = arith.muli %648, %644 : vector<32x16xi32>
    %c-1_i32_220 = arith.constant -1 : i32
    %650 = vector.broadcast %c-1_i32_220 : i32 to vector<32x16xi32>
    %651 = arith.addi %649, %650 : vector<32x16xi32>
    %652 = arith.cmpi eq, %647, %651 : vector<32x16xi32>
    %653 = arith.extui %652 : vector<32x16xi1> to vector<32x16xi32>
    %654 = arith.sitofp %653 : vector<32x16xi32> to vector<32x16xf32>
    %655 = vector.extract_strided_slice %616 {offsets = [0, 64], sizes = [16, 32], strides = [1, 1]} : vector<16x128xf32> to vector<16x32xf32>
    %cst_221 = arith.constant dense<0.000000e+00> : vector<32x32xf32>
    %656 = tpu.matmul %654, %655, %cst_221 {dimension_numbers = #tpu.dot_dimension_numbers<[1], [0], [0], [1], [0, 0, 1, 1], [], []>} : vector<32x16xf32>, vector<16x32xf32>, vector<32x32xf32> -> vector<32x32xf32>
    %657 = arith.addf %643, %656 : vector<32x32xf32>
    %658 = tpu.iota {dimensions = array<i32: 0>} : vector<32x16xi32>
    %659 = tpu.iota {dimensions = array<i32: 1>} : vector<32x16xi32>
    %c2_i32_222 = arith.constant 2 : i32
    %660 = vector.broadcast %c2_i32_222 : i32 to vector<32x16xi32>
    %661 = arith.muli %660, %659 : vector<32x16xi32>
    %c1_i32_223 = arith.constant 1 : i32
    %662 = vector.broadcast %c1_i32_223 : i32 to vector<32x16xi32>
    %663 = arith.muli %662, %658 : vector<32x16xi32>
    %c-2_i32_224 = arith.constant -2 : i32
    %664 = vector.broadcast %c-2_i32_224 : i32 to vector<32x16xi32>
    %665 = arith.addi %663, %664 : vector<32x16xi32>
    %666 = arith.cmpi eq, %661, %665 : vector<32x16xi32>
    %667 = arith.extui %666 : vector<32x16xi1> to vector<32x16xi32>
    %668 = arith.sitofp %667 : vector<32x16xi32> to vector<32x16xf32>
    %669 = vector.extract_strided_slice %616 {offsets = [0, 96], sizes = [16, 32], strides = [1, 1]} : vector<16x128xf32> to vector<16x32xf32>
    %cst_225 = arith.constant dense<0.000000e+00> : vector<32x32xf32>
    %670 = tpu.matmul %668, %669, %cst_225 {dimension_numbers = #tpu.dot_dimension_numbers<[1], [0], [0], [1], [0, 0, 1, 1], [], []>} : vector<32x16xf32>, vector<16x32xf32>, vector<32x32xf32> -> vector<32x32xf32>
    %671 = arith.addf %657, %670 : vector<32x32xf32>
    %672 = vector.broadcast %10 : vector<1x32xf32> to vector<32x32xf32>
    %673 = arith.addf %671, %672 : vector<32x32xf32>
    %cst_226 = arith.constant 0.000000e+00 : f32
    %674 = vector.broadcast %cst_226 : f32 to vector<32x32xf32>
    %675 = arith.cmpf oge, %673, %674 : vector<32x32xf32>
    %cst_227 = arith.constant 2.500000e-01 : f32
    %676 = vector.broadcast %cst_227 : f32 to vector<32x32xf32>
    %677 = arith.mulf %676, %673 : vector<32x32xf32>
    %678 = arith.select %675, %673, %677 : vector<32x32xi1>, vector<32x32xf32>
    %679 = tpu.concatenate %678, %449 in 1 : vector<32x32xf32>, vector<32x32xf32> -> vector<32x64xf32>
    %680 = arith.truncf %679 : vector<32x64xf32> to vector<32x64xbf16>
    %cst_228 = arith.constant dense<0.000000e+00> : vector<32x64xf32>
    %681 = tpu.matmul %680, %11, %cst_228 {dimension_numbers = #tpu.dot_dimension_numbers<[1], [0], [0], [1], [0, 0, 1, 1], [], []>} : vector<32x64xbf16>, vector<64x64xbf16>, vector<32x64xf32> -> vector<32x64xf32>
    %682 = tpu.iota {dimensions = array<i32: 0>} : vector<64x32xi32>
    %683 = tpu.iota {dimensions = array<i32: 1>} : vector<64x32xi32>
    %c2_i32_229 = arith.constant 2 : i32
    %684 = vector.broadcast %c2_i32_229 : i32 to vector<64x32xi32>
    %685 = arith.muli %684, %683 : vector<64x32xi32>
    %c1_i32_230 = arith.constant 1 : i32
    %686 = vector.broadcast %c1_i32_230 : i32 to vector<64x32xi32>
    %687 = arith.muli %686, %682 : vector<64x32xi32>
    %c1_i32_231 = arith.constant 1 : i32
    %688 = vector.broadcast %c1_i32_231 : i32 to vector<64x32xi32>
    %689 = arith.addi %687, %688 : vector<64x32xi32>
    %690 = arith.cmpi eq, %685, %689 : vector<64x32xi32>
    %691 = arith.extui %690 : vector<64x32xi1> to vector<64x32xi32>
    %692 = arith.sitofp %691 : vector<64x32xi32> to vector<64x32xf32>
    %693 = vector.extract_strided_slice %681 {offsets = [0, 0], sizes = [32, 16], strides = [1, 1]} : vector<32x64xf32> to vector<32x16xf32>
    %cst_232 = arith.constant dense<0.000000e+00> : vector<64x16xf32>
    %694 = tpu.matmul %692, %693, %cst_232 {dimension_numbers = #tpu.dot_dimension_numbers<[1], [0], [0], [1], [0, 0, 1, 1], [], []>} : vector<64x32xf32>, vector<32x16xf32>, vector<64x16xf32> -> vector<64x16xf32>
    %695 = tpu.iota {dimensions = array<i32: 0>} : vector<64x32xi32>
    %696 = tpu.iota {dimensions = array<i32: 1>} : vector<64x32xi32>
    %c2_i32_233 = arith.constant 2 : i32
    %697 = vector.broadcast %c2_i32_233 : i32 to vector<64x32xi32>
    %698 = arith.muli %697, %696 : vector<64x32xi32>
    %c1_i32_234 = arith.constant 1 : i32
    %699 = vector.broadcast %c1_i32_234 : i32 to vector<64x32xi32>
    %700 = arith.muli %699, %695 : vector<64x32xi32>
    %c0_i32_235 = arith.constant 0 : i32
    %701 = vector.broadcast %c0_i32_235 : i32 to vector<64x32xi32>
    %702 = arith.addi %700, %701 : vector<64x32xi32>
    %703 = arith.cmpi eq, %698, %702 : vector<64x32xi32>
    %704 = arith.extui %703 : vector<64x32xi1> to vector<64x32xi32>
    %705 = arith.sitofp %704 : vector<64x32xi32> to vector<64x32xf32>
    %706 = vector.extract_strided_slice %681 {offsets = [0, 16], sizes = [32, 16], strides = [1, 1]} : vector<32x64xf32> to vector<32x16xf32>
    %cst_236 = arith.constant dense<0.000000e+00> : vector<64x16xf32>
    %707 = tpu.matmul %705, %706, %cst_236 {dimension_numbers = #tpu.dot_dimension_numbers<[1], [0], [0], [1], [0, 0, 1, 1], [], []>} : vector<64x32xf32>, vector<32x16xf32>, vector<64x16xf32> -> vector<64x16xf32>
    %708 = arith.addf %694, %707 : vector<64x16xf32>
    %709 = tpu.iota {dimensions = array<i32: 0>} : vector<64x32xi32>
    %710 = tpu.iota {dimensions = array<i32: 1>} : vector<64x32xi32>
    %c2_i32_237 = arith.constant 2 : i32
    %711 = vector.broadcast %c2_i32_237 : i32 to vector<64x32xi32>
    %712 = arith.muli %711, %710 : vector<64x32xi32>
    %c1_i32_238 = arith.constant 1 : i32
    %713 = vector.broadcast %c1_i32_238 : i32 to vector<64x32xi32>
    %714 = arith.muli %713, %709 : vector<64x32xi32>
    %c-1_i32_239 = arith.constant -1 : i32
    %715 = vector.broadcast %c-1_i32_239 : i32 to vector<64x32xi32>
    %716 = arith.addi %714, %715 : vector<64x32xi32>
    %717 = arith.cmpi eq, %712, %716 : vector<64x32xi32>
    %718 = arith.extui %717 : vector<64x32xi1> to vector<64x32xi32>
    %719 = arith.sitofp %718 : vector<64x32xi32> to vector<64x32xf32>
    %720 = vector.extract_strided_slice %681 {offsets = [0, 32], sizes = [32, 16], strides = [1, 1]} : vector<32x64xf32> to vector<32x16xf32>
    %cst_240 = arith.constant dense<0.000000e+00> : vector<64x16xf32>
    %721 = tpu.matmul %719, %720, %cst_240 {dimension_numbers = #tpu.dot_dimension_numbers<[1], [0], [0], [1], [0, 0, 1, 1], [], []>} : vector<64x32xf32>, vector<32x16xf32>, vector<64x16xf32> -> vector<64x16xf32>
    %722 = arith.addf %708, %721 : vector<64x16xf32>
    %723 = tpu.iota {dimensions = array<i32: 0>} : vector<64x32xi32>
    %724 = tpu.iota {dimensions = array<i32: 1>} : vector<64x32xi32>
    %c2_i32_241 = arith.constant 2 : i32
    %725 = vector.broadcast %c2_i32_241 : i32 to vector<64x32xi32>
    %726 = arith.muli %725, %724 : vector<64x32xi32>
    %c1_i32_242 = arith.constant 1 : i32
    %727 = vector.broadcast %c1_i32_242 : i32 to vector<64x32xi32>
    %728 = arith.muli %727, %723 : vector<64x32xi32>
    %c-2_i32_243 = arith.constant -2 : i32
    %729 = vector.broadcast %c-2_i32_243 : i32 to vector<64x32xi32>
    %730 = arith.addi %728, %729 : vector<64x32xi32>
    %731 = arith.cmpi eq, %726, %730 : vector<64x32xi32>
    %732 = arith.extui %731 : vector<64x32xi1> to vector<64x32xi32>
    %733 = arith.sitofp %732 : vector<64x32xi32> to vector<64x32xf32>
    %734 = vector.extract_strided_slice %681 {offsets = [0, 48], sizes = [32, 16], strides = [1, 1]} : vector<32x64xf32> to vector<32x16xf32>
    %cst_244 = arith.constant dense<0.000000e+00> : vector<64x16xf32>
    %735 = tpu.matmul %733, %734, %cst_244 {dimension_numbers = #tpu.dot_dimension_numbers<[1], [0], [0], [1], [0, 0, 1, 1], [], []>} : vector<64x32xf32>, vector<32x16xf32>, vector<64x16xf32> -> vector<64x16xf32>
    %736 = arith.addf %722, %735 : vector<64x16xf32>
    %737 = vector.broadcast %12 : vector<1x16xf32> to vector<64x16xf32>
    %738 = arith.addf %736, %737 : vector<64x16xf32>
    %cst_245 = arith.constant 0.000000e+00 : f32
    %739 = vector.broadcast %cst_245 : f32 to vector<64x16xf32>
    %740 = arith.cmpf oge, %738, %739 : vector<64x16xf32>
    %cst_246 = arith.constant 2.500000e-01 : f32
    %741 = vector.broadcast %cst_246 : f32 to vector<64x16xf32>
    %742 = arith.mulf %741, %738 : vector<64x16xf32>
    %743 = arith.select %740, %738, %742 : vector<64x16xi1>, vector<64x16xf32>
    %cst_247 = arith.constant dense<0.000000e+00> : vector<16xf32>
    %744 = vector.multi_reduction <add>, %743, %cst_247 [0] : vector<64x16xf32> to vector<16xf32>
    %745 = vector.shape_cast %744 : vector<16xf32> to vector<1x16xf32>
    %cst_248 = arith.constant 6.400000e+01 : f32
    %746 = vector.broadcast %cst_248 : f32 to vector<1x16xf32>
    %747 = arith.divf %745, %746 : vector<1x16xf32>
    %748 = arith.truncf %747 : vector<1x16xf32> to vector<1x16xbf16>
    %cst_249 = arith.constant dense<0.000000e+00> : vector<1x8xf32>
    %749 = tpu.matmul %748, %13, %cst_249 {dimension_numbers = #tpu.dot_dimension_numbers<[1], [0], [0], [1], [0, 0, 1, 1], [], []>} : vector<1x16xbf16>, vector<16x8xbf16>, vector<1x8xf32> -> vector<1x8xf32>
    %750 = arith.addf %749, %14 : vector<1x8xf32>
    %cst_250 = arith.constant 0.000000e+00 : f32
    %751 = vector.broadcast %cst_250 : f32 to vector<1x8xf32>
    %752 = arith.cmpf oge, %750, %751 : vector<1x8xf32>
    %cst_251 = arith.constant 2.500000e-01 : f32
    %753 = vector.broadcast %cst_251 : f32 to vector<1x8xf32>
    %754 = arith.mulf %753, %750 : vector<1x8xf32>
    %755 = arith.select %752, %750, %754 : vector<1x8xi1>, vector<1x8xf32>
    %756 = arith.truncf %755 : vector<1x8xf32> to vector<1x8xbf16>
    %cst_252 = arith.constant dense<0.000000e+00> : vector<1x8xf32>
    %757 = tpu.matmul %756, %15, %cst_252 {dimension_numbers = #tpu.dot_dimension_numbers<[1], [0], [0], [1], [0, 0, 1, 1], [], []>} : vector<1x8xbf16>, vector<8x8xbf16>, vector<1x8xf32> -> vector<1x8xf32>
    %758 = arith.addf %757, %16 : vector<1x8xf32>
    %cst_253 = arith.constant 0.000000e+00 : f32
    %759 = vector.broadcast %cst_253 : f32 to vector<1x8xf32>
    %760 = arith.cmpf oge, %758, %759 : vector<1x8xf32>
    %cst_254 = arith.constant 2.500000e-01 : f32
    %761 = vector.broadcast %cst_254 : f32 to vector<1x8xf32>
    %762 = arith.mulf %761, %758 : vector<1x8xf32>
    %763 = arith.select %760, %758, %762 : vector<1x8xi1>, vector<1x8xf32>
    %764 = arith.truncf %763 : vector<1x8xf32> to vector<1x8xbf16>
    %cst_255 = arith.constant dense<0.000000e+00> : vector<1x8xf32>
    %765 = tpu.matmul %764, %17, %cst_255 {dimension_numbers = #tpu.dot_dimension_numbers<[1], [0], [0], [1], [0, 0, 1, 1], [], []>} : vector<1x8xbf16>, vector<8x8xbf16>, vector<1x8xf32> -> vector<1x8xf32>
    %766 = arith.addf %765, %18 : vector<1x8xf32>
    %cst_256 = arith.constant 0.000000e+00 : f32
    %767 = vector.broadcast %cst_256 : f32 to vector<1x8xf32>
    %768 = arith.subf %767, %766 : vector<1x8xf32>
    %769 = math.exp %768 : vector<1x8xf32>
    %cst_257 = arith.constant 1.000000e+00 : f32
    %770 = vector.broadcast %cst_257 : f32 to vector<1x8xf32>
    %771 = arith.addf %770, %769 : vector<1x8xf32>
    %cst_258 = arith.constant 1.000000e+00 : f32
    %772 = vector.broadcast %cst_258 : f32 to vector<1x8xf32>
    %773 = arith.divf %772, %771 : vector<1x8xf32>
    %c1 = arith.constant 1 : index
    %c0_259 = arith.constant 0 : index
    %774 = vector.load %arg19[%c1, %c0_259] : memref<2x8xf32, #tpu.memory_space<vmem>>, vector<1x8xf32>
    tpu.vector_store %arg19[%c1, %c0_259], %773 {strides = array<i32>} : memref<2x8xf32, #tpu.memory_space<vmem>>, vector<1x8xf32>,
    return
  }
}

</mosaic_0001>

<llo_original>
// kernel: multiscale_specklenet_forward.1
$region0: #{multiscale_specklenet_forward.1}
  #allocation0 [shape = 'u32[]', space=smem, size = 0x4, offset = 0x4, fixed_abs, tag = 'smem constant byte address 0x4 - core index']
  #allocation1 [shape = 'u32[72,128]{1,0:T(1,128)}', space=vmem, size = 0x9000, scoped, tag = 'internal scratch']
  %s0 = inlined_call_operand.vmem [shape: f32[64,2], index: 0, kind: input, shape index: {}]
  %s1 = inlined_call_operand.vmem [shape: bf16[1,96], index: 1, kind: input, shape index: {}]
  %s2 = inlined_call_operand.vmem [shape: f32[1,32], index: 2, kind: input, shape index: {}]
  %s3 = inlined_call_operand.hbm [shape: bf16[32,192], index: 3, kind: input, shape index: {}]
  %s4 = inlined_call_operand.vmem [shape: f32[1,64], index: 4, kind: input, shape index: {}]
  %s5 = inlined_call_operand.hbm [shape: bf16[64,384], index: 5, kind: input, shape index: {}]
  %s6 = inlined_call_operand.vmem [shape: f32[1,128], index: 6, kind: input, shape index: {}]
  %s7 = inlined_call_operand.hbm [shape: bf16[128,256], index: 7, kind: input, shape index: {}]
  %s8 = inlined_call_operand.vmem [shape: f32[1,64], index: 8, kind: input, shape index: {}]
  %s9 = inlined_call_operand.vmem [shape: bf16[128,128], index: 9, kind: input, shape index: {}]
  %s10 = inlined_call_operand.vmem [shape: f32[1,32], index: 10, kind: input, shape index: {}]
  %s11 = inlined_call_operand.hbm [shape: bf16[64,64], index: 11, kind: input, shape index: {}]
  %s12 = inlined_call_operand.vmem [shape: f32[1,16], index: 12, kind: input, shape index: {}]
  %s13 = inlined_call_operand.vmem [shape: bf16[16,8], index: 13, kind: input, shape index: {}]
  %s14 = inlined_call_operand.vmem [shape: f32[1,8], index: 14, kind: input, shape index: {}]
  %s15 = inlined_call_operand.vmem [shape: bf16[8,8], index: 15, kind: input, shape index: {}]
  %s16 = inlined_call_operand.vmem [shape: f32[1,8], index: 16, kind: input, shape index: {}]
  %s17 = inlined_call_operand.vmem [shape: bf16[8,8], index: 17, kind: input, shape index: {}]
  %s18 = inlined_call_operand.vmem [shape: f32[1,8], index: 18, kind: input, shape index: {}]
  %s19 = inlined_call_operand.hbm [shape: f32[2,8], index: 19, kind: output, shape index: {}]
  %s20 = sld [smem:[#allocation0]]
  $region102: #{multiscale_specklenet_forward.1} parent=0
    _
  %s22 = ssub.s32 1, %s20
  %s23 = scalar_select 0, %s22, %s20
  $region1: #{multiscale_specklenet_forward.1} parent=0
    #allocation2 [shape = 'u8[16384]{0}', space=vmem, size = 0x4000, scoped, tag = 'input window, operand 3, single buffered']
    #allocation3 [shape = 's32[1]{0}', space=sflag, size = 0x4, scoped, tag = 'scoped memory for multiscale_specklenet_forward.1']
    #allocation4 [shape = 's32[1]{0}', space=sflag, size = 0x4, scoped, tag = 'scoped memory for multiscale_specklenet_forward.1']
    #allocation5 [shape = 'u8[49152]{0}', space=vmem, size = 0xc000, scoped, tag = 'input window, operand 5, single buffered']
    #allocation6 [shape = 's32[1]{0}', space=sflag, size = 0x4, scoped, tag = 'scoped memory for multiscale_specklenet_forward.1']
    #allocation7 [shape = 'u8[65536]{0}', space=vmem, size = 0x10000, scoped, tag = 'input window, operand 7, single buffered']
    #allocation8 [shape = 'u8[16384]{0}', space=vmem, size = 0x4000, scoped, tag = 'input window, operand 11, single buffered']
    #allocation9 [shape = 's32[1]{0}', space=sflag, size = 0x4, scoped, tag = 'scoped memory for multiscale_specklenet_forward.1']
    #allocation10 [shape = 'u8[1024]{0}', space=vmem, size = 0x400, scoped, tag = 'output window, operand 0, single buffered']
    %24 = vsyncpa [#allocation3], 0
    %25 = vsyncpa [#allocation6], 0
    %26 = vsyncpa [#allocation9], 0
    %27 = vsyncpa [#allocation4], 0
    // Predicated region
    $region2: #{multiscale_specklenet_forward.1} parent=1 // pred_check
      _
    $region3: #{multiscale_specklenet_forward.1} parent=1 // pred_check_branch
      %29 = sbr.rel (0) target = $region5
    $region4: #{multiscale_specklenet_forward.1} parent=1 // pred_region
      _
    $region5: #{multiscale_specklenet_forward.1} parent=1 // pred_fallthru
      _
    // Predicated region
    $region6: #{multiscale_specklenet_forward.1} parent=1 // pred_check
      _
    $region7: #{multiscale_specklenet_forward.1} parent=1 // pred_check_branch
      %31 = sbr.rel (0) target = $region9
    $region8: #{multiscale_specklenet_forward.1} parent=1 // pred_region
      _
    $region9: #{multiscale_specklenet_forward.1} parent=1 // pred_fallthru
      _
    // Predicated region
    $region10: #{multiscale_specklenet_forward.1} parent=1 // pred_check
      _
    $region11: #{multiscale_specklenet_forward.1} parent=1 // pred_check_branch
      %33 = sbr.rel (0) target = $region13
    $region12: #{multiscale_specklenet_forward.1} parent=1 // pred_region
      _
    $region13: #{multiscale_specklenet_forward.1} parent=1 // pred_fallthru
      _
    // Predicated region
    $region14: #{multiscale_specklenet_forward.1} parent=1 // pred_check
      _
    $region15: #{multiscale_specklenet_forward.1} parent=1 // pred_check_branch
      %35 = sbr.rel (0) target = $region17
    $region16: #{multiscale_specklenet_forward.1} parent=1 // pred_region
      %37 = vsyncadd [#allocation3], 0
      %s38 = sshll.u32 %s3, 4
      %s39 = int_to_ptr.hbm [resolvable:$true] %s38
      %s40 = sshll.u32 [#allocation2], 4
      %s41 = int_to_ptr.vmem [resolvable:$true] %s40
      %46 = dma.hbm_to_vmem [thread:$0]  %s39, 512, %s41, [#allocation3], 128, 128, 8
    $region17: #{multiscale_specklenet_forward.1} parent=1 // pred_fallthru
      _
    // Predicated region
    $region18: #{multiscale_specklenet_forward.1} parent=1 // pred_check
      _
    $region19: #{multiscale_specklenet_forward.1} parent=1 // pred_check_branch
      %48 = sbr.rel (0) target = $region21
    $region20: #{multiscale_specklenet_forward.1} parent=1 // pred_region
      _
    $region21: #{multiscale_specklenet_forward.1} parent=1 // pred_fallthru
      _
    // Predicated region
    $region22: #{multiscale_specklenet_forward.1} parent=1 // pred_check
      _
    $region23: #{multiscale_specklenet_forward.1} parent=1 // pred_check_branch
      %50 = sbr.rel (0) target = $region25
    $region24: #{multiscale_specklenet_forward.1} parent=1 // pred_region
      %52 = vsyncadd [#allocation6], 0
      %s53 = sshll.u32 %s5, 4
      %s54 = int_to_ptr.hbm [resolvable:$true] %s53
      %s55 = sshll.u32 [#allocation5], 4
      %s56 = int_to_ptr.vmem [resolvable:$true] %s55
      %61 = dma.hbm_to_vmem [thread:$0]  %s54, 1536, %s56, [#allocation6], 192, 192, 12
    $region25: #{multiscale_specklenet_forward.1} parent=1 // pred_fallthru
      _
    // Predicated region
    $region26: #{multiscale_specklenet_forward.1} parent=1 // pred_check
      _
    $region27: #{multiscale_specklenet_forward.1} parent=1 // pred_check_branch
      %63 = sbr.rel (0) target = $region29
    $region28: #{multiscale_specklenet_forward.1} parent=1 // pred_region
      _
    $region29: #{multiscale_specklenet_forward.1} parent=1 // pred_fallthru
      _
    // Predicated region
    $region30: #{multiscale_specklenet_forward.1} parent=1 // pred_check
      _
    $region31: #{multiscale_specklenet_forward.1} parent=1 // pred_check_branch
      %65 = sbr.rel (0) target = $region33
    $region32: #{multiscale_specklenet_forward.1} parent=1 // pred_region
      %67 = vsyncadd [#allocation6], 0
      %s68 = sshll.u32 %s7, 4
      %s69 = int_to_ptr.hbm [resolvable:$true] %s68
      %s70 = sshll.u32 [#allocation7], 4
      %s71 = int_to_ptr.vmem [resolvable:$true] %s70
      %76 = dma.hbm_to_vmem [thread:$0]  %s69, 2048, %s71, [#allocation6], 128, 128, 8
    $region33: #{multiscale_specklenet_forward.1} parent=1 // pred_fallthru
      _
    // Predicated region
    $region34: #{multiscale_specklenet_forward.1} parent=1 // pred_check
      _
    $region35: #{multiscale_specklenet_forward.1} parent=1 // pred_check_branch
      %78 = sbr.rel (0) target = $region37
    $region36: #{multiscale_specklenet_forward.1} parent=1 // pred_region
      _
    $region37: #{multiscale_specklenet_forward.1} parent=1 // pred_fallthru
      _
    // Predicated region
    $region38: #{multiscale_specklenet_forward.1} parent=1 // pred_check
      _
    $region39: #{multiscale_specklenet_forward.1} parent=1 // pred_check_branch
      %80 = sbr.rel (0) target = $region41
    $region40: #{multiscale_specklenet_forward.1} parent=1 // pred_region
      _
    $region41: #{multiscale_specklenet_forward.1} parent=1 // pred_fallthru
      _
    // Predicated region
    $region42: #{multiscale_specklenet_forward.1} parent=1 // pred_check
      _
    $region43: #{multiscale_specklenet_forward.1} parent=1 // pred_check_branch
      %82 = sbr.rel (0) target = $region45
    $region44: #{multiscale_specklenet_forward.1} parent=1 // pred_region
      _
    $region45: #{multiscale_specklenet_forward.1} parent=1 // pred_fallthru
      _
    // Predicated region
    $region46: #{multiscale_specklenet_forward.1} parent=1 // pred_check
      _
    $region47: #{multiscale_specklenet_forward.1} parent=1 // pred_check_branch
      %84 = sbr.rel (0) target = $region49
    $region48: #{multiscale_specklenet_forward.1} parent=1 // pred_region
      %86 = vsyncadd [#allocation9], 0
      %s87 = sshll.u32 %s11, 4
      %s88 = int_to_ptr.hbm [resolvable:$true] %s87
      %s89 = sshll.u32 [#allocation8], 4
      %s90 = int_to_ptr.vmem [resolvable:$true] %s89
      %95 = dma.hbm_to_vmem [thread:$0]  %s88, 512, %s90, [#allocation9], 64, 64, 4
    $region49: #{multiscale_specklenet_forward.1} parent=1 // pred_fallthru
      _
    // Predicated region
    $region50: #{multiscale_specklenet_forward.1} parent=1 // pred_check
      _
    $region51: #{multiscale_specklenet_forward.1} parent=1 // pred_check_branch
      %97 = sbr.rel (0) target = $region53
    $region52: #{multiscale_specklenet_forward.1} parent=1 // pred_region
      _
    $region53: #{multiscale_specklenet_forward.1} parent=1 // pred_fallthru
      _
    // Predicated region
    $region54: #{multiscale_specklenet_forward.1} parent=1 // pred_check
      _
    $region55: #{multiscale_specklenet_forward.1} parent=1 // pred_check_branch
      %99 = sbr.rel (0) target = $region57
    $region56: #{multiscale_specklenet_forward.1} parent=1 // pred_region
      _
    $region57: #{multiscale_specklenet_forward.1} parent=1 // pred_fallthru
      _
    // Predicated region
    $region58: #{multiscale_specklenet_forward.1} parent=1 // pred_check
      _
    $region59: #{multiscale_specklenet_forward.1} parent=1 // pred_check_branch
      %101 = sbr.rel (0) target = $region61
    $region60: #{multiscale_specklenet_forward.1} parent=1 // pred_region
      _
    $region61: #{multiscale_specklenet_forward.1} parent=1 // pred_fallthru
      _
    // Predicated region
    $region62: #{multiscale_specklenet_forward.1} parent=1 // pred_check
      _
    $region63: #{multiscale_specklenet_forward.1} parent=1 // pred_check_branch
      %103 = sbr.rel (0) target = $region65
    $region64: #{multiscale_specklenet_forward.1} parent=1 // pred_region
      _
    $region65: #{multiscale_specklenet_forward.1} parent=1 // pred_fallthru
      _
    // Predicated region
    $region66: #{multiscale_specklenet_forward.1} parent=1 // pred_check
      _
    $region67: #{multiscale_specklenet_forward.1} parent=1 // pred_check_branch
      %105 = sbr.rel (0) target = $region69
    $region68: #{multiscale_specklenet_forward.1} parent=1 // pred_region
      _
    $region69: #{multiscale_specklenet_forward.1} parent=1 // pred_fallthru
      _
    // Predicated region
    $region70: #{multiscale_specklenet_forward.1} parent=1 // pred_check
      _
    $region71: #{multiscale_specklenet_forward.1} parent=1 // pred_check_branch
      %107 = sbr.rel (0) target = $region73
    $region72: #{multiscale_specklenet_forward.1} parent=1 // pred_region
      _
    $region73: #{multiscale_specklenet_forward.1} parent=1 // pred_fallthru
      _
    // Predicated region
    $region74: #{multiscale_specklenet_forward.1} parent=1 // pred_check
      _
    $region75: #{multiscale_specklenet_forward.1} parent=1 // pred_check_branch
      %109 = sbr.rel (0) target = $region77
    $region76: #{multiscale_specklenet_forward.1} parent=1 // pred_region
      _
    $region77: #{multiscale_specklenet_forward.1} parent=1 // pred_fallthru
      _
    // Predicated region
    $region78: #{multiscale_specklenet_forward.1} parent=1 // pred_check
      _
    $region79: #{multiscale_specklenet_forward.1} parent=1 // pred_check_branch
      %111 = sbr.rel (0) target = $region81
    $region80: #{multiscale_specklenet_forward.1} parent=1 // pred_region
      %113 = dma.done [#allocation3], 512
    $region81: #{multiscale_specklenet_forward.1} parent=1 // pred_fallthru
      _
    // Predicated region
    $region82: #{multiscale_specklenet_forward.1} parent=1 // pred_check
      _
    $region83: #{multiscale_specklenet_forward.1} parent=1 // pred_check_branch
      %115 = sbr.rel (0) target = $region85
    $region84: #{multiscale_specklenet_forward.1} parent=1 // pred_region
      %117 = dma.done [#allocation6], 1536
    $region85: #{multiscale_specklenet_forward.1} parent=1 // pred_fallthru
      _
    // Predicated region
    $region86: #{multiscale_specklenet_forward.1} parent=1 // pred_check
      _
    $region87: #{multiscale_specklenet_forward.1} parent=1 // pred_check_branch
      %119 = sbr.rel (0) target = $region89
    $region88: #{multiscale_specklenet_forward.1} parent=1 // pred_region
      %121 = dma.done [#allocation6], 2048
    $region89: #{multiscale_specklenet_forward.1} parent=1 // pred_fallthru
      _
    // Predicated region
    $region90: #{multiscale_specklenet_forward.1} parent=1 // pred_check
      _
    $region91: #{multiscale_specklenet_forward.1} parent=1 // pred_check_branch
      %123 = sbr.rel (0) target = $region93
    $region92: #{multiscale_specklenet_forward.1} parent=1 // pred_region
      %125 = dma.done [#allocation9], 512
    $region93: #{multiscale_specklenet_forward.1} parent=1 // pred_fallthru
      _
    %v127 = vld [vmem:[%s0] sm:$0xff]
    %v128 = vld [vmem:[%s0 + $0x8] sm:$0xff]
    %v129 = vld [vmem:[%s0 + $0x10] sm:$0xff]
    %v130 = vld [vmem:[%s0 + $0x18] sm:$0xff]
    %v131 = vld [vmem:[%s0 + $0x20] sm:$0xff]
    %v132 = vld [vmem:[%s0 + $0x28] sm:$0xff]
    %v133 = vld [vmem:[%s0 + $0x30] sm:$0xff]
    %v134 = vld [vmem:[%s0 + $0x38] sm:$0xff]
    %v135 = vld [vmem:[%s1] sm:$0x1]
    %v136 = vld [vmem:[%s2] sm:$0x1]
    %v137 = vld [vmem:[#allocation2] sm:$0xff]
    %v138 = vld [vmem:[#allocation2 + $0x8] sm:$0xff]
    %v139 = vld [vmem:[#allocation2 + $0x10] sm:$0xff]
    %v140 = vld [vmem:[#allocation2 + $0x18] sm:$0xff]
    %v141 = vld [vmem:[%s4] sm:$0x1]
    %v142 = vld [vmem:[#allocation5] sm:$0xff]
    %v143 = vld [vmem:[#allocation5 + $0x8] sm:$0xf]
    %v144 = vld [vmem:[#allocation5 + $0xc] sm:$0xff]
    %v145 = vld [vmem:[#allocation5 + $0x14] sm:$0xf]
    %v146 = vld [vmem:[#allocation5 + $0x18] sm:$0xff]
    %v147 = vld [vmem:[#allocation5 + $0x20] sm:$0xf]
    %v148 = vld [vmem:[#allocation5 + $0x24] sm:$0xff]
    %v149 = vld [vmem:[#allocation5 + $0x2c] sm:$0xf]
    %v150 = vld [vmem:[#allocation5 + $0x30] sm:$0xff]
    %v151 = vld [vmem:[#allocation5 + $0x38] sm:$0xf]
    %v152 = vld [vmem:[#allocation5 + $0x3c] sm:$0xff]
    %v153 = vld [vmem:[#allocation5 + $0x44] sm:$0xf]
    %v154 = vld [vmem:[#allocation5 + $0x48] sm:$0xff]
    %v155 = vld [vmem:[#allocation5 + $0x50] sm:$0xf]
    %v156 = vld [vmem:[#allocation5 + $0x54] sm:$0xff]
    %v157 = vld [vmem:[#allocation5 + $0x5c] sm:$0xf]
    %v158 = vld [vmem:[%s6] sm:$0x1]
    %v159 = vld [vmem:[#allocation7] sm:$0xff]
    %v160 = vld [vmem:[#allocation7 + $0x8] sm:$0xff]
    %v161 = vld [vmem:[#allocation7 + $0x10] sm:$0xff]
    %v162 = vld [vmem:[#allocation7 + $0x18] sm:$0xff]
    %v163 = vld [vmem:[#allocation7 + $0x20] sm:$0xff]
    %v164 = vld [vmem:[#allocation7 + $0x28] sm:$0xff]
    %v165 = vld [vmem:[#allocation7 + $0x30] sm:$0xff]
    %v166 = vld [vmem:[#allocation7 + $0x38] sm:$0xff]
    %v167 = vld [vmem:[#allocation7 + $0x40] sm:$0xff]
    %v168 = vld [vmem:[#allocation7 + $0x48] sm:$0xff]
    %v169 = vld [vmem:[#allocation7 + $0x50] sm:$0xff]
    %v170 = vld [vmem:[#allocation7 + $0x58] sm:$0xff]
    %v171 = vld [vmem:[#allocation7 + $0x60] sm:$0xff]
    %v172 = vld [vmem:[#allocation7 + $0x68] sm:$0xff]
    %v173 = vld [vmem:[#allocation7 + $0x70] sm:$0xff]
    %v174 = vld [vmem:[#allocation7 + $0x78] sm:$0xff]
    %v175 = vld [vmem:[%s8] sm:$0x1]
    %v176 = vld [vmem:[%s9] sm:$0xf]
    %v177 = vld [vmem:[%s9 + $0x4] sm:$0xf]
    %v178 = vld [vmem:[%s9 + $0x8] sm:$0xf]
    %v179 = vld [vmem:[%s9 + $0xc] sm:$0xf]
    %v180 = vld [vmem:[%s9 + $0x10] sm:$0xf]
    %v181 = vld [vmem:[%s9 + $0x14] sm:$0xf]
    %v182 = vld [vmem:[%s9 + $0x18] sm:$0xf]
    %v183 = vld [vmem:[%s9 + $0x1c] sm:$0xf]
    %v184 = vld [vmem:[%s9 + $0x20] sm:$0xf]
    %v185 = vld [vmem:[%s9 + $0x24] sm:$0xf]
    %v186 = vld [vmem:[%s9 + $0x28] sm:$0xf]
    %v187 = vld [vmem:[%s9 + $0x2c] sm:$0xf]
    %v188 = vld [vmem:[%s9 + $0x30] sm:$0xf]
    %v189 = vld [vmem:[%s9 + $0x34] sm:$0xf]
    %v190 = vld [vmem:[%s9 + $0x38] sm:$0xf]
    %v191 = vld [vmem:[%s9 + $0x3c] sm:$0xf]
    %v192 = vld [vmem:[%s10] sm:$0x1]
    %v193 = vld [vmem:[#allocation8] sm:$0xf]
    %v194 = vld [vmem:[#allocation8 + $0x4] sm:$0xf]
    %v195 = vld [vmem:[#allocation8 + $0x8] sm:$0xf]
    %v196 = vld [vmem:[#allocation8 + $0xc] sm:$0xf]
    %v197 = vld [vmem:[#allocation8 + $0x10] sm:$0xf]
    %v198 = vld [vmem:[#allocation8 + $0x14] sm:$0xf]
    %v199 = vld [vmem:[#allocation8 + $0x18] sm:$0xf]
    %v200 = vld [vmem:[#allocation8 + $0x1c] sm:$0xf]
    %v201 = vld [vmem:[%s12] sm:$0x1]
    %v202 = vld [vmem:[%s13] sm:$0xf]
    %v203 = vld [vmem:[%s13 + $0x4] sm:$0xf]
    %v204 = vld [vmem:[%s14] sm:$0x1]
    %v205 = vld [vmem:[%s15] sm:$0xf]
    %v206 = vld [vmem:[%s16] sm:$0x1]
    %v207 = vld [vmem:[%s17] sm:$0xf]
    %v208 = vld [vmem:[%s18] sm:$0x1]
    %v209 = vunpack.c.l.bf16 %v135
    %211 = vset.pattern.permute.xlu0 0
    %212 = vperm.xlu0 %211, %v127
    %v213 = vpop.permute.xlu0 %212
    %216 = vset.pattern.permute.xlu0 0
    %217 = vperm.xlu0 %216, %v128
    %v218 = vpop.permute.xlu0 %217
    %221 = vset.pattern.permute.xlu0 0
    %222 = vperm.xlu0 %221, %v129
    %v223 = vpop.permute.xlu0 %222
    %226 = vset.pattern.permute.xlu0 0
    %227 = vperm.xlu0 %226, %v130
    %v228 = vpop.permute.xlu0 %227
    %231 = vset.pattern.permute.xlu0 0
    %232 = vperm.xlu0 %231, %v131
    %v233 = vpop.permute.xlu0 %232
    %236 = vset.pattern.permute.xlu0 0
    %237 = vperm.xlu0 %236, %v132
    %v238 = vpop.permute.xlu0 %237
    %241 = vset.pattern.permute.xlu0 0
    %242 = vperm.xlu0 %241, %v133
    %v243 = vpop.permute.xlu0 %242
    %246 = vset.pattern.permute.xlu0 0
    %247 = vperm.xlu0 %246, %v134
    %v248 = vpop.permute.xlu0 %247
    %v250 = vperm.slane %v209, 0
    %v251 = vmul.f32 %v213, %v250
    %v252 = vmul.f32 %v218, %v250
    %v253 = vmul.f32 %v223, %v250
    %v254 = vmul.f32 %v228, %v250
    %v255 = vmul.f32 %v233, %v250
    %v256 = vmul.f32 %v238, %v250
    %v257 = vmul.f32 %v243, %v250
    %v258 = vmul.f32 %v248, %v250
    %v259 = vlaneseq
    %v260 = vshrl.u32 %v259, 7
    %v261 = vadd.s32 %v260, 8
    %v262 = vadd.s32 %v260, 16
    %v263 = vadd.s32 %v260, 24
    %v264 = vlaneseq
    %v265 = vand.u32 %v264, 127
    %v266 = vmul.u32 %v260, 2
    %v267 = vmul.u32 %v261, 2
    %v268 = vmul.u32 %v262, 2
    %v269 = vmul.u32 %v263, 2
    %v270 = vadd.s32 %v266, 4294967295
    %v271 = vadd.s32 %v267, 4294967295
    %v272 = vadd.s32 %v268, 4294967295
    %v273 = vadd.s32 %v269, 4294967295
    %vm274 = vcmp.eq.s32.totalorder %v265, %v270
    %vm275 = vcmp.eq.s32.totalorder %v265, %v271
    %vm276 = vcmp.eq.s32.totalorder %v265, %v272
    %vm277 = vcmp.eq.s32.totalorder %v265, %v273
    %v278 = vsel %vm274, 1, 0
    %v279 = vsel %vm275, 1, 0
    %v280 = vsel %vm276, 1, 0
    %v281 = vsel %vm277, 1, 0
    %v282 = vcvt.s32.f32 %v278
    %v283 = vcvt.s32.f32 %v279
    %v284 = vcvt.s32.f32 %v280
    %v285 = vcvt.s32.f32 %v281
    %vm286 = vcmp.eq.s32.totalorder %v265, %v266
    %vm287 = vcmp.eq.s32.totalorder %v265, %v267
    %vm288 = vcmp.eq.s32.totalorder %v265, %v268
    %vm289 = vcmp.eq.s32.totalorder %v265, %v269
    %v290 = vsel %vm286, 1, 0
    %v291 = vsel %vm287, 1, 0
    %v292 = vsel %vm288, 1, 0
    %v293 = vsel %vm289, 1, 0
    %v294 = vcvt.s32.f32 %v290
    %v295 = vcvt.s32.f32 %v291
    %v296 = vcvt.s32.f32 %v292
    %v297 = vcvt.s32.f32 %v293
    %306 = vrot.lane.b32.xlu0 %v251, 96
    %v307 = vpop.permute.xlu0 %306
    %308 = vrot.lane.b32.xlu0 %v252, 96
    %v309 = vpop.permute.xlu0 %308
    %310 = vrot.lane.b32.xlu0 %v253, 96
    %v311 = vpop.permute.xlu0 %310
    %312 = vrot.lane.b32.xlu0 %v254, 96
    %v313 = vpop.permute.xlu0 %312
    %314 = vrot.lane.b32.xlu0 %v255, 96
    %v315 = vpop.permute.xlu0 %314
    %316 = vrot.lane.b32.xlu0 %v256, 96
    %v317 = vpop.permute.xlu0 %316
    %318 = vrot.lane.b32.xlu0 %v257, 96
    %v319 = vpop.permute.xlu0 %318
    %320 = vrot.lane.b32.xlu0 %v258, 96
    %v321 = vpop.permute.xlu0 %320
    %vm330 = vcmask 523264
    %v332 = vsel %vm330, %v294, 0
    %v335 = vsel %vm330, %v295, 0
    %v338 = vsel %vm330, %v296, 0
    %v341 = vsel %vm330, %v297, 0
    %343 = vmatpush.msra.mxu0 0.0
    %344 = vmatpush.msra.mxu0 0.0
    %345 = vmatpush.msra.mxu0 0.0
    %346 = vmatpush.msra.mxu0 0.0
    %347 = vmatpush.msra.mxu0 0.0
    %348 = vmatpush.msra.mxu0 0.0
    %349 = vmatpush.msra.mxu0 0.0
    %350 = vmatpush.msra.mxu0 0.0
    %351 = vmatpush.msra.mxu0 %v321
    %352 = vmatpush.msra.mxu0 %v319
    %353 = vmatpush.msra.mxu0 %v317
    %354 = vmatpush.msra.mxu0 %v315
    %355 = vmatpush.msra.mxu0 %v313
    %356 = vmatpush.msra.mxu0 %v311
    %357 = vmatpush.msra.mxu0 %v309
    %358 = vmatpush.msra.mxu0 %v307
    %359 = vmatmul.f32.gmra.mxu0 %v332
    %v360 = vpop.f32.mrf.mxu0
    %v361 = vadd.f32 0.0, %v360
    %362 = vmatmul.f32.gmra.mxu0 %v335
    %v363 = vpop.f32.mrf.mxu0
    %v364 = vadd.f32 0.0, %v363
    %365 = vmatmul.f32.gmra.mxu0 %v338
    %v366 = vpop.f32.mrf.mxu0
    %v367 = vadd.f32 0.0, %v366
    %368 = vmatmul.f32.gmra.mxu0 %v341
    %v369 = vpop.f32.mrf.mxu0
    %v370 = vadd.f32 0.0, %v369
    %371 = vdwg.mxu0
    %v373 = vsel %vm330, %v282, 0
    %v376 = vsel %vm330, %v283, 0
    %v379 = vsel %vm330, %v284, 0
    %v382 = vsel %vm330, %v285, 0
    %384 = vmatpush.msra.mxu0 0.0
    %385 = vmatpush.msra.mxu0 0.0
    %386 = vmatpush.msra.mxu0 0.0
    %387 = vmatpush.msra.mxu0 0.0
    %388 = vmatpush.msra.mxu0 0.0
    %389 = vmatpush.msra.mxu0 0.0
    %390 = vmatpush.msra.mxu0 0.0
    %391 = vmatpush.msra.mxu0 0.0
    %392 = vmatpush.msra.mxu0 %v258
    %393 = vmatpush.msra.mxu0 %v257
    %394 = vmatpush.msra.mxu0 %v256
    %395 = vmatpush.msra.mxu0 %v255
    %396 = vmatpush.msra.mxu0 %v254
    %397 = vmatpush.msra.mxu0 %v253
    %398 = vmatpush.msra.mxu0 %v252
    %399 = vmatpush.msra.mxu0 %v251
    %400 = vmatmul.f32.gmra.mxu0 %v373
    %v401 = vpop.f32.mrf.mxu0
    %v402 = vadd.f32 %v361, %v401
    %403 = vmatmul.f32.gmra.mxu0 %v376
    %v404 = vpop.f32.mrf.mxu0
    %v405 = vadd.f32 %v364, %v404
    %406 = vmatmul.f32.gmra.mxu0 %v379
    %v407 = vpop.f32.mrf.mxu0
    %v408 = vadd.f32 %v367, %v407
    %409 = vmatmul.f32.gmra.mxu0 %v382
    %v410 = vpop.f32.mrf.mxu0
    %v411 = vadd.f32 %v370, %v410
    %412 = vdwg.mxu0
    %v413 = vadd.s32 %v266, 1
    %v414 = vadd.s32 %v267, 1
    %v415 = vadd.s32 %v268, 1
    %v416 = vadd.s32 %v269, 1
    %vm417 = vcmp.eq.s32.totalorder %v265, %v413
    %vm418 = vcmp.eq.s32.totalorder %v265, %v414
    %vm419 = vcmp.eq.s32.totalorder %v265, %v415
    %vm420 = vcmp.eq.s32.totalorder %v265, %v416
    %v421 = vsel %vm417, 1, 0
    %v422 = vsel %vm418, 1, 0
    %v423 = vsel %vm419, 1, 0
    %v424 = vsel %vm420, 1, 0
    %v425 = vcvt.s32.f32 %v421
    %v426 = vcvt.s32.f32 %v422
    %v427 = vcvt.s32.f32 %v423
    %v428 = vcvt.s32.f32 %v424
    %429 = vrot.lane.b32.xlu0 %v251, 64
    %v430 = vpop.permute.xlu0 %429
    %431 = vrot.lane.b32.xlu0 %v252, 64
    %v432 = vpop.permute.xlu0 %431
    %433 = vrot.lane.b32.xlu0 %v253, 64
    %v434 = vpop.permute.xlu0 %433
    %435 = vrot.lane.b32.xlu0 %v254, 64
    %v436 = vpop.permute.xlu0 %435
    %437 = vrot.lane.b32.xlu0 %v255, 64
    %v438 = vpop.permute.xlu0 %437
    %439 = vrot.lane.b32.xlu0 %v256, 64
    %v440 = vpop.permute.xlu0 %439
    %441 = vrot.lane.b32.xlu0 %v257, 64
    %v442 = vpop.permute.xlu0 %441
    %443 = vrot.lane.b32.xlu0 %v258, 64
    %v444 = vpop.permute.xlu0 %443
    %v454 = vsel %vm330, %v425, 0
    %v457 = vsel %vm330, %v426, 0
    %v460 = vsel %vm330, %v427, 0
    %v463 = vsel %vm330, %v428, 0
    %465 = vmatpush.msra.mxu0 0.0
    %466 = vmatpush.msra.mxu0 0.0
    %467 = vmatpush.msra.mxu0 0.0
    %468 = vmatpush.msra.mxu0 0.0
    %469 = vmatpush.msra.mxu0 0.0
    %470 = vmatpush.msra.mxu0 0.0
    %471 = vmatpush.msra.mxu0 0.0
    %472 = vmatpush.msra.mxu0 0.0
    %473 = vmatpush.msra.mxu0 %v444
    %474 = vmatpush.msra.mxu0 %v442
    %475 = vmatpush.msra.mxu0 %v440
    %476 = vmatpush.msra.mxu0 %v438
    %477 = vmatpush.msra.mxu0 %v436
    %478 = vmatpush.msra.mxu0 %v434
    %479 = vmatpush.msra.mxu0 %v432
    %480 = vmatpush.msra.mxu0 %v430
    %481 = vmatmul.f32.gmra.mxu0 %v454
    %v482 = vpop.f32.mrf.mxu0
    %v483 = vadd.f32 0.0, %v482
    %484 = vmatmul.f32.gmra.mxu0 %v457
    %v485 = vpop.f32.mrf.mxu0
    %v486 = vadd.f32 0.0, %v485
    %487 = vmatmul.f32.gmra.mxu0 %v460
    %v488 = vpop.f32.mrf.mxu0
    %v489 = vadd.f32 0.0, %v488
    %490 = vmatmul.f32.gmra.mxu0 %v463
    %v491 = vpop.f32.mrf.mxu0
    %v492 = vadd.f32 0.0, %v491
    %493 = vdwg.mxu0
    %v494 = vadd.f32 %v402, %v483
    %v495 = vadd.f32 %v405, %v486
    %v496 = vadd.f32 %v408, %v489
    %v497 = vadd.f32 %v411, %v492
    %v499 = vperm.slane %v136, 0
    %v501 = vadd.f32 %v494, %v499
    %v502 = vadd.f32 %v495, %v499
    %v503 = vadd.f32 %v496, %v499
    %v504 = vadd.f32 %v497, %v499
    %vm505 = vcmp.ge.f32.partialorder %v501, 0.0
    %vm506 = vcmp.ge.f32.partialorder %v502, 0.0
    %vm507 = vcmp.ge.f32.partialorder %v503, 0.0
    %vm508 = vcmp.ge.f32.partialorder %v504, 0.0
    %v509 = vmul.f32 %v501, 0.25
    %v510 = vmul.f32 %v502, 0.25
    %v511 = vmul.f32 %v503, 0.25
    %v512 = vmul.f32 %v504, 0.25
    %v513 = vsel %vm505, %v501, %v509
    %v514 = vsel %vm506, %v502, %v510
    %v515 = vsel %vm507, %v503, %v511
    %v516 = vsel %vm508, %v504, %v512
    %v517 = vpack.c.bf16 %v514, %v513
    %v518 = vpack.c.bf16 %v516, %v515
    %v523 = vunpack.c.l.b16 %v137
    %v524 = vunpack.c.h.b16 %v137
    %v525 = vunpack.c.l.b16 %v138
    %v526 = vunpack.c.h.b16 %v138
    %v527 = vunpack.c.l.b16 %v139
    %v528 = vunpack.c.h.b16 %v139
    %v529 = vunpack.c.l.b16 %v140
    %v530 = vunpack.c.h.b16 %v140
    %v531 = vpack.c.b16 %v525, %v523
    %v532 = vpack.c.b16 %v526, %v524
    %v533 = vpack.c.b16 %v529, %v527
    %v534 = vpack.c.b16 %v530, %v528
    %vm539 = vcmask 261120
    %v541 = vsel %vm539, %v517, 0
    %v544 = vsel %vm539, %v518, 0
    %546 = vmatpush.bf16.msra.mxu0 0
    %547 = vmatpush.bf16.msra.mxu0 0
    %548 = vmatpush.bf16.msra.mxu0 0
    %549 = vmatpush.bf16.msra.mxu0 0
    %550 = vmatpush.bf16.msra.mxu0 0
    %551 = vmatpush.bf16.msra.mxu0 0
    %552 = vmatpush.bf16.msra.mxu0 %v533
    %553 = vmatpush.bf16.msra.mxu0 %v531
    %554 = vmatmul.bf16.gmra.mxu0 %v541
    %v555 = vpop.f32.mrf.mxu0
    %v556 = vadd.f32 0.0, %v555
    %v557 = vpop.f32.mrf.mxu0
    %v558 = vadd.f32 0.0, %v557
    %559 = vmatmul.bf16.gmra.mxu0 %v544
    %v560 = vpop.f32.mrf.mxu0
    %v561 = vadd.f32 0.0, %v560
    %v562 = vpop.f32.mrf.mxu0
    %v563 = vadd.f32 0.0, %v562
    %564 = vdwg.mxu0
    %565 = vmatpush.bf16.msra.mxu0 0
    %566 = vmatpush.bf16.msra.mxu0 0
    %567 = vmatpush.bf16.msra.mxu0 0
    %568 = vmatpush.bf16.msra.mxu0 0
    %569 = vmatpush.bf16.msra.mxu0 0
    %570 = vmatpush.bf16.msra.mxu0 0
    %571 = vmatpush.bf16.msra.mxu0 %v534
    %572 = vmatpush.bf16.msra.mxu0 %v532
    %573 = vmatmul.bf16.gmra.mxu0 %v541
    %v574 = vpop.f32.mrf.mxu0
    %v575 = vadd.f32 0.0, %v574
    %v576 = vpop.f32.mrf.mxu0
    %v577 = vadd.f32 0.0, %v576
    %578 = vmatmul.bf16.gmra.mxu0 %v544
    %v579 = vpop.f32.mrf.mxu0
    %v580 = vadd.f32 0.0, %v579
    %v581 = vpop.f32.mrf.mxu0
    %v582 = vadd.f32 0.0, %v581
    %583 = vdwg.mxu0
    %588 = vrot.lane.b32.xlu0 %v556, 64
    %v589 = vpop.permute.xlu0 %588
    %590 = vrot.lane.b32.xlu0 %v558, 64
    %v591 = vpop.permute.xlu0 %590
    %592 = vrot.lane.b32.xlu0 %v561, 64
    %v593 = vpop.permute.xlu0 %592
    %594 = vrot.lane.b32.xlu0 %v563, 64
    %v595 = vpop.permute.xlu0 %594
    %v600 = vsel %vm539, %v294, 0
    %v602 = vsel %vm539, %v295, 0
    %604 = vmatpush.msra.mxu0 0.0
    %605 = vmatpush.msra.mxu0 0.0
    %606 = vmatpush.msra.mxu0 0.0
    %607 = vmatpush.msra.mxu0 0.0
    %608 = vmatpush.msra.mxu0 0.0
    %609 = vmatpush.msra.mxu0 0.0
    %610 = vmatpush.msra.mxu0 0.0
    %611 = vmatpush.msra.mxu0 0.0
    %612 = vmatpush.msra.mxu0 0.0
    %613 = vmatpush.msra.mxu0 0.0
    %614 = vmatpush.msra.mxu0 0.0
    %615 = vmatpush.msra.mxu0 0.0
    %616 = vmatpush.msra.mxu0 %v595
    %617 = vmatpush.msra.mxu0 %v593
    %618 = vmatpush.msra.mxu0 %v591
    %619 = vmatpush.msra.mxu0 %v589
    %620 = vmatmul.f32.gmra.mxu0 %v600
    %v621 = vpop.f32.mrf.mxu0
    %v622 = vadd.f32 0.0, %v621
    %623 = vmatmul.f32.gmra.mxu0 %v602
    %v624 = vpop.f32.mrf.mxu0
    %v625 = vadd.f32 0.0, %v624
    %626 = vdwg.mxu0
    %v627 = vsel %vm539, %v282, 0
    %v629 = vsel %vm539, %v283, 0
    %631 = vmatpush.msra.mxu0 0.0
    %632 = vmatpush.msra.mxu0 0.0
    %633 = vmatpush.msra.mxu0 0.0
    %634 = vmatpush.msra.mxu0 0.0
    %635 = vmatpush.msra.mxu0 0.0
    %636 = vmatpush.msra.mxu0 0.0
    %637 = vmatpush.msra.mxu0 0.0
    %638 = vmatpush.msra.mxu0 0.0
    %639 = vmatpush.msra.mxu0 0.0
    %640 = vmatpush.msra.mxu0 0.0
    %641 = vmatpush.msra.mxu0 0.0
    %642 = vmatpush.msra.mxu0 0.0
    %643 = vmatpush.msra.mxu0 %v563
    %644 = vmatpush.msra.mxu0 %v561
    %645 = vmatpush.msra.mxu0 %v558
    %646 = vmatpush.msra.mxu0 %v556
    %647 = vmatmul.f32.gmra.mxu0 %v627
    %v648 = vpop.f32.mrf.mxu0
    %v649 = vadd.f32 %v622, %v648
    %650 = vmatmul.f32.gmra.mxu0 %v629
    %v651 = vpop.f32.mrf.mxu0
    %v652 = vadd.f32 %v625, %v651
    %653 = vdwg.mxu0
    %v654 = vsel %vm539, %v425, 0
    %v656 = vsel %vm539, %v426, 0
    %658 = vmatpush.msra.mxu0 0.0
    %659 = vmatpush.msra.mxu0 0.0
    %660 = vmatpush.msra.mxu0 0.0
    %661 = vmatpush.msra.mxu0 0.0
    %662 = vmatpush.msra.mxu0 0.0
    %663 = vmatpush.msra.mxu0 0.0
    %664 = vmatpush.msra.mxu0 0.0
    %665 = vmatpush.msra.mxu0 0.0
    %666 = vmatpush.msra.mxu0 0.0
    %667 = vmatpush.msra.mxu0 0.0
    %668 = vmatpush.msra.mxu0 0.0
    %669 = vmatpush.msra.mxu0 0.0
    %670 = vmatpush.msra.mxu0 %v582
    %671 = vmatpush.msra.mxu0 %v580
    %672 = vmatpush.msra.mxu0 %v577
    %673 = vmatpush.msra.mxu0 %v575
    %674 = vmatmul.f32.gmra.mxu0 %v654
    %v675 = vpop.f32.mrf.mxu0
    %v676 = vadd.f32 0.0, %v675
    %677 = vmatmul.f32.gmra.mxu0 %v656
    %v678 = vpop.f32.mrf.mxu0
    %v679 = vadd.f32 0.0, %v678
    %680 = vdwg.mxu0
    %v681 = vadd.f32 %v649, %v676
    %v682 = vadd.f32 %v652, %v679
    %v684 = vperm.slane %v141, 0
    %v686 = vadd.f32 %v681, %v684
    %v687 = vadd.f32 %v682, %v684
    %vm688 = vcmp.ge.f32.partialorder %v686, 0.0
    %vm689 = vcmp.ge.f32.partialorder %v687, 0.0
    %v690 = vmul.f32 %v686, 0.25
    %v691 = vmul.f32 %v687, 0.25
    %v692 = vsel %vm688, %v686, %v690
    %v693 = vsel %vm689, %v687, %v691
    %v694 = vpack.c.bf16 %v693, %v692
    %v711 = vunpack.c.l.b16 %v142
    %v712 = vunpack.c.h.b16 %v142
    %v713 = vunpack.c.l.b16 %v143
    %v714 = vunpack.c.l.b16 %v144
    %v715 = vunpack.c.h.b16 %v144
    %v716 = vunpack.c.l.b16 %v145
    %v717 = vunpack.c.l.b16 %v146
    %v718 = vunpack.c.h.b16 %v146
    %v719 = vunpack.c.l.b16 %v147
    %v720 = vunpack.c.l.b16 %v148
    %v721 = vunpack.c.h.b16 %v148
    %v722 = vunpack.c.l.b16 %v149
    %v723 = vunpack.c.l.b16 %v150
    %v724 = vunpack.c.h.b16 %v150
    %v725 = vunpack.c.l.b16 %v151
    %v726 = vunpack.c.l.b16 %v152
    %v727 = vunpack.c.h.b16 %v152
    %v728 = vunpack.c.l.b16 %v153
    %v729 = vunpack.c.l.b16 %v154
    %v730 = vunpack.c.h.b16 %v154
    %v731 = vunpack.c.l.b16 %v155
    %v732 = vunpack.c.l.b16 %v156
    %v733 = vunpack.c.h.b16 %v156
    %v734 = vunpack.c.l.b16 %v157
    %v735 = vpack.c.b16 %v714, %v711
    %v736 = vpack.c.b16 %v715, %v712
    %v737 = vpack.c.b16 %v716, %v713
    %v738 = vpack.c.b16 %v720, %v717
    %v739 = vpack.c.b16 %v721, %v718
    %v740 = vpack.c.b16 %v722, %v719
    %v741 = vpack.c.b16 %v726, %v723
    %v742 = vpack.c.b16 %v727, %v724
    %v743 = vpack.c.b16 %v728, %v725
    %v744 = vpack.c.b16 %v732, %v729
    %v745 = vpack.c.b16 %v733, %v730
    %v746 = vpack.c.b16 %v734, %v731
    %v760 = vsel %vm330, %v694, 0
    %762 = vmatpush.bf16.msra.mxu0 0
    %763 = vmatpush.bf16.msra.mxu0 0
    %764 = vmatpush.bf16.msra.mxu0 0
    %765 = vmatpush.bf16.msra.mxu0 0
    %766 = vmatpush.bf16.msra.mxu0 %v744
    %767 = vmatpush.bf16.msra.mxu0 %v741
    %768 = vmatpush.bf16.msra.mxu0 %v738
    %769 = vmatpush.bf16.msra.mxu0 %v735
    %770 = vmatmul.bf16.gmra.mxu0 %v760
    %v771 = vpop.f32.mrf.mxu0
    %v772 = vadd.f32 0.0, %v771
    %v773 = vpop.f32.mrf.mxu0
    %v774 = vadd.f32 0.0, %v773
    %775 = vdwg.mxu0
    %776 = vmatpush.bf16.msra.mxu0 0
    %777 = vmatpush.bf16.msra.mxu0 0
    %778 = vmatpush.bf16.msra.mxu0 0
    %779 = vmatpush.bf16.msra.mxu0 0
    %780 = vmatpush.bf16.msra.mxu0 %v745
    %781 = vmatpush.bf16.msra.mxu0 %v742
    %782 = vmatpush.bf16.msra.mxu0 %v739
    %783 = vmatpush.bf16.msra.mxu0 %v736
    %784 = vmatmul.bf16.gmra.mxu0 %v760
    %v785 = vpop.f32.mrf.mxu0
    %v786 = vadd.f32 0.0, %v785
    %v787 = vpop.f32.mrf.mxu0
    %v788 = vadd.f32 0.0, %v787
    %789 = vdwg.mxu0
    %790 = vmatpush.bf16.msra.mxu0 0
    %791 = vmatpush.bf16.msra.mxu0 0
    %792 = vmatpush.bf16.msra.mxu0 0
    %793 = vmatpush.bf16.msra.mxu0 0
    %794 = vmatpush.bf16.msra.mxu0 %v746
    %795 = vmatpush.bf16.msra.mxu0 %v743
    %796 = vmatpush.bf16.msra.mxu0 %v740
    %797 = vmatpush.bf16.msra.mxu0 %v737
    %798 = vmatmul.bf16.gmra.mxu0 %v760
    %v799 = vpop.f32.mrf.mxu0
    %v800 = vadd.f32 0.0, %v799
    %v801 = vpop.f32.mrf.mxu0
    %v802 = vadd.f32 0.0, %v801
    %803 = vdwg.mxu0
    %vm804 = vcmask 130048
    %v805 = vsel %vm804, %v294, 0
    %807 = vmatpush.msra.mxu0 0.0
    %808 = vmatpush.msra.mxu0 0.0
    %809 = vmatpush.msra.mxu0 0.0
    %810 = vmatpush.msra.mxu0 0.0
    %811 = vmatpush.msra.mxu0 0.0
    %812 = vmatpush.msra.mxu0 0.0
    %813 = vmatpush.msra.mxu0 0.0
    %814 = vmatpush.msra.mxu0 0.0
    %815 = vmatpush.msra.mxu0 0.0
    %816 = vmatpush.msra.mxu0 0.0
    %817 = vmatpush.msra.mxu0 0.0
    %818 = vmatpush.msra.mxu0 0.0
    %819 = vmatpush.msra.mxu0 0.0
    %820 = vmatpush.msra.mxu0 0.0
    %821 = vmatpush.msra.mxu0 %v788
    %822 = vmatpush.msra.mxu0 %v786
    %823 = vmatmul.f32.gmra.mxu0 %v805
    %v824 = vpop.f32.mrf.mxu0
    %v825 = vadd.f32 0.0, %v824
    %826 = vdwg.mxu0
    %v827 = vsel %vm804, %v282, 0
    %829 = vmatpush.msra.mxu0 0.0
    %830 = vmatpush.msra.mxu0 0.0
    %831 = vmatpush.msra.mxu0 0.0
    %832 = vmatpush.msra.mxu0 0.0
    %833 = vmatpush.msra.mxu0 0.0
    %834 = vmatpush.msra.mxu0 0.0
    %835 = vmatpush.msra.mxu0 0.0
    %836 = vmatpush.msra.mxu0 0.0
    %837 = vmatpush.msra.mxu0 0.0
    %838 = vmatpush.msra.mxu0 0.0
    %839 = vmatpush.msra.mxu0 0.0
    %840 = vmatpush.msra.mxu0 0.0
    %841 = vmatpush.msra.mxu0 0.0
    %842 = vmatpush.msra.mxu0 0.0
    %843 = vmatpush.msra.mxu0 %v774
    %844 = vmatpush.msra.mxu0 %v772
    %845 = vmatmul.f32.gmra.mxu0 %v827
    %v846 = vpop.f32.mrf.mxu0
    %v847 = vadd.f32 %v825, %v846
    %848 = vdwg.mxu0
    %v849 = vsel %vm804, %v425, 0
    %851 = vmatpush.msra.mxu0 0.0
    %852 = vmatpush.msra.mxu0 0.0
    %853 = vmatpush.msra.mxu0 0.0
    %854 = vmatpush.msra.mxu0 0.0
    %855 = vmatpush.msra.mxu0 0.0
    %856 = vmatpush.msra.mxu0 0.0
    %857 = vmatpush.msra.mxu0 0.0
    %858 = vmatpush.msra.mxu0 0.0
    %859 = vmatpush.msra.mxu0 0.0
    %860 = vmatpush.msra.mxu0 0.0
    %861 = vmatpush.msra.mxu0 0.0
    %862 = vmatpush.msra.mxu0 0.0
    %863 = vmatpush.msra.mxu0 0.0
    %864 = vmatpush.msra.mxu0 0.0
    %865 = vmatpush.msra.mxu0 %v802
    %866 = vmatpush.msra.mxu0 %v800
    %867 = vmatmul.f32.gmra.mxu0 %v849
    %v868 = vpop.f32.mrf.mxu0
    %v869 = vadd.f32 0.0, %v868
    %870 = vdwg.mxu0
    %v871 = vadd.f32 %v847, %v869
    %v873 = vperm.slane %v158, 0
    %v875 = vadd.f32 %v871, %v873
    %vm876 = vcmp.ge.f32.partialorder %v875, 0.0
    %v877 = vmul.f32 %v875, 0.25
    %v878 = vsel %vm876, %v875, %v877
    %v879 = vpack.c.bf16 %v878, %v878
    %v896 = vunpack.c.l.b16 %v159
    %v897 = vunpack.c.h.b16 %v159
    %v898 = vunpack.c.l.b16 %v160
    %v899 = vunpack.c.h.b16 %v160
    %v900 = vunpack.c.l.b16 %v161
    %v901 = vunpack.c.h.b16 %v161
    %v902 = vunpack.c.l.b16 %v162
    %v903 = vunpack.c.h.b16 %v162
    %v904 = vunpack.c.l.b16 %v163
    %v905 = vunpack.c.h.b16 %v163
    %v906 = vunpack.c.l.b16 %v164
    %v907 = vunpack.c.h.b16 %v164
    %v908 = vunpack.c.l.b16 %v165
    %v909 = vunpack.c.h.b16 %v165
    %v910 = vunpack.c.l.b16 %v166
    %v911 = vunpack.c.h.b16 %v166
    %v912 = vunpack.c.l.b16 %v167
    %v913 = vunpack.c.h.b16 %v167
    %v914 = vunpack.c.l.b16 %v168
    %v915 = vunpack.c.h.b16 %v168
    %v916 = vunpack.c.l.b16 %v169
    %v917 = vunpack.c.h.b16 %v169
    %v918 = vunpack.c.l.b16 %v170
    %v919 = vunpack.c.h.b16 %v170
    %v920 = vunpack.c.l.b16 %v171
    %v921 = vunpack.c.h.b16 %v171
    %v922 = vunpack.c.l.b16 %v172
    %v923 = vunpack.c.h.b16 %v172
    %v924 = vunpack.c.l.b16 %v173
    %v925 = vunpack.c.h.b16 %v173
    %v926 = vunpack.c.l.b16 %v174
    %v927 = vunpack.c.h.b16 %v174
    %v928 = vpack.c.b16 %v898, %v896
    %v929 = vpack.c.b16 %v899, %v897
    %v930 = vpack.c.b16 %v902, %v900
    %v931 = vpack.c.b16 %v903, %v901
    %v932 = vpack.c.b16 %v906, %v904
    %v933 = vpack.c.b16 %v907, %v905
    %v934 = vpack.c.b16 %v910, %v908
    %v935 = vpack.c.b16 %v911, %v909
    %v936 = vpack.c.b16 %v914, %v912
    %v937 = vpack.c.b16 %v915, %v913
    %v938 = vpack.c.b16 %v918, %v916
    %v939 = vpack.c.b16 %v919, %v917
    %v940 = vpack.c.b16 %v922, %v920
    %v941 = vpack.c.b16 %v923, %v921
    %v942 = vpack.c.b16 %v926, %v924
    %v943 = vpack.c.b16 %v927, %v925
    %960 = vmatpush.bf16.msra.mxu0 %v942
    %961 = vmatpush.bf16.msra.mxu0 %v940
    %962 = vmatpush.bf16.msra.mxu0 %v938
    %963 = vmatpush.bf16.msra.mxu0 %v936
    %964 = vmatpush.bf16.msra.mxu0 %v934
    %965 = vmatpush.bf16.msra.mxu0 %v932
    %966 = vmatpush.bf16.msra.mxu0 %v930
    %967 = vmatpush.bf16.msra.mxu0 %v928
    %968 = vmatmul.bf16.gmra.mxu0 %v879
    %v969 = vpop.f32.mrf.mxu0
    %v970 = vadd.f32 0.0, %v969
    %v971 = vpop.f32.mrf.mxu0
    %972 = vdwg.mxu0
    %973 = vmatpush.bf16.msra.mxu0 %v943
    %974 = vmatpush.bf16.msra.mxu0 %v941
    %975 = vmatpush.bf16.msra.mxu0 %v939
    %976 = vmatpush.bf16.msra.mxu0 %v937
    %977 = vmatpush.bf16.msra.mxu0 %v935
    %978 = vmatpush.bf16.msra.mxu0 %v933
    %979 = vmatpush.bf16.msra.mxu0 %v931
    %980 = vmatpush.bf16.msra.mxu0 %v929
    %981 = vmatmul.bf16.gmra.mxu0 %v879
    %v982 = vpop.f32.mrf.mxu0
    %v983 = vadd.f32 0.0, %v982
    %v984 = vpop.f32.mrf.mxu0
    %985 = vdwg.mxu0
    %v986 = vmul.u32 %v265, 2
    %v987 = vadd.s32 %v260, 1
    %v988 = vadd.s32 %v261, 1
    %vm989 = vcmp.eq.s32.totalorder %v986, %v987
    %vm990 = vcmp.eq.s32.totalorder %v986, %v988
    %v991 = vsel %vm989, 1, 0
    %v992 = vsel %vm990, 1, 0
    %v993 = vcvt.s32.f32 %v991
    %v994 = vcvt.s32.f32 %v992
    %vm995 = vcmp.eq.s32.totalorder %v986, %v260
    %vm996 = vcmp.eq.s32.totalorder %v986, %v261
    %v997 = vsel %vm995, 1, 0
    %v998 = vsel %vm996, 1, 0
    %v999 = vcvt.s32.f32 %v997
    %v1000 = vcvt.s32.f32 %v998
    %1002 = vrot.lane.b32.xlu0 %v970, 64
    %v1003 = vpop.permute.xlu0 %1002
    %vm1005 = vcmask 64512
    %v1007 = vsel %vm1005, %v999, 0
    %v1010 = vsel %vm1005, %v1000, 0
    %1012 = vmatpush.msra.mxu0 0.0
    %1013 = vmatpush.msra.mxu0 0.0
    %1014 = vmatpush.msra.mxu0 0.0
    %1015 = vmatpush.msra.mxu0 0.0
    %1016 = vmatpush.msra.mxu0 0.0
    %1017 = vmatpush.msra.mxu0 0.0
    %1018 = vmatpush.msra.mxu0 0.0
    %1019 = vmatpush.msra.mxu0 0.0
    %1020 = vmatpush.msra.mxu0 0.0
    %1021 = vmatpush.msra.mxu0 0.0
    %1022 = vmatpush.msra.mxu0 0.0
    %1023 = vmatpush.msra.mxu0 0.0
    %1024 = vmatpush.msra.mxu0 0.0
    %1025 = vmatpush.msra.mxu0 0.0
    %1026 = vmatpush.msra.mxu0 0.0
    %1027 = vmatpush.msra.mxu0 %v1003
    %1028 = vmatmul.f32.gmra.mxu0 %v1007
    %v1029 = vpop.f32.mrf.mxu0
    %v1030 = vadd.f32 0.0, %v1029
    %1031 = vmatmul.f32.gmra.mxu0 %v1010
    %v1032 = vpop.f32.mrf.mxu0
    %v1033 = vadd.f32 0.0, %v1032
    %1034 = vdwg.mxu0
    %v1036 = vsel %vm1005, %v993, 0
    %v1039 = vsel %vm1005, %v994, 0
    %1041 = vmatpush.msra.mxu0 0.0
    %1042 = vmatpush.msra.mxu0 0.0
    %1043 = vmatpush.msra.mxu0 0.0
    %1044 = vmatpush.msra.mxu0 0.0
    %1045 = vmatpush.msra.mxu0 0.0
    %1046 = vmatpush.msra.mxu0 0.0
    %1047 = vmatpush.msra.mxu0 0.0
    %1048 = vmatpush.msra.mxu0 0.0
    %1049 = vmatpush.msra.mxu0 0.0
    %1050 = vmatpush.msra.mxu0 0.0
    %1051 = vmatpush.msra.mxu0 0.0
    %1052 = vmatpush.msra.mxu0 0.0
    %1053 = vmatpush.msra.mxu0 0.0
    %1054 = vmatpush.msra.mxu0 0.0
    %1055 = vmatpush.msra.mxu0 0.0
    %1056 = vmatpush.msra.mxu0 %v970
    %1057 = vmatmul.f32.gmra.mxu0 %v1036
    %v1058 = vpop.f32.mrf.mxu0
    %v1059 = vadd.f32 %v1030, %v1058
    %1060 = vmatmul.f32.gmra.mxu0 %v1039
    %v1061 = vpop.f32.mrf.mxu0
    %v1062 = vadd.f32 %v1033, %v1061
    %1063 = vdwg.mxu0
    %v1064 = vadd.s32 %v260, 4294967295
    %v1065 = vadd.s32 %v261, 4294967295
    %vm1066 = vcmp.eq.s32.totalorder %v986, %v1064
    %vm1067 = vcmp.eq.s32.totalorder %v986, %v1065
    %v1068 = vsel %vm1066, 1, 0
    %v1069 = vsel %vm1067, 1, 0
    %v1070 = vcvt.s32.f32 %v1068
    %v1071 = vcvt.s32.f32 %v1069
    %v1073 = vsel %vm1005, %v1070, 0
    %v1076 = vsel %vm1005, %v1071, 0
    %1078 = vmatpush.msra.mxu0 0.0
    %1079 = vmatpush.msra.mxu0 0.0
    %1080 = vmatpush.msra.mxu0 0.0
    %1081 = vmatpush.msra.mxu0 0.0
    %1082 = vmatpush.msra.mxu0 0.0
    %1083 = vmatpush.msra.mxu0 0.0
    %1084 = vmatpush.msra.mxu0 0.0
    %1085 = vmatpush.msra.mxu0 0.0
    %1086 = vmatpush.msra.mxu0 0.0
    %1087 = vmatpush.msra.mxu0 0.0
    %1088 = vmatpush.msra.mxu0 0.0
    %1089 = vmatpush.msra.mxu0 0.0
    %1090 = vmatpush.msra.mxu0 0.0
    %1091 = vmatpush.msra.mxu0 0.0
    %1092 = vmatpush.msra.mxu0 0.0
    %1093 = vmatpush.msra.mxu0 %v983
    %1094 = vmatmul.f32.gmra.mxu0 %v1073
    %v1095 = vpop.f32.mrf.mxu0
    %v1096 = vadd.f32 0.0, %v1095
    %1097 = vmatmul.f32.gmra.mxu0 %v1076
    %v1098 = vpop.f32.mrf.mxu0
    %v1099 = vadd.f32 0.0, %v1098
    %1100 = vdwg.mxu0
    %v1101 = vadd.f32 %v1059, %v1096
    %v1102 = vadd.f32 %v1062, %v1099
    %v1103 = vadd.s32 %v260, 4294967294
    %v1104 = vadd.s32 %v261, 4294967294
    %vm1105 = vcmp.eq.s32.totalorder %v986, %v1103
    %vm1106 = vcmp.eq.s32.totalorder %v986, %v1104
    %v1107 = vsel %vm1105, 1, 0
    %v1108 = vsel %vm1106, 1, 0
    %v1109 = vcvt.s32.f32 %v1107
    %v1110 = vcvt.s32.f32 %v1108
    %1112 = vrot.lane.b32.xlu0 %v983, 64
    %v1113 = vpop.permute.xlu0 %1112
    %v1116 = vsel %vm1005, %v1109, 0
    %v1119 = vsel %vm1005, %v1110, 0
    %1121 = vmatpush.msra.mxu0 0.0
    %1122 = vmatpush.msra.mxu0 0.0
    %1123 = vmatpush.msra.mxu0 0.0
    %1124 = vmatpush.msra.mxu0 0.0
    %1125 = vmatpush.msra.mxu0 0.0
    %1126 = vmatpush.msra.mxu0 0.0
    %1127 = vmatpush.msra.mxu0 0.0
    %1128 = vmatpush.msra.mxu0 0.0
    %1129 = vmatpush.msra.mxu0 0.0
    %1130 = vmatpush.msra.mxu0 0.0
    %1131 = vmatpush.msra.mxu0 0.0
    %1132 = vmatpush.msra.mxu0 0.0
    %1133 = vmatpush.msra.mxu0 0.0
    %1134 = vmatpush.msra.mxu0 0.0
    %1135 = vmatpush.msra.mxu0 0.0
    %1136 = vmatpush.msra.mxu0 %v1113
    %1137 = vmatmul.f32.gmra.mxu0 %v1116
    %v1138 = vpop.f32.mrf.mxu0
    %v1139 = vadd.f32 0.0, %v1138
    %1140 = vmatmul.f32.gmra.mxu0 %v1119
    %v1141 = vpop.f32.mrf.mxu0
    %v1142 = vadd.f32 0.0, %v1141
    %1143 = vdwg.mxu0
    %v1144 = vadd.f32 %v1101, %v1139
    %v1145 = vadd.f32 %v1102, %v1142
    %v1147 = vperm.slane %v175, 0
    %v1149 = vadd.f32 %v1144, %v1147
    %v1150 = vadd.f32 %v1145, %v1147
    %vm1151 = vcmp.ge.f32.partialorder %v1149, 0.0
    %vm1152 = vcmp.ge.f32.partialorder %v1150, 0.0
    %v1153 = vmul.f32 %v1149, 0.25
    %v1154 = vmul.f32 %v1150, 0.25
    %v1155 = vsel %vm1151, %v1149, %v1153
    %v1156 = vsel %vm1152, %v1150, %v1154
    %1159 = vrot.lane.b32.xlu0 %v692, 64
    %v1160 = vpop.permute.xlu0 %1159
    %1161 = vrot.lane.b32.xlu0 %v693, 64
    %v1162 = vpop.permute.xlu0 %1161
    %v1165 = vsel %vm330, %v1155, %v1160
    %v1166 = vsel %vm330, %v1156, %v1162
    %v1167 = vpack.c.bf16 %v1166, %v1165
    %v1184 = vunpack.c.l.b16 %v176
    %v1185 = vunpack.c.l.b16 %v177
    %v1186 = vunpack.c.l.b16 %v178
    %v1187 = vunpack.c.l.b16 %v179
    %v1188 = vunpack.c.l.b16 %v180
    %v1189 = vunpack.c.l.b16 %v181
    %v1190 = vunpack.c.l.b16 %v182
    %v1191 = vunpack.c.l.b16 %v183
    %v1192 = vunpack.c.l.b16 %v184
    %v1193 = vunpack.c.l.b16 %v185
    %v1194 = vunpack.c.l.b16 %v186
    %v1195 = vunpack.c.l.b16 %v187
    %v1196 = vunpack.c.l.b16 %v188
    %v1197 = vunpack.c.l.b16 %v189
    %v1198 = vunpack.c.l.b16 %v190
    %v1199 = vunpack.c.l.b16 %v191
    %v1200 = vpack.c.b16 %v1185, %v1184
    %v1201 = vpack.c.b16 %v1187, %v1186
    %v1202 = vpack.c.b16 %v1189, %v1188
    %v1203 = vpack.c.b16 %v1191, %v1190
    %v1204 = vpack.c.b16 %v1193, %v1192
    %v1205 = vpack.c.b16 %v1195, %v1194
    %v1206 = vpack.c.b16 %v1197, %v1196
    %v1207 = vpack.c.b16 %v1199, %v1198
    %1216 = vmatpush.bf16.msra.mxu0 %v1207
    %1217 = vmatpush.bf16.msra.mxu0 %v1206
    %1218 = vmatpush.bf16.msra.mxu0 %v1205
    %1219 = vmatpush.bf16.msra.mxu0 %v1204
    %1220 = vmatpush.bf16.msra.mxu0 %v1203
    %1221 = vmatpush.bf16.msra.mxu0 %v1202
    %1222 = vmatpush.bf16.msra.mxu0 %v1201
    %1223 = vmatpush.bf16.msra.mxu0 %v1200
    %1224 = vmatmul.bf16.gmra.mxu0 %v1167
    %v1225 = vpop.f32.mrf.mxu0
    %v1226 = vadd.f32 0.0, %v1225
    %v1227 = vpop.f32.mrf.mxu0
    %v1228 = vadd.f32 0.0, %v1227
    %1229 = vdwg.mxu0
    %v1230 = vadd.s32 %v262, 1
    %v1231 = vadd.s32 %v263, 1
    %vm1232 = vcmp.eq.s32.totalorder %v986, %v1230
    %vm1233 = vcmp.eq.s32.totalorder %v986, %v1231
    %v1234 = vsel %vm1232, 1, 0
    %v1235 = vsel %vm1233, 1, 0
    %v1236 = vcvt.s32.f32 %v1234
    %v1237 = vcvt.s32.f32 %v1235
    %vm1238 = vcmp.eq.s32.totalorder %v986, %v262
    %vm1239 = vcmp.eq.s32.totalorder %v986, %v263
    %v1240 = vsel %vm1238, 1, 0
    %v1241 = vsel %vm1239, 1, 0
    %v1242 = vcvt.s32.f32 %v1240
    %v1243 = vcvt.s32.f32 %v1241
    %1246 = vrot.lane.b32.xlu0 %v1226, 96
    %v1247 = vpop.permute.xlu0 %1246
    %1248 = vrot.lane.b32.xlu0 %v1228, 96
    %v1249 = vpop.permute.xlu0 %1248
    %v1252 = vsel %vm804, %v999, 0
    %v1254 = vsel %vm804, %v1000, 0
    %v1257 = vsel %vm804, %v1242, 0
    %v1260 = vsel %vm804, %v1243, 0
    %1262 = vmatpush.msra.mxu0 0.0
    %1263 = vmatpush.msra.mxu0 0.0
    %1264 = vmatpush.msra.mxu0 0.0
    %1265 = vmatpush.msra.mxu0 0.0
    %1266 = vmatpush.msra.mxu0 0.0
    %1267 = vmatpush.msra.mxu0 0.0
    %1268 = vmatpush.msra.mxu0 0.0
    %1269 = vmatpush.msra.mxu0 0.0
    %1270 = vmatpush.msra.mxu0 0.0
    %1271 = vmatpush.msra.mxu0 0.0
    %1272 = vmatpush.msra.mxu0 0.0
    %1273 = vmatpush.msra.mxu0 0.0
    %1274 = vmatpush.msra.mxu0 0.0
    %1275 = vmatpush.msra.mxu0 0.0
    %1276 = vmatpush.msra.mxu0 %v1249
    %1277 = vmatpush.msra.mxu0 %v1247
    %1278 = vmatmul.f32.gmra.mxu0 %v1252
    %v1279 = vpop.f32.mrf.mxu0
    %v1280 = vadd.f32 0.0, %v1279
    %1281 = vmatmul.f32.gmra.mxu0 %v1254
    %v1282 = vpop.f32.mrf.mxu0
    %v1283 = vadd.f32 0.0, %v1282
    %1284 = vmatmul.f32.gmra.mxu0 %v1257
    %v1285 = vpop.f32.mrf.mxu0
    %v1286 = vadd.f32 0.0, %v1285
    %1287 = vmatmul.f32.gmra.mxu0 %v1260
    %v1288 = vpop.f32.mrf.mxu0
    %v1289 = vadd.f32 0.0, %v1288
    %1290 = vdwg.mxu0
    %v1291 = vsel %vm804, %v993, 0
    %v1293 = vsel %vm804, %v994, 0
    %v1296 = vsel %vm804, %v1236, 0
    %v1299 = vsel %vm804, %v1237, 0
    %1301 = vmatpush.msra.mxu0 0.0
    %1302 = vmatpush.msra.mxu0 0.0
    %1303 = vmatpush.msra.mxu0 0.0
    %1304 = vmatpush.msra.mxu0 0.0
    %1305 = vmatpush.msra.mxu0 0.0
    %1306 = vmatpush.msra.mxu0 0.0
    %1307 = vmatpush.msra.mxu0 0.0
    %1308 = vmatpush.msra.mxu0 0.0
    %1309 = vmatpush.msra.mxu0 0.0
    %1310 = vmatpush.msra.mxu0 0.0
    %1311 = vmatpush.msra.mxu0 0.0
    %1312 = vmatpush.msra.mxu0 0.0
    %1313 = vmatpush.msra.mxu0 0.0
    %1314 = vmatpush.msra.mxu0 0.0
    %1315 = vmatpush.msra.mxu0 %v1228
    %1316 = vmatpush.msra.mxu0 %v1226
    %1317 = vmatmul.f32.gmra.mxu0 %v1291
    %v1318 = vpop.f32.mrf.mxu0
    %v1319 = vadd.f32 %v1280, %v1318
    %1320 = vmatmul.f32.gmra.mxu0 %v1293
    %v1321 = vpop.f32.mrf.mxu0
    %v1322 = vadd.f32 %v1283, %v1321
    %1323 = vmatmul.f32.gmra.mxu0 %v1296
    %v1324 = vpop.f32.mrf.mxu0
    %v1325 = vadd.f32 %v1286, %v1324
    %1326 = vmatmul.f32.gmra.mxu0 %v1299
    %v1327 = vpop.f32.mrf.mxu0
    %v1328 = vadd.f32 %v1289, %v1327
    %1329 = vdwg.mxu0
    %v1330 = vadd.s32 %v262, 4294967295
    %v1331 = vadd.s32 %v263, 4294967295
    %vm1332 = vcmp.eq.s32.totalorder %v986, %v1330
    %vm1333 = vcmp.eq.s32.totalorder %v986, %v1331
    %v1334 = vsel %vm1332, 1, 0
    %v1335 = vsel %vm1333, 1, 0
    %v1336 = vcvt.s32.f32 %v1334
    %v1337 = vcvt.s32.f32 %v1335
    %1338 = vrot.lane.b32.xlu0 %v1226, 64
    %v1339 = vpop.permute.xlu0 %1338
    %1340 = vrot.lane.b32.xlu0 %v1228, 64
    %v1341 = vpop.permute.xlu0 %1340
    %v1344 = vsel %vm804, %v1070, 0
    %v1346 = vsel %vm804, %v1071, 0
    %v1349 = vsel %vm804, %v1336, 0
    %v1352 = vsel %vm804, %v1337, 0
    %1354 = vmatpush.msra.mxu0 0.0
    %1355 = vmatpush.msra.mxu0 0.0
    %1356 = vmatpush.msra.mxu0 0.0
    %1357 = vmatpush.msra.mxu0 0.0
    %1358 = vmatpush.msra.mxu0 0.0
    %1359 = vmatpush.msra.mxu0 0.0
    %1360 = vmatpush.msra.mxu0 0.0
    %1361 = vmatpush.msra.mxu0 0.0
    %1362 = vmatpush.msra.mxu0 0.0
    %1363 = vmatpush.msra.mxu0 0.0
    %1364 = vmatpush.msra.mxu0 0.0
    %1365 = vmatpush.msra.mxu0 0.0
    %1366 = vmatpush.msra.mxu0 0.0
    %1367 = vmatpush.msra.mxu0 0.0
    %1368 = vmatpush.msra.mxu0 %v1341
    %1369 = vmatpush.msra.mxu0 %v1339
    %1370 = vmatmul.f32.gmra.mxu0 %v1344
    %v1371 = vpop.f32.mrf.mxu0
    %v1372 = vadd.f32 0.0, %v1371
    %1373 = vmatmul.f32.gmra.mxu0 %v1346
    %v1374 = vpop.f32.mrf.mxu0
    %v1375 = vadd.f32 0.0, %v1374
    %1376 = vmatmul.f32.gmra.mxu0 %v1349
    %v1377 = vpop.f32.mrf.mxu0
    %v1378 = vadd.f32 0.0, %v1377
    %1379 = vmatmul.f32.gmra.mxu0 %v1352
    %v1380 = vpop.f32.mrf.mxu0
    %v1381 = vadd.f32 0.0, %v1380
    %1382 = vdwg.mxu0
    %v1383 = vadd.f32 %v1319, %v1372
    %v1384 = vadd.f32 %v1322, %v1375
    %v1385 = vadd.f32 %v1325, %v1378
    %v1386 = vadd.f32 %v1328, %v1381
    %v1387 = vadd.s32 %v262, 4294967294
    %v1388 = vadd.s32 %v263, 4294967294
    %vm1389 = vcmp.eq.s32.totalorder %v986, %v1387
    %vm1390 = vcmp.eq.s32.totalorder %v986, %v1388
    %v1391 = vsel %vm1389, 1, 0
    %v1392 = vsel %vm1390, 1, 0
    %v1393 = vcvt.s32.f32 %v1391
    %v1394 = vcvt.s32.f32 %v1392
    %1395 = vrot.lane.b32.xlu0 %v1226, 32
    %v1396 = vpop.permute.xlu0 %1395
    %1397 = vrot.lane.b32.xlu0 %v1228, 32
    %v1398 = vpop.permute.xlu0 %1397
    %v1401 = vsel %vm804, %v1109, 0
    %v1403 = vsel %vm804, %v1110, 0
    %v1406 = vsel %vm804, %v1393, 0
    %v1409 = vsel %vm804, %v1394, 0
    %1411 = vmatpush.msra.mxu0 0.0
    %1412 = vmatpush.msra.mxu0 0.0
    %1413 = vmatpush.msra.mxu0 0.0
    %1414 = vmatpush.msra.mxu0 0.0
    %1415 = vmatpush.msra.mxu0 0.0
    %1416 = vmatpush.msra.mxu0 0.0
    %1417 = vmatpush.msra.mxu0 0.0
    %1418 = vmatpush.msra.mxu0 0.0
    %1419 = vmatpush.msra.mxu0 0.0
    %1420 = vmatpush.msra.mxu0 0.0
    %1421 = vmatpush.msra.mxu0 0.0
    %1422 = vmatpush.msra.mxu0 0.0
    %1423 = vmatpush.msra.mxu0 0.0
    %1424 = vmatpush.msra.mxu0 0.0
    %1425 = vmatpush.msra.mxu0 %v1398
    %1426 = vmatpush.msra.mxu0 %v1396
    %1427 = vmatmul.f32.gmra.mxu0 %v1401
    %v1428 = vpop.f32.mrf.mxu0
    %v1429 = vadd.f32 0.0, %v1428
    %1430 = vmatmul.f32.gmra.mxu0 %v1403
    %v1431 = vpop.f32.mrf.mxu0
    %v1432 = vadd.f32 0.0, %v1431
    %1433 = vmatmul.f32.gmra.mxu0 %v1406
    %v1434 = vpop.f32.mrf.mxu0
    %v1435 = vadd.f32 0.0, %v1434
    %1436 = vmatmul.f32.gmra.mxu0 %v1409
    %v1437 = vpop.f32.mrf.mxu0
    %v1438 = vadd.f32 0.0, %v1437
    %1439 = vdwg.mxu0
    %v1440 = vadd.f32 %v1383, %v1429
    %v1441 = vadd.f32 %v1384, %v1432
    %v1442 = vadd.f32 %v1385, %v1435
    %v1443 = vadd.f32 %v1386, %v1438
    %v1445 = vperm.slane %v192, 0
    %v1447 = vadd.f32 %v1440, %v1445
    %v1448 = vadd.f32 %v1441, %v1445
    %v1449 = vadd.f32 %v1442, %v1445
    %v1450 = vadd.f32 %v1443, %v1445
    %vm1451 = vcmp.ge.f32.partialorder %v1447, 0.0
    %vm1452 = vcmp.ge.f32.partialorder %v1448, 0.0
    %vm1453 = vcmp.ge.f32.partialorder %v1449, 0.0
    %vm1454 = vcmp.ge.f32.partialorder %v1450, 0.0
    %v1455 = vmul.f32 %v1447, 0.25
    %v1456 = vmul.f32 %v1448, 0.25
    %v1457 = vmul.f32 %v1449, 0.25
    %v1458 = vmul.f32 %v1450, 0.25
    %v1459 = vsel %vm1451, %v1447, %v1455
    %v1460 = vsel %vm1452, %v1448, %v1456
    %v1461 = vsel %vm1453, %v1449, %v1457
    %v1462 = vsel %vm1454, %v1450, %v1458
    %1467 = vrot.lane.b32.xlu0 %v513, 32
    %v1468 = vpop.permute.xlu0 %1467
    %1469 = vrot.lane.b32.xlu0 %v514, 32
    %v1470 = vpop.permute.xlu0 %1469
    %1471 = vrot.lane.b32.xlu0 %v515, 32
    %v1472 = vpop.permute.xlu0 %1471
    %1473 = vrot.lane.b32.xlu0 %v516, 32
    %v1474 = vpop.permute.xlu0 %1473
    %v1479 = vsel %vm539, %v1459, %v1468
    %v1480 = vsel %vm539, %v1460, %v1470
    %v1481 = vsel %vm539, %v1461, %v1472
    %v1482 = vsel %vm539, %v1462, %v1474
    %v1483 = vpack.c.bf16 %v1480, %v1479
    %v1484 = vpack.c.bf16 %v1482, %v1481
    %v1493 = vunpack.c.l.b16 %v193
    %v1494 = vunpack.c.l.b16 %v194
    %v1495 = vunpack.c.l.b16 %v195
    %v1496 = vunpack.c.l.b16 %v196
    %v1497 = vunpack.c.l.b16 %v197
    %v1498 = vunpack.c.l.b16 %v198
    %v1499 = vunpack.c.l.b16 %v199
    %v1500 = vunpack.c.l.b16 %v200
    %v1501 = vpack.c.b16 %v1494, %v1493
    %v1502 = vpack.c.b16 %v1496, %v1495
    %v1503 = vpack.c.b16 %v1498, %v1497
    %v1504 = vpack.c.b16 %v1500, %v1499
    %v1510 = vsel %vm330, %v1483, 0
    %v1513 = vsel %vm330, %v1484, 0
    %1515 = vmatpush.bf16.msra.mxu0 0
    %1516 = vmatpush.bf16.msra.mxu0 0
    %1517 = vmatpush.bf16.msra.mxu0 0
    %1518 = vmatpush.bf16.msra.mxu0 0
    %1519 = vmatpush.bf16.msra.mxu0 %v1504
    %1520 = vmatpush.bf16.msra.mxu0 %v1503
    %1521 = vmatpush.bf16.msra.mxu0 %v1502
    %1522 = vmatpush.bf16.msra.mxu0 %v1501
    %1523 = vmatmul.bf16.gmra.mxu0 %v1510
    %v1524 = vpop.f32.mrf.mxu0
    %v1525 = vadd.f32 0.0, %v1524
    %v1526 = vpop.f32.mrf.mxu0
    %v1527 = vadd.f32 0.0, %v1526
    %1528 = vmatmul.bf16.gmra.mxu0 %v1513
    %v1529 = vpop.f32.mrf.mxu0
    %v1530 = vadd.f32 0.0, %v1529
    %v1531 = vpop.f32.mrf.mxu0
    %v1532 = vadd.f32 0.0, %v1531
    %1533 = vdwg.mxu0
    %v1534 = vadd.s32 %v260, 32
    %v1535 = vadd.s32 %v260, 40
    %v1536 = vadd.s32 %v260, 48
    %v1537 = vadd.s32 %v260, 56
    %v1538 = vadd.s32 %v1534, 1
    %v1539 = vadd.s32 %v1535, 1
    %v1540 = vadd.s32 %v1536, 1
    %v1541 = vadd.s32 %v1537, 1
    %vm1542 = vcmp.eq.s32.totalorder %v986, %v1538
    %vm1543 = vcmp.eq.s32.totalorder %v986, %v1539
    %vm1544 = vcmp.eq.s32.totalorder %v986, %v1540
    %vm1545 = vcmp.eq.s32.totalorder %v986, %v1541
    %v1546 = vsel %vm1542, 1, 0
    %v1547 = vsel %vm1543, 1, 0
    %v1548 = vsel %vm1544, 1, 0
    %v1549 = vsel %vm1545, 1, 0
    %v1550 = vcvt.s32.f32 %v1546
    %v1551 = vcvt.s32.f32 %v1547
    %v1552 = vcvt.s32.f32 %v1548
    %v1553 = vcvt.s32.f32 %v1549
    %vm1554 = vcmp.eq.s32.totalorder %v986, %v1534
    %vm1555 = vcmp.eq.s32.totalorder %v986, %v1535
    %vm1556 = vcmp.eq.s32.totalorder %v986, %v1536
    %vm1557 = vcmp.eq.s32.totalorder %v986, %v1537
    %v1558 = vsel %vm1554, 1, 0
    %v1559 = vsel %vm1555, 1, 0
    %v1560 = vsel %vm1556, 1, 0
    %v1561 = vsel %vm1557, 1, 0
    %v1562 = vcvt.s32.f32 %v1558
    %v1563 = vcvt.s32.f32 %v1559
    %v1564 = vcvt.s32.f32 %v1560
    %v1565 = vcvt.s32.f32 %v1561
    %1570 = vrot.lane.b32.xlu0 %v1525, 112
    %v1571 = vpop.permute.xlu0 %1570
    %1572 = vrot.lane.b32.xlu0 %v1527, 112
    %v1573 = vpop.permute.xlu0 %1572
    %1574 = vrot.lane.b32.xlu0 %v1530, 112
    %v1575 = vpop.permute.xlu0 %1574
    %1576 = vrot.lane.b32.xlu0 %v1532, 112
    %v1577 = vpop.permute.xlu0 %1576
    %v1582 = vsel %vm539, %v999, 0
    %v1584 = vsel %vm539, %v1000, 0
    %v1586 = vsel %vm539, %v1242, 0
    %v1588 = vsel %vm539, %v1243, 0
    %v1591 = vsel %vm539, %v1562, 0
    %v1594 = vsel %vm539, %v1563, 0
    %v1597 = vsel %vm539, %v1564, 0
    %v1600 = vsel %vm539, %v1565, 0
    %1602 = vmatpush.msra.mxu0 0.0
    %1603 = vmatpush.msra.mxu0 0.0
    %1604 = vmatpush.msra.mxu0 0.0
    %1605 = vmatpush.msra.mxu0 0.0
    %1606 = vmatpush.msra.mxu0 0.0
    %1607 = vmatpush.msra.mxu0 0.0
    %1608 = vmatpush.msra.mxu0 0.0
    %1609 = vmatpush.msra.mxu0 0.0
    %1610 = vmatpush.msra.mxu0 0.0
    %1611 = vmatpush.msra.mxu0 0.0
    %1612 = vmatpush.msra.mxu0 0.0
    %1613 = vmatpush.msra.mxu0 0.0
    %1614 = vmatpush.msra.mxu0 %v1577
    %1615 = vmatpush.msra.mxu0 %v1575
    %1616 = vmatpush.msra.mxu0 %v1573
    %1617 = vmatpush.msra.mxu0 %v1571
    %1618 = vmatmul.f32.gmra.mxu0 %v1582
    %v1619 = vpop.f32.mrf.mxu0
    %v1620 = vadd.f32 0.0, %v1619
    %1621 = vmatmul.f32.gmra.mxu0 %v1584
    %v1622 = vpop.f32.mrf.mxu0
    %v1623 = vadd.f32 0.0, %v1622
    %1624 = vmatmul.f32.gmra.mxu0 %v1586
    %v1625 = vpop.f32.mrf.mxu0
    %v1626 = vadd.f32 0.0, %v1625
    %1627 = vmatmul.f32.gmra.mxu0 %v1588
    %v1628 = vpop.f32.mrf.mxu0
    %v1629 = vadd.f32 0.0, %v1628
    %1630 = vmatmul.f32.gmra.mxu0 %v1591
    %v1631 = vpop.f32.mrf.mxu0
    %v1632 = vadd.f32 0.0, %v1631
    %1633 = vmatmul.f32.gmra.mxu0 %v1594
    %v1634 = vpop.f32.mrf.mxu0
    %v1635 = vadd.f32 0.0, %v1634
    %1636 = vmatmul.f32.gmra.mxu0 %v1597
    %v1637 = vpop.f32.mrf.mxu0
    %v1638 = vadd.f32 0.0, %v1637
    %1639 = vmatmul.f32.gmra.mxu0 %v1600
    %v1640 = vpop.f32.mrf.mxu0
    %v1641 = vadd.f32 0.0, %v1640
    %1642 = vdwg.mxu0
    %v1643 = vsel %vm539, %v993, 0
    %v1645 = vsel %vm539, %v994, 0
    %v1647 = vsel %vm539, %v1236, 0
    %v1649 = vsel %vm539, %v1237, 0
    %v1652 = vsel %vm539, %v1550, 0
    %v1655 = vsel %vm539, %v1551, 0
    %v1658 = vsel %vm539, %v1552, 0
    %v1661 = vsel %vm539, %v1553, 0
    %1663 = vmatpush.msra.mxu0 0.0
    %1664 = vmatpush.msra.mxu0 0.0
    %1665 = vmatpush.msra.mxu0 0.0
    %1666 = vmatpush.msra.mxu0 0.0
    %1667 = vmatpush.msra.mxu0 0.0
    %1668 = vmatpush.msra.mxu0 0.0
    %1669 = vmatpush.msra.mxu0 0.0
    %1670 = vmatpush.msra.mxu0 0.0
    %1671 = vmatpush.msra.mxu0 0.0
    %1672 = vmatpush.msra.mxu0 0.0
    %1673 = vmatpush.msra.mxu0 0.0
    %1674 = vmatpush.msra.mxu0 0.0
    %1675 = vmatpush.msra.mxu0 %v1532
    %1676 = vmatpush.msra.mxu0 %v1530
    %1677 = vmatpush.msra.mxu0 %v1527
    %1678 = vmatpush.msra.mxu0 %v1525
    %1679 = vmatmul.f32.gmra.mxu0 %v1643
    %v1680 = vpop.f32.mrf.mxu0
    %v1681 = vadd.f32 %v1620, %v1680
    %1682 = vmatmul.f32.gmra.mxu0 %v1645
    %v1683 = vpop.f32.mrf.mxu0
    %v1684 = vadd.f32 %v1623, %v1683
    %1685 = vmatmul.f32.gmra.mxu0 %v1647
    %v1686 = vpop.f32.mrf.mxu0
    %v1687 = vadd.f32 %v1626, %v1686
    %1688 = vmatmul.f32.gmra.mxu0 %v1649
    %v1689 = vpop.f32.mrf.mxu0
    %v1690 = vadd.f32 %v1629, %v1689
    %1691 = vmatmul.f32.gmra.mxu0 %v1652
    %v1692 = vpop.f32.mrf.mxu0
    %v1693 = vadd.f32 %v1632, %v1692
    %1694 = vmatmul.f32.gmra.mxu0 %v1655
    %v1695 = vpop.f32.mrf.mxu0
    %v1696 = vadd.f32 %v1635, %v1695
    %1697 = vmatmul.f32.gmra.mxu0 %v1658
    %v1698 = vpop.f32.mrf.mxu0
    %v1699 = vadd.f32 %v1638, %v1698
    %1700 = vmatmul.f32.gmra.mxu0 %v1661
    %v1701 = vpop.f32.mrf.mxu0
    %v1702 = vadd.f32 %v1641, %v1701
    %1703 = vdwg.mxu0
    %v1704 = vadd.s32 %v1534, 4294967295
    %v1705 = vadd.s32 %v1535, 4294967295
    %v1706 = vadd.s32 %v1536, 4294967295
    %v1707 = vadd.s32 %v1537, 4294967295
    %vm1708 = vcmp.eq.s32.totalorder %v986, %v1704
    %vm1709 = vcmp.eq.s32.totalorder %v986, %v1705
    %vm1710 = vcmp.eq.s32.totalorder %v986, %v1706
    %vm1711 = vcmp.eq.s32.totalorder %v986, %v1707
    %v1712 = vsel %vm1708, 1, 0
    %v1713 = vsel %vm1709, 1, 0
    %v1714 = vsel %vm1710, 1, 0
    %v1715 = vsel %vm1711, 1, 0
    %v1716 = vcvt.s32.f32 %v1712
    %v1717 = vcvt.s32.f32 %v1713
    %v1718 = vcvt.s32.f32 %v1714
    %v1719 = vcvt.s32.f32 %v1715
    %1720 = vrot.lane.b32.xlu0 %v1525, 96
    %v1721 = vpop.permute.xlu0 %1720
    %1722 = vrot.lane.b32.xlu0 %v1527, 96
    %v1723 = vpop.permute.xlu0 %1722
    %1724 = vrot.lane.b32.xlu0 %v1530, 96
    %v1725 = vpop.permute.xlu0 %1724
    %1726 = vrot.lane.b32.xlu0 %v1532, 96
    %v1727 = vpop.permute.xlu0 %1726
    %v1732 = vsel %vm539, %v1070, 0
    %v1734 = vsel %vm539, %v1071, 0
    %v1736 = vsel %vm539, %v1336, 0
    %v1738 = vsel %vm539, %v1337, 0
    %v1741 = vsel %vm539, %v1716, 0
    %v1744 = vsel %vm539, %v1717, 0
    %v1747 = vsel %vm539, %v1718, 0
    %v1750 = vsel %vm539, %v1719, 0
    %1752 = vmatpush.msra.mxu0 0.0
    %1753 = vmatpush.msra.mxu0 0.0
    %1754 = vmatpush.msra.mxu0 0.0
    %1755 = vmatpush.msra.mxu0 0.0
    %1756 = vmatpush.msra.mxu0 0.0
    %1757 = vmatpush.msra.mxu0 0.0
    %1758 = vmatpush.msra.mxu0 0.0
    %1759 = vmatpush.msra.mxu0 0.0
    %1760 = vmatpush.msra.mxu0 0.0
    %1761 = vmatpush.msra.mxu0 0.0
    %1762 = vmatpush.msra.mxu0 0.0
    %1763 = vmatpush.msra.mxu0 0.0
    %1764 = vmatpush.msra.mxu0 %v1727
    %1765 = vmatpush.msra.mxu0 %v1725
    %1766 = vmatpush.msra.mxu0 %v1723
    %1767 = vmatpush.msra.mxu0 %v1721
    %1768 = vmatmul.f32.gmra.mxu0 %v1732
    %v1769 = vpop.f32.mrf.mxu0
    %v1770 = vadd.f32 0.0, %v1769
    %1771 = vmatmul.f32.gmra.mxu0 %v1734
    %v1772 = vpop.f32.mrf.mxu0
    %v1773 = vadd.f32 0.0, %v1772
    %1774 = vmatmul.f32.gmra.mxu0 %v1736
    %v1775 = vpop.f32.mrf.mxu0
    %v1776 = vadd.f32 0.0, %v1775
    %1777 = vmatmul.f32.gmra.mxu0 %v1738
    %v1778 = vpop.f32.mrf.mxu0
    %v1779 = vadd.f32 0.0, %v1778
    %1780 = vmatmul.f32.gmra.mxu0 %v1741
    %v1781 = vpop.f32.mrf.mxu0
    %v1782 = vadd.f32 0.0, %v1781
    %1783 = vmatmul.f32.gmra.mxu0 %v1744
    %v1784 = vpop.f32.mrf.mxu0
    %v1785 = vadd.f32 0.0, %v1784
    %1786 = vmatmul.f32.gmra.mxu0 %v1747
    %v1787 = vpop.f32.mrf.mxu0
    %v1788 = vadd.f32 0.0, %v1787
    %1789 = vmatmul.f32.gmra.mxu0 %v1750
    %v1790 = vpop.f32.mrf.mxu0
    %v1791 = vadd.f32 0.0, %v1790
    %1792 = vdwg.mxu0
    %v1793 = vadd.f32 %v1681, %v1770
    %v1794 = vadd.f32 %v1684, %v1773
    %v1795 = vadd.f32 %v1687, %v1776
    %v1796 = vadd.f32 %v1690, %v1779
    %v1797 = vadd.f32 %v1693, %v1782
    %v1798 = vadd.f32 %v1696, %v1785
    %v1799 = vadd.f32 %v1699, %v1788
    %v1800 = vadd.f32 %v1702, %v1791
    %v1801 = vadd.s32 %v1534, 4294967294
    %v1802 = vadd.s32 %v1535, 4294967294
    %v1803 = vadd.s32 %v1536, 4294967294
    %v1804 = vadd.s32 %v1537, 4294967294
    %vm1805 = vcmp.eq.s32.totalorder %v986, %v1801
    %vm1806 = vcmp.eq.s32.totalorder %v986, %v1802
    %vm1807 = vcmp.eq.s32.totalorder %v986, %v1803
    %vm1808 = vcmp.eq.s32.totalorder %v986, %v1804
    %v1809 = vsel %vm1805, 1, 0
    %v1810 = vsel %vm1806, 1, 0
    %v1811 = vsel %vm1807, 1, 0
    %v1812 = vsel %vm1808, 1, 0
    %v1813 = vcvt.s32.f32 %v1809
    %v1814 = vcvt.s32.f32 %v1810
    %v1815 = vcvt.s32.f32 %v1811
    %v1816 = vcvt.s32.f32 %v1812
    %1817 = vrot.lane.b32.xlu0 %v1525, 80
    %v1818 = vpop.permute.xlu0 %1817
    %1819 = vrot.lane.b32.xlu0 %v1527, 80
    %v1820 = vpop.permute.xlu0 %1819
    %1821 = vrot.lane.b32.xlu0 %v1530, 80
    %v1822 = vpop.permute.xlu0 %1821
    %1823 = vrot.lane.b32.xlu0 %v1532, 80
    %v1824 = vpop.permute.xlu0 %1823
    %v1829 = vsel %vm539, %v1109, 0
    %v1831 = vsel %vm539, %v1110, 0
    %v1833 = vsel %vm539, %v1393, 0
    %v1835 = vsel %vm539, %v1394, 0
    %v1838 = vsel %vm539, %v1813, 0
    %v1841 = vsel %vm539, %v1814, 0
    %v1844 = vsel %vm539, %v1815, 0
    %v1847 = vsel %vm539, %v1816, 0
    %1849 = vmatpush.msra.mxu0 0.0
    %1850 = vmatpush.msra.mxu0 0.0
    %1851 = vmatpush.msra.mxu0 0.0
    %1852 = vmatpush.msra.mxu0 0.0
    %1853 = vmatpush.msra.mxu0 0.0
    %1854 = vmatpush.msra.mxu0 0.0
    %1855 = vmatpush.msra.mxu0 0.0
    %1856 = vmatpush.msra.mxu0 0.0
    %1857 = vmatpush.msra.mxu0 0.0
    %1858 = vmatpush.msra.mxu0 0.0
    %1859 = vmatpush.msra.mxu0 0.0
    %1860 = vmatpush.msra.mxu0 0.0
    %1861 = vmatpush.msra.mxu0 %v1824
    %1862 = vmatpush.msra.mxu0 %v1822
    %1863 = vmatpush.msra.mxu0 %v1820
    %1864 = vmatpush.msra.mxu0 %v1818
    %1865 = vmatmul.f32.gmra.mxu0 %v1829
    %v1866 = vpop.f32.mrf.mxu0
    %v1867 = vadd.f32 0.0, %v1866
    %1868 = vmatmul.f32.gmra.mxu0 %v1831
    %v1869 = vpop.f32.mrf.mxu0
    %v1870 = vadd.f32 0.0, %v1869
    %1871 = vmatmul.f32.gmra.mxu0 %v1833
    %v1872 = vpop.f32.mrf.mxu0
    %v1873 = vadd.f32 0.0, %v1872
    %1874 = vmatmul.f32.gmra.mxu0 %v1835
    %v1875 = vpop.f32.mrf.mxu0
    %v1876 = vadd.f32 0.0, %v1875
    %1877 = vmatmul.f32.gmra.mxu0 %v1838
    %v1878 = vpop.f32.mrf.mxu0
    %v1879 = vadd.f32 0.0, %v1878
    %1880 = vmatmul.f32.gmra.mxu0 %v1841
    %v1881 = vpop.f32.mrf.mxu0
    %v1882 = vadd.f32 0.0, %v1881
    %1883 = vmatmul.f32.gmra.mxu0 %v1844
    %v1884 = vpop.f32.mrf.mxu0
    %v1885 = vadd.f32 0.0, %v1884
    %1886 = vmatmul.f32.gmra.mxu0 %v1847
    %v1887 = vpop.f32.mrf.mxu0
    %v1888 = vadd.f32 0.0, %v1887
    %1889 = vdwg.mxu0
    %v1890 = vadd.f32 %v1793, %v1867
    %v1891 = vadd.f32 %v1794, %v1870
    %v1892 = vadd.f32 %v1795, %v1873
    %v1893 = vadd.f32 %v1796, %v1876
    %v1894 = vadd.f32 %v1797, %v1879
    %v1895 = vadd.f32 %v1798, %v1882
    %v1896 = vadd.f32 %v1799, %v1885
    %v1897 = vadd.f32 %v1800, %v1888
    %v1899 = vperm.slane %v201, 0
    %v1901 = vadd.f32 %v1890, %v1899
    %v1902 = vadd.f32 %v1891, %v1899
    %v1903 = vadd.f32 %v1892, %v1899
    %v1904 = vadd.f32 %v1893, %v1899
    %v1905 = vadd.f32 %v1894, %v1899
    %v1906 = vadd.f32 %v1895, %v1899
    %v1907 = vadd.f32 %v1896, %v1899
    %v1908 = vadd.f32 %v1897, %v1899
    %vm1909 = vcmp.ge.f32.partialorder %v1901, 0.0
    %vm1910 = vcmp.ge.f32.partialorder %v1902, 0.0
    %vm1911 = vcmp.ge.f32.partialorder %v1903, 0.0
    %vm1912 = vcmp.ge.f32.partialorder %v1904, 0.0
    %vm1913 = vcmp.ge.f32.partialorder %v1905, 0.0
    %vm1914 = vcmp.ge.f32.partialorder %v1906, 0.0
    %vm1915 = vcmp.ge.f32.partialorder %v1907, 0.0
    %vm1916 = vcmp.ge.f32.partialorder %v1908, 0.0
    %v1917 = vmul.f32 %v1901, 0.25
    %v1918 = vmul.f32 %v1902, 0.25
    %v1919 = vmul.f32 %v1903, 0.25
    %v1920 = vmul.f32 %v1904, 0.25
    %v1921 = vmul.f32 %v1905, 0.25
    %v1922 = vmul.f32 %v1906, 0.25
    %v1923 = vmul.f32 %v1907, 0.25
    %v1924 = vmul.f32 %v1908, 0.25
    %v1925 = vsel %vm1909, %v1901, %v1917
    %v1926 = vsel %vm1910, %v1902, %v1918
    %v1927 = vsel %vm1911, %v1903, %v1919
    %v1928 = vsel %vm1912, %v1904, %v1920
    %v1929 = vsel %vm1913, %v1905, %v1921
    %v1930 = vsel %vm1914, %v1906, %v1922
    %v1931 = vsel %vm1915, %v1907, %v1923
    %v1932 = vsel %vm1916, %v1908, %v1924
    %v1933 = vsel %vm804, %v1925, 0.0
    %v1934 = vsel %vm804, %v1926, 0.0
    %v1935 = vadd.f32 %v1933, %v1934
    %v1936 = vsel %vm804, %v1927, 0.0
    %v1937 = vadd.f32 %v1935, %v1936
    %v1938 = vsel %vm804, %v1928, 0.0
    %v1939 = vadd.f32 %v1937, %v1938
    %v1940 = vsel %vm804, %v1929, 0.0
    %v1941 = vadd.f32 %v1939, %v1940
    %v1942 = vsel %vm804, %v1930, 0.0
    %v1943 = vadd.f32 %v1941, %v1942
    %v1944 = vsel %vm804, %v1931, 0.0
    %v1945 = vadd.f32 %v1943, %v1944
    %v1946 = vsel %vm804, %v1932, 0.0
    %v1947 = vadd.f32 %v1945, %v1946
    %v1948 = vrot.slane %v1947, 4
    %v1949 = vadd.f32 %v1947, %v1948
    %v1950 = vrot.slane %v1949, 2
    %v1951 = vadd.f32 %v1949, %v1950
    %v1952 = vrot.slane %v1951, 1
    %v1953 = vadd.f32 %v1951, %v1952
    %v1954 = vrcp.pop 64.0
    %v1955 = vmul.f32 64.0, %v1954
    %v1956 = vsub.f32 1.0, %v1955
    %v1957 = vmul.f32 %v1954, %v1956
    %v1958 = vadd.f32 %v1954, %v1957
    %vm1959 = vweird.f32 %v1954
    %v1960 = vsel %vm1959, %v1954, %v1958
    %v1961 = vmul.f32 %v1953, %v1960
    %v1962 = vpack.c.bf16 %v1961, %v1961
    %v1965 = vunpack.c.l.b16 %v202
    %v1966 = vunpack.c.l.b16 %v203
    %v1967 = vpack.c.b16 %v1966, %v1965
    %v1970 = vsel %vm804, %v1962, 0
    %1972 = vmatpush.bf16.msra.mxu0 0
    %1973 = vmatpush.bf16.msra.mxu0 0
    %1974 = vmatpush.bf16.msra.mxu0 0
    %1975 = vmatpush.bf16.msra.mxu0 0
    %1976 = vmatpush.bf16.msra.mxu0 0
    %1977 = vmatpush.bf16.msra.mxu0 0
    %1978 = vmatpush.bf16.msra.mxu0 0
    %1979 = vmatpush.bf16.msra.mxu0 %v1967
    %1980 = vmatmul.bf16.gmra.mxu0 %v1970
    %v1981 = vpop.f32.mrf.mxu0
    %v1982 = vadd.f32 %v204, %v1981
    %v1983 = vpop.f32.mrf.mxu0
    %1984 = vdwg.mxu0
    %vm1985 = vcmp.ge.f32.partialorder %v1982, 0.0
    %v1986 = vmul.f32 %v1982, 0.25
    %v1987 = vsel %vm1985, %v1982, %v1986
    %v1988 = vpack.c.bf16 %v1987, %v1987
    %v1990 = vsel %vm1005, %v1988, 0
    %vm1992 = vcmask 1043456
    %v1994 = vsel %vm1992, %v205, 0
    %1996 = vmatpush.bf16.msra.mxu0 0
    %1997 = vmatpush.bf16.msra.mxu0 0
    %1998 = vmatpush.bf16.msra.mxu0 0
    %1999 = vmatpush.bf16.msra.mxu0 0
    %2000 = vmatpush.bf16.msra.mxu0 0
    %2001 = vmatpush.bf16.msra.mxu0 0
    %2002 = vmatpush.bf16.msra.mxu0 0
    %2003 = vmatpush.bf16.msra.mxu0 %v1994
    %2004 = vmatmul.bf16.gmra.mxu0 %v1990
    %v2005 = vpop.f32.mrf.mxu0
    %v2006 = vadd.f32 %v206, %v2005
    %v2007 = vpop.f32.mrf.mxu0
    %2008 = vdwg.mxu0
    %vm2009 = vcmp.ge.f32.partialorder %v2006, 0.0
    %v2010 = vmul.f32 %v2006, 0.25
    %v2011 = vsel %vm2009, %v2006, %v2010
    %v2012 = vpack.c.bf16 %v2011, %v2011
    %v2014 = vsel %vm1005, %v2012, 0
    %v2017 = vsel %vm1992, %v207, 0
    %2019 = vmatpush.bf16.msra.mxu0 0
    %2020 = vmatpush.bf16.msra.mxu0 0
    %2021 = vmatpush.bf16.msra.mxu0 0
    %2022 = vmatpush.bf16.msra.mxu0 0
    %2023 = vmatpush.bf16.msra.mxu0 0
    %2024 = vmatpush.bf16.msra.mxu0 0
    %2025 = vmatpush.bf16.msra.mxu0 0
    %2026 = vmatpush.bf16.msra.mxu0 %v2017
    %2027 = vmatmul.bf16.gmra.mxu0 %v2014
    %v2028 = vpop.f32.mrf.mxu0
    %v2029 = vadd.f32 %v208, %v2028
    %v2030 = vpop.f32.mrf.mxu0
    %2031 = vdwg.mxu0
    %v2032 = vsub.f32 0.0, %v2029
    %v2033 = vmul.f32 %v2032, 1.442695
    %v2034 = vpow.pop %v2033
    %v2035 = vadd.f32 %v2034, 1.0
    %v2036 = vrcp.pop %v2035
    %v2037 = vmul.f32 %v2035, %v2036
    %v2038 = vsub.f32 1.0, %v2037
    %v2039 = vmul.f32 %v2036, %v2038
    %v2040 = vadd.f32 %v2036, %v2039
    %vm2041 = vweird.f32 %v2035
    %vm2042 = vweird.f32 %v2036
    %vm2043 = vmor %vm2041, %vm2042
    %v2044 = vsel %vm2043, %v2036, %v2040
    %v2045 = vand.u32 2147483647, %v2035
    %vm2046 = vcmp.eq.f32.partialorder %v2045, 8.507059e+37
    %v2047 = vand.u32 %v2035, 2147483648
    %v2048 = vor.u32 1.1754944e-38, %v2047
    %v2049 = vsel %vm2046, %v2048, %v2044
    %v2050 = vmul.f32 1.0, %v2049
    %vm2051 = vcmask 57344
    %2052 = vst.msk [vmem:[#allocation10] sm:$0x1] %vm2051, %v2050
    %2053 = vset.pattern.permute.xlu0 1
    %2054 = vperm.xlu0 %2053, %v127
    %v2055 = vpop.permute.xlu0 %2054
    %2057 = vset.pattern.permute.xlu0 1
    %2058 = vperm.xlu0 %2057, %v128
    %v2059 = vpop.permute.xlu0 %2058
    %2061 = vset.pattern.permute.xlu0 1
    %2062 = vperm.xlu0 %2061, %v129
    %v2063 = vpop.permute.xlu0 %2062
    %2065 = vset.pattern.permute.xlu0 1
    %2066 = vperm.xlu0 %2065, %v130
    %v2067 = vpop.permute.xlu0 %2066
    %2069 = vset.pattern.permute.xlu0 1
    %2070 = vperm.xlu0 %2069, %v131
    %v2071 = vpop.permute.xlu0 %2070
    %2073 = vset.pattern.permute.xlu0 1
    %2074 = vperm.xlu0 %2073, %v132
    %v2075 = vpop.permute.xlu0 %2074
    %2077 = vset.pattern.permute.xlu0 1
    %2078 = vperm.xlu0 %2077, %v133
    %v2079 = vpop.permute.xlu0 %2078
    %2081 = vset.pattern.permute.xlu0 1
    %2082 = vperm.xlu0 %2081, %v134
    %v2083 = vpop.permute.xlu0 %2082
    %v2085 = vmul.f32 %v2055, %v250
    %v2086 = vmul.f32 %v2059, %v250
    %v2087 = vmul.f32 %v2063, %v250
    %v2088 = vmul.f32 %v2067, %v250
    %v2089 = vmul.f32 %v2071, %v250
    %v2090 = vmul.f32 %v2075, %v250
    %v2091 = vmul.f32 %v2079, %v250
    %v2092 = vmul.f32 %v2083, %v250
    %2101 = vrot.lane.b32.xlu0 %v2085, 96
    %v2102 = vpop.permute.xlu0 %2101
    %2103 = vrot.lane.b32.xlu0 %v2086, 96
    %v2104 = vpop.permute.xlu0 %2103
    %2105 = vrot.lane.b32.xlu0 %v2087, 96
    %v2106 = vpop.permute.xlu0 %2105
    %2107 = vrot.lane.b32.xlu0 %v2088, 96
    %v2108 = vpop.permute.xlu0 %2107
    %2109 = vrot.lane.b32.xlu0 %v2089, 96
    %v2110 = vpop.permute.xlu0 %2109
    %2111 = vrot.lane.b32.xlu0 %v2090, 96
    %v2112 = vpop.permute.xlu0 %2111
    %2113 = vrot.lane.b32.xlu0 %v2091, 96
    %v2114 = vpop.permute.xlu0 %2113
    %2115 = vrot.lane.b32.xlu0 %v2092, 96
    %v2116 = vpop.permute.xlu0 %2115
    %2125 = vmatpush.msra.mxu0 0.0
    %2126 = vmatpush.msra.mxu0 0.0
    %2127 = vmatpush.msra.mxu0 0.0
    %2128 = vmatpush.msra.mxu0 0.0
    %2129 = vmatpush.msra.mxu0 0.0
    %2130 = vmatpush.msra.mxu0 0.0
    %2131 = vmatpush.msra.mxu0 0.0
    %2132 = vmatpush.msra.mxu0 0.0
    %2133 = vmatpush.msra.mxu0 %v2116
    %2134 = vmatpush.msra.mxu0 %v2114
    %2135 = vmatpush.msra.mxu0 %v2112
    %2136 = vmatpush.msra.mxu0 %v2110
    %2137 = vmatpush.msra.mxu0 %v2108
    %2138 = vmatpush.msra.mxu0 %v2106
    %2139 = vmatpush.msra.mxu0 %v2104
    %2140 = vmatpush.msra.mxu0 %v2102
    %2141 = vmatmul.f32.gmra.mxu0 %v332
    %v2142 = vpop.f32.mrf.mxu0
    %v2143 = vadd.f32 0.0, %v2142
    %2144 = vmatmul.f32.gmra.mxu0 %v335
    %v2145 = vpop.f32.mrf.mxu0
    %v2146 = vadd.f32 0.0, %v2145
    %2147 = vmatmul.f32.gmra.mxu0 %v338
    %v2148 = vpop.f32.mrf.mxu0
    %v2149 = vadd.f32 0.0, %v2148
    %2150 = vmatmul.f32.gmra.mxu0 %v341
    %v2151 = vpop.f32.mrf.mxu0
    %v2152 = vadd.f32 0.0, %v2151
    %2153 = vdwg.mxu0
    %2154 = vmatpush.msra.mxu0 0.0
    %2155 = vmatpush.msra.mxu0 0.0
    %2156 = vmatpush.msra.mxu0 0.0
    %2157 = vmatpush.msra.mxu0 0.0
    %2158 = vmatpush.msra.mxu0 0.0
    %2159 = vmatpush.msra.mxu0 0.0
    %2160 = vmatpush.msra.mxu0 0.0
    %2161 = vmatpush.msra.mxu0 0.0
    %2162 = vmatpush.msra.mxu0 %v2092
    %2163 = vmatpush.msra.mxu0 %v2091
    %2164 = vmatpush.msra.mxu0 %v2090
    %2165 = vmatpush.msra.mxu0 %v2089
    %2166 = vmatpush.msra.mxu0 %v2088
    %2167 = vmatpush.msra.mxu0 %v2087
    %2168 = vmatpush.msra.mxu0 %v2086
    %2169 = vmatpush.msra.mxu0 %v2085
    %2170 = vmatmul.f32.gmra.mxu0 %v373
    %v2171 = vpop.f32.mrf.mxu0
    %v2172 = vadd.f32 %v2143, %v2171
    %2173 = vmatmul.f32.gmra.mxu0 %v376
    %v2174 = vpop.f32.mrf.mxu0
    %v2175 = vadd.f32 %v2146, %v2174
    %2176 = vmatmul.f32.gmra.mxu0 %v379
    %v2177 = vpop.f32.mrf.mxu0
    %v2178 = vadd.f32 %v2149, %v2177
    %2179 = vmatmul.f32.gmra.mxu0 %v382
    %v2180 = vpop.f32.mrf.mxu0
    %v2181 = vadd.f32 %v2152, %v2180
    %2182 = vdwg.mxu0
    %2183 = vrot.lane.b32.xlu0 %v2085, 64
    %v2184 = vpop.permute.xlu0 %2183
    %2185 = vrot.lane.b32.xlu0 %v2086, 64
    %v2186 = vpop.permute.xlu0 %2185
    %2187 = vrot.lane.b32.xlu0 %v2087, 64
    %v2188 = vpop.permute.xlu0 %2187
    %2189 = vrot.lane.b32.xlu0 %v2088, 64
    %v2190 = vpop.permute.xlu0 %2189
    %2191 = vrot.lane.b32.xlu0 %v2089, 64
    %v2192 = vpop.permute.xlu0 %2191
    %2193 = vrot.lane.b32.xlu0 %v2090, 64
    %v2194 = vpop.permute.xlu0 %2193
    %2195 = vrot.lane.b32.xlu0 %v2091, 64
    %v2196 = vpop.permute.xlu0 %2195
    %2197 = vrot.lane.b32.xlu0 %v2092, 64
    %v2198 = vpop.permute.xlu0 %2197
    %2207 = vmatpush.msra.mxu0 0.0
    %2208 = vmatpush.msra.mxu0 0.0
    %2209 = vmatpush.msra.mxu0 0.0
    %2210 = vmatpush.msra.mxu0 0.0
    %2211 = vmatpush.msra.mxu0 0.0
    %2212 = vmatpush.msra.mxu0 0.0
    %2213 = vmatpush.msra.mxu0 0.0
    %2214 = vmatpush.msra.mxu0 0.0
    %2215 = vmatpush.msra.mxu0 %v2198
    %2216 = vmatpush.msra.mxu0 %v2196
    %2217 = vmatpush.msra.mxu0 %v2194
    %2218 = vmatpush.msra.mxu0 %v2192
    %2219 = vmatpush.msra.mxu0 %v2190
    %2220 = vmatpush.msra.mxu0 %v2188
    %2221 = vmatpush.msra.mxu0 %v2186
    %2222 = vmatpush.msra.mxu0 %v2184
    %2223 = vmatmul.f32.gmra.mxu0 %v454
    %v2224 = vpop.f32.mrf.mxu0
    %v2225 = vadd.f32 0.0, %v2224
    %2226 = vmatmul.f32.gmra.mxu0 %v457
    %v2227 = vpop.f32.mrf.mxu0
    %v2228 = vadd.f32 0.0, %v2227
    %2229 = vmatmul.f32.gmra.mxu0 %v460
    %v2230 = vpop.f32.mrf.mxu0
    %v2231 = vadd.f32 0.0, %v2230
    %2232 = vmatmul.f32.gmra.mxu0 %v463
    %v2233 = vpop.f32.mrf.mxu0
    %v2234 = vadd.f32 0.0, %v2233
    %2235 = vdwg.mxu0
    %v2236 = vadd.f32 %v2172, %v2225
    %v2237 = vadd.f32 %v2175, %v2228
    %v2238 = vadd.f32 %v2178, %v2231
    %v2239 = vadd.f32 %v2181, %v2234
    %v2240 = vadd.f32 %v2236, %v499
    %v2241 = vadd.f32 %v2237, %v499
    %v2242 = vadd.f32 %v2238, %v499
    %v2243 = vadd.f32 %v2239, %v499
    %vm2244 = vcmp.ge.f32.partialorder %v2240, 0.0
    %vm2245 = vcmp.ge.f32.partialorder %v2241, 0.0
    %vm2246 = vcmp.ge.f32.partialorder %v2242, 0.0
    %vm2247 = vcmp.ge.f32.partialorder %v2243, 0.0
    %v2248 = vmul.f32 %v2240, 0.25
    %v2249 = vmul.f32 %v2241, 0.25
    %v2250 = vmul.f32 %v2242, 0.25
    %v2251 = vmul.f32 %v2243, 0.25
    %v2252 = vsel %vm2244, %v2240, %v2248
    %v2253 = vsel %vm2245, %v2241, %v2249
    %v2254 = vsel %vm2246, %v2242, %v2250
    %v2255 = vsel %vm2247, %v2243, %v2251
    %v2256 = vpack.c.bf16 %v2253, %v2252
    %v2257 = vpack.c.bf16 %v2255, %v2254
    %v2259 = vsel %vm539, %v2256, 0
    %v2262 = vsel %vm539, %v2257, 0
    %2264 = vmatpush.bf16.msra.mxu0 0
    %2265 = vmatpush.bf16.msra.mxu0 0
    %2266 = vmatpush.bf16.msra.mxu0 0
    %2267 = vmatpush.bf16.msra.mxu0 0
    %2268 = vmatpush.bf16.msra.mxu0 0
    %2269 = vmatpush.bf16.msra.mxu0 0
    %2270 = vmatpush.bf16.msra.mxu0 %v533
    %2271 = vmatpush.bf16.msra.mxu0 %v531
    %2272 = vmatmul.bf16.gmra.mxu0 %v2259
    %v2273 = vpop.f32.mrf.mxu0
    %v2274 = vadd.f32 0.0, %v2273
    %v2275 = vpop.f32.mrf.mxu0
    %v2276 = vadd.f32 0.0, %v2275
    %2277 = vmatmul.bf16.gmra.mxu0 %v2262
    %v2278 = vpop.f32.mrf.mxu0
    %v2279 = vadd.f32 0.0, %v2278
    %v2280 = vpop.f32.mrf.mxu0
    %v2281 = vadd.f32 0.0, %v2280
    %2282 = vdwg.mxu0
    %2283 = vmatpush.bf16.msra.mxu0 0
    %2284 = vmatpush.bf16.msra.mxu0 0
    %2285 = vmatpush.bf16.msra.mxu0 0
    %2286 = vmatpush.bf16.msra.mxu0 0
    %2287 = vmatpush.bf16.msra.mxu0 0
    %2288 = vmatpush.bf16.msra.mxu0 0
    %2289 = vmatpush.bf16.msra.mxu0 %v534
    %2290 = vmatpush.bf16.msra.mxu0 %v532
    %2291 = vmatmul.bf16.gmra.mxu0 %v2259
    %v2292 = vpop.f32.mrf.mxu0
    %v2293 = vadd.f32 0.0, %v2292
    %v2294 = vpop.f32.mrf.mxu0
    %v2295 = vadd.f32 0.0, %v2294
    %2296 = vmatmul.bf16.gmra.mxu0 %v2262
    %v2297 = vpop.f32.mrf.mxu0
    %v2298 = vadd.f32 0.0, %v2297
    %v2299 = vpop.f32.mrf.mxu0
    %v2300 = vadd.f32 0.0, %v2299
    %2301 = vdwg.mxu0
    %2306 = vrot.lane.b32.xlu0 %v2274, 64
    %v2307 = vpop.permute.xlu0 %2306
    %2308 = vrot.lane.b32.xlu0 %v2276, 64
    %v2309 = vpop.permute.xlu0 %2308
    %2310 = vrot.lane.b32.xlu0 %v2279, 64
    %v2311 = vpop.permute.xlu0 %2310
    %2312 = vrot.lane.b32.xlu0 %v2281, 64
    %v2313 = vpop.permute.xlu0 %2312
    %2318 = vmatpush.msra.mxu0 0.0
    %2319 = vmatpush.msra.mxu0 0.0
    %2320 = vmatpush.msra.mxu0 0.0
    %2321 = vmatpush.msra.mxu0 0.0
    %2322 = vmatpush.msra.mxu0 0.0
    %2323 = vmatpush.msra.mxu0 0.0
    %2324 = vmatpush.msra.mxu0 0.0
    %2325 = vmatpush.msra.mxu0 0.0
    %2326 = vmatpush.msra.mxu0 0.0
    %2327 = vmatpush.msra.mxu0 0.0
    %2328 = vmatpush.msra.mxu0 0.0
    %2329 = vmatpush.msra.mxu0 0.0
    %2330 = vmatpush.msra.mxu0 %v2313
    %2331 = vmatpush.msra.mxu0 %v2311
    %2332 = vmatpush.msra.mxu0 %v2309
    %2333 = vmatpush.msra.mxu0 %v2307
    %2334 = vmatmul.f32.gmra.mxu0 %v600
    %v2335 = vpop.f32.mrf.mxu0
    %v2336 = vadd.f32 0.0, %v2335
    %2337 = vmatmul.f32.gmra.mxu0 %v602
    %v2338 = vpop.f32.mrf.mxu0
    %v2339 = vadd.f32 0.0, %v2338
    %2340 = vdwg.mxu0
    %2341 = vmatpush.msra.mxu0 0.0
    %2342 = vmatpush.msra.mxu0 0.0
    %2343 = vmatpush.msra.mxu0 0.0
    %2344 = vmatpush.msra.mxu0 0.0
    %2345 = vmatpush.msra.mxu0 0.0
    %2346 = vmatpush.msra.mxu0 0.0
    %2347 = vmatpush.msra.mxu0 0.0
    %2348 = vmatpush.msra.mxu0 0.0
    %2349 = vmatpush.msra.mxu0 0.0
    %2350 = vmatpush.msra.mxu0 0.0
    %2351 = vmatpush.msra.mxu0 0.0
    %2352 = vmatpush.msra.mxu0 0.0
    %2353 = vmatpush.msra.mxu0 %v2281
    %2354 = vmatpush.msra.mxu0 %v2279
    %2355 = vmatpush.msra.mxu0 %v2276
    %2356 = vmatpush.msra.mxu0 %v2274
    %2357 = vmatmul.f32.gmra.mxu0 %v627
    %v2358 = vpop.f32.mrf.mxu0
    %v2359 = vadd.f32 %v2336, %v2358
    %2360 = vmatmul.f32.gmra.mxu0 %v629
    %v2361 = vpop.f32.mrf.mxu0
    %v2362 = vadd.f32 %v2339, %v2361
    %2363 = vdwg.mxu0
    %2364 = vmatpush.msra.mxu0 0.0
    %2365 = vmatpush.msra.mxu0 0.0
    %2366 = vmatpush.msra.mxu0 0.0
    %2367 = vmatpush.msra.mxu0 0.0
    %2368 = vmatpush.msra.mxu0 0.0
    %2369 = vmatpush.msra.mxu0 0.0
    %2370 = vmatpush.msra.mxu0 0.0
    %2371 = vmatpush.msra.mxu0 0.0
    %2372 = vmatpush.msra.mxu0 0.0
    %2373 = vmatpush.msra.mxu0 0.0
    %2374 = vmatpush.msra.mxu0 0.0
    %2375 = vmatpush.msra.mxu0 0.0
    %2376 = vmatpush.msra.mxu0 %v2300
    %2377 = vmatpush.msra.mxu0 %v2298
    %2378 = vmatpush.msra.mxu0 %v2295
    %2379 = vmatpush.msra.mxu0 %v2293
    %2380 = vmatmul.f32.gmra.mxu0 %v654
    %v2381 = vpop.f32.mrf.mxu0
    %v2382 = vadd.f32 0.0, %v2381
    %2383 = vmatmul.f32.gmra.mxu0 %v656
    %v2384 = vpop.f32.mrf.mxu0
    %v2385 = vadd.f32 0.0, %v2384
    %2386 = vdwg.mxu0
    %v2387 = vadd.f32 %v2359, %v2382
    %v2388 = vadd.f32 %v2362, %v2385
    %v2389 = vadd.f32 %v2387, %v684
    %v2390 = vadd.f32 %v2388, %v684
    %vm2391 = vcmp.ge.f32.partialorder %v2389, 0.0
    %vm2392 = vcmp.ge.f32.partialorder %v2390, 0.0
    %v2393 = vmul.f32 %v2389, 0.25
    %v2394 = vmul.f32 %v2390, 0.25
    %v2395 = vsel %vm2391, %v2389, %v2393
    %v2396 = vsel %vm2392, %v2390, %v2394
    %v2397 = vpack.c.bf16 %v2396, %v2395
    %v2399 = vsel %vm330, %v2397, 0
    %2401 = vmatpush.bf16.msra.mxu0 0
    %2402 = vmatpush.bf16.msra.mxu0 0
    %2403 = vmatpush.bf16.msra.mxu0 0
    %2404 = vmatpush.bf16.msra.mxu0 0
    %2405 = vmatpush.bf16.msra.mxu0 %v744
    %2406 = vmatpush.bf16.msra.mxu0 %v741
    %2407 = vmatpush.bf16.msra.mxu0 %v738
    %2408 = vmatpush.bf16.msra.mxu0 %v735
    %2409 = vmatmul.bf16.gmra.mxu0 %v2399
    %v2410 = vpop.f32.mrf.mxu0
    %v2411 = vadd.f32 0.0, %v2410
    %v2412 = vpop.f32.mrf.mxu0
    %v2413 = vadd.f32 0.0, %v2412
    %2414 = vdwg.mxu0
    %2415 = vmatpush.bf16.msra.mxu0 0
    %2416 = vmatpush.bf16.msra.mxu0 0
    %2417 = vmatpush.bf16.msra.mxu0 0
    %2418 = vmatpush.bf16.msra.mxu0 0
    %2419 = vmatpush.bf16.msra.mxu0 %v745
    %2420 = vmatpush.bf16.msra.mxu0 %v742
    %2421 = vmatpush.bf16.msra.mxu0 %v739
    %2422 = vmatpush.bf16.msra.mxu0 %v736
    %2423 = vmatmul.bf16.gmra.mxu0 %v2399
    %v2424 = vpop.f32.mrf.mxu0
    %v2425 = vadd.f32 0.0, %v2424
    %v2426 = vpop.f32.mrf.mxu0
    %v2427 = vadd.f32 0.0, %v2426
    %2428 = vdwg.mxu0
    %2429 = vmatpush.bf16.msra.mxu0 0
    %2430 = vmatpush.bf16.msra.mxu0 0
    %2431 = vmatpush.bf16.msra.mxu0 0
    %2432 = vmatpush.bf16.msra.mxu0 0
    %2433 = vmatpush.bf16.msra.mxu0 %v746
    %2434 = vmatpush.bf16.msra.mxu0 %v743
    %2435 = vmatpush.bf16.msra.mxu0 %v740
    %2436 = vmatpush.bf16.msra.mxu0 %v737
    %2437 = vmatmul.bf16.gmra.mxu0 %v2399
    %v2438 = vpop.f32.mrf.mxu0
    %v2439 = vadd.f32 0.0, %v2438
    %v2440 = vpop.f32.mrf.mxu0
    %v2441 = vadd.f32 0.0, %v2440
    %2442 = vdwg.mxu0
    %2443 = vmatpush.msra.mxu0 0.0
    %2444 = vmatpush.msra.mxu0 0.0
    %2445 = vmatpush.msra.mxu0 0.0
    %2446 = vmatpush.msra.mxu0 0.0
    %2447 = vmatpush.msra.mxu0 0.0
    %2448 = vmatpush.msra.mxu0 0.0
    %2449 = vmatpush.msra.mxu0 0.0
    %2450 = vmatpush.msra.mxu0 0.0
    %2451 = vmatpush.msra.mxu0 0.0
    %2452 = vmatpush.msra.mxu0 0.0
    %2453 = vmatpush.msra.mxu0 0.0
    %2454 = vmatpush.msra.mxu0 0.0
    %2455 = vmatpush.msra.mxu0 0.0
    %2456 = vmatpush.msra.mxu0 0.0
    %2457 = vmatpush.msra.mxu0 %v2427
    %2458 = vmatpush.msra.mxu0 %v2425
    %2459 = vmatmul.f32.gmra.mxu0 %v805
    %v2460 = vpop.f32.mrf.mxu0
    %v2461 = vadd.f32 0.0, %v2460
    %2462 = vdwg.mxu0
    %2463 = vmatpush.msra.mxu0 0.0
    %2464 = vmatpush.msra.mxu0 0.0
    %2465 = vmatpush.msra.mxu0 0.0
    %2466 = vmatpush.msra.mxu0 0.0
    %2467 = vmatpush.msra.mxu0 0.0
    %2468 = vmatpush.msra.mxu0 0.0
    %2469 = vmatpush.msra.mxu0 0.0
    %2470 = vmatpush.msra.mxu0 0.0
    %2471 = vmatpush.msra.mxu0 0.0
    %2472 = vmatpush.msra.mxu0 0.0
    %2473 = vmatpush.msra.mxu0 0.0
    %2474 = vmatpush.msra.mxu0 0.0
    %2475 = vmatpush.msra.mxu0 0.0
    %2476 = vmatpush.msra.mxu0 0.0
    %2477 = vmatpush.msra.mxu0 %v2413
    %2478 = vmatpush.msra.mxu0 %v2411
    %2479 = vmatmul.f32.gmra.mxu0 %v827
    %v2480 = vpop.f32.mrf.mxu0
    %v2481 = vadd.f32 %v2461, %v2480
    %2482 = vdwg.mxu0
    %2483 = vmatpush.msra.mxu0 0.0
    %2484 = vmatpush.msra.mxu0 0.0
    %2485 = vmatpush.msra.mxu0 0.0
    %2486 = vmatpush.msra.mxu0 0.0
    %2487 = vmatpush.msra.mxu0 0.0
    %2488 = vmatpush.msra.mxu0 0.0
    %2489 = vmatpush.msra.mxu0 0.0
    %2490 = vmatpush.msra.mxu0 0.0
    %2491 = vmatpush.msra.mxu0 0.0
    %2492 = vmatpush.msra.mxu0 0.0
    %2493 = vmatpush.msra.mxu0 0.0
    %2494 = vmatpush.msra.mxu0 0.0
    %2495 = vmatpush.msra.mxu0 0.0
    %2496 = vmatpush.msra.mxu0 0.0
    %2497 = vmatpush.msra.mxu0 %v2441
    %2498 = vmatpush.msra.mxu0 %v2439
    %2499 = vmatmul.f32.gmra.mxu0 %v849
    %v2500 = vpop.f32.mrf.mxu0
    %v2501 = vadd.f32 0.0, %v2500
    %2502 = vdwg.mxu0
    %v2503 = vadd.f32 %v2481, %v2501
    %v2504 = vadd.f32 %v2503, %v873
    %vm2505 = vcmp.ge.f32.partialorder %v2504, 0.0
    %v2506 = vmul.f32 %v2504, 0.25
    %v2507 = vsel %vm2505, %v2504, %v2506
    %v2508 = vpack.c.bf16 %v2507, %v2507
    %2509 = vmatpush.bf16.msra.mxu0 %v942
    %2510 = vmatpush.bf16.msra.mxu0 %v940
    %2511 = vmatpush.bf16.msra.mxu0 %v938
    %2512 = vmatpush.bf16.msra.mxu0 %v936
    %2513 = vmatpush.bf16.msra.mxu0 %v934
    %2514 = vmatpush.bf16.msra.mxu0 %v932
    %2515 = vmatpush.bf16.msra.mxu0 %v930
    %2516 = vmatpush.bf16.msra.mxu0 %v928
    %2517 = vmatmul.bf16.gmra.mxu0 %v2508
    %v2518 = vpop.f32.mrf.mxu0
    %v2519 = vadd.f32 0.0, %v2518
    %v2520 = vpop.f32.mrf.mxu0
    %2521 = vdwg.mxu0
    %2522 = vmatpush.bf16.msra.mxu0 %v943
    %2523 = vmatpush.bf16.msra.mxu0 %v941
    %2524 = vmatpush.bf16.msra.mxu0 %v939
    %2525 = vmatpush.bf16.msra.mxu0 %v937
    %2526 = vmatpush.bf16.msra.mxu0 %v935
    %2527 = vmatpush.bf16.msra.mxu0 %v933
    %2528 = vmatpush.bf16.msra.mxu0 %v931
    %2529 = vmatpush.bf16.msra.mxu0 %v929
    %2530 = vmatmul.bf16.gmra.mxu0 %v2508
    %v2531 = vpop.f32.mrf.mxu0
    %v2532 = vadd.f32 0.0, %v2531
    %v2533 = vpop.f32.mrf.mxu0
    %2534 = vdwg.mxu0
    %2536 = vrot.lane.b32.xlu0 %v2519, 64
    %v2537 = vpop.permute.xlu0 %2536
    %2539 = vmatpush.msra.mxu0 0.0
    %2540 = vmatpush.msra.mxu0 0.0
    %2541 = vmatpush.msra.mxu0 0.0
    %2542 = vmatpush.msra.mxu0 0.0
    %2543 = vmatpush.msra.mxu0 0.0
    %2544 = vmatpush.msra.mxu0 0.0
    %2545 = vmatpush.msra.mxu0 0.0
    %2546 = vmatpush.msra.mxu0 0.0
    %2547 = vmatpush.msra.mxu0 0.0
    %2548 = vmatpush.msra.mxu0 0.0
    %2549 = vmatpush.msra.mxu0 0.0
    %2550 = vmatpush.msra.mxu0 0.0
    %2551 = vmatpush.msra.mxu0 0.0
    %2552 = vmatpush.msra.mxu0 0.0
    %2553 = vmatpush.msra.mxu0 0.0
    %2554 = vmatpush.msra.mxu0 %v2537
    %2555 = vmatmul.f32.gmra.mxu0 %v1007
    %v2556 = vpop.f32.mrf.mxu0
    %v2557 = vadd.f32 0.0, %v2556
    %2558 = vmatmul.f32.gmra.mxu0 %v1010
    %v2559 = vpop.f32.mrf.mxu0
    %v2560 = vadd.f32 0.0, %v2559
    %2561 = vdwg.mxu0
    %2562 = vmatpush.msra.mxu0 0.0
    %2563 = vmatpush.msra.mxu0 0.0
    %2564 = vmatpush.msra.mxu0 0.0
    %2565 = vmatpush.msra.mxu0 0.0
    %2566 = vmatpush.msra.mxu0 0.0
    %2567 = vmatpush.msra.mxu0 0.0
    %2568 = vmatpush.msra.mxu0 0.0
    %2569 = vmatpush.msra.mxu0 0.0
    %2570 = vmatpush.msra.mxu0 0.0
    %2571 = vmatpush.msra.mxu0 0.0
    %2572 = vmatpush.msra.mxu0 0.0
    %2573 = vmatpush.msra.mxu0 0.0
    %2574 = vmatpush.msra.mxu0 0.0
    %2575 = vmatpush.msra.mxu0 0.0
    %2576 = vmatpush.msra.mxu0 0.0
    %2577 = vmatpush.msra.mxu0 %v2519
    %2578 = vmatmul.f32.gmra.mxu0 %v1036
    %v2579 = vpop.f32.mrf.mxu0
    %v2580 = vadd.f32 %v2557, %v2579
    %2581 = vmatmul.f32.gmra.mxu0 %v1039
    %v2582 = vpop.f32.mrf.mxu0
    %v2583 = vadd.f32 %v2560, %v2582
    %2584 = vdwg.mxu0
    %2585 = vmatpush.msra.mxu0 0.0
    %2586 = vmatpush.msra.mxu0 0.0
    %2587 = vmatpush.msra.mxu0 0.0
    %2588 = vmatpush.msra.mxu0 0.0
    %2589 = vmatpush.msra.mxu0 0.0
    %2590 = vmatpush.msra.mxu0 0.0
    %2591 = vmatpush.msra.mxu0 0.0
    %2592 = vmatpush.msra.mxu0 0.0
    %2593 = vmatpush.msra.mxu0 0.0
    %2594 = vmatpush.msra.mxu0 0.0
    %2595 = vmatpush.msra.mxu0 0.0
    %2596 = vmatpush.msra.mxu0 0.0
    %2597 = vmatpush.msra.mxu0 0.0
    %2598 = vmatpush.msra.mxu0 0.0
    %2599 = vmatpush.msra.mxu0 0.0
    %2600 = vmatpush.msra.mxu0 %v2532
    %2601 = vmatmul.f32.gmra.mxu0 %v1073
    %v2602 = vpop.f32.mrf.mxu0
    %v2603 = vadd.f32 0.0, %v2602
    %2604 = vmatmul.f32.gmra.mxu0 %v1076
    %v2605 = vpop.f32.mrf.mxu0
    %v2606 = vadd.f32 0.0, %v2605
    %2607 = vdwg.mxu0
    %v2608 = vadd.f32 %v2580, %v2603
    %v2609 = vadd.f32 %v2583, %v2606
    %2611 = vrot.lane.b32.xlu0 %v2532, 64
    %v2612 = vpop.permute.xlu0 %2611
    %2614 = vmatpush.msra.mxu0 0.0
    %2615 = vmatpush.msra.mxu0 0.0
    %2616 = vmatpush.msra.mxu0 0.0
    %2617 = vmatpush.msra.mxu0 0.0
    %2618 = vmatpush.msra.mxu0 0.0
    %2619 = vmatpush.msra.mxu0 0.0
    %2620 = vmatpush.msra.mxu0 0.0
    %2621 = vmatpush.msra.mxu0 0.0
    %2622 = vmatpush.msra.mxu0 0.0
    %2623 = vmatpush.msra.mxu0 0.0
    %2624 = vmatpush.msra.mxu0 0.0
    %2625 = vmatpush.msra.mxu0 0.0
    %2626 = vmatpush.msra.mxu0 0.0
    %2627 = vmatpush.msra.mxu0 0.0
    %2628 = vmatpush.msra.mxu0 0.0
    %2629 = vmatpush.msra.mxu0 %v2612
    %2630 = vmatmul.f32.gmra.mxu0 %v1116
    %v2631 = vpop.f32.mrf.mxu0
    %v2632 = vadd.f32 0.0, %v2631
    %2633 = vmatmul.f32.gmra.mxu0 %v1119
    %v2634 = vpop.f32.mrf.mxu0
    %v2635 = vadd.f32 0.0, %v2634
    %2636 = vdwg.mxu0
    %v2637 = vadd.f32 %v2608, %v2632
    %v2638 = vadd.f32 %v2609, %v2635
    %v2639 = vadd.f32 %v2637, %v1147
    %v2640 = vadd.f32 %v2638, %v1147
    %vm2641 = vcmp.ge.f32.partialorder %v2639, 0.0
    %vm2642 = vcmp.ge.f32.partialorder %v2640, 0.0
    %v2643 = vmul.f32 %v2639, 0.25
    %v2644 = vmul.f32 %v2640, 0.25
    %v2645 = vsel %vm2641, %v2639, %v2643
    %v2646 = vsel %vm2642, %v2640, %v2644
    %2649 = vrot.lane.b32.xlu0 %v2395, 64
    %v2650 = vpop.permute.xlu0 %2649
    %2651 = vrot.lane.b32.xlu0 %v2396, 64
    %v2652 = vpop.permute.xlu0 %2651
    %v2655 = vsel %vm330, %v2645, %v2650
    %v2656 = vsel %vm330, %v2646, %v2652
    %v2657 = vpack.c.bf16 %v2656, %v2655
    %2658 = vmatpush.bf16.msra.mxu0 %v1207
    %2659 = vmatpush.bf16.msra.mxu0 %v1206
    %2660 = vmatpush.bf16.msra.mxu0 %v1205
    %2661 = vmatpush.bf16.msra.mxu0 %v1204
    %2662 = vmatpush.bf16.msra.mxu0 %v1203
    %2663 = vmatpush.bf16.msra.mxu0 %v1202
    %2664 = vmatpush.bf16.msra.mxu0 %v1201
    %2665 = vmatpush.bf16.msra.mxu0 %v1200
    %2666 = vmatmul.bf16.gmra.mxu0 %v2657
    %v2667 = vpop.f32.mrf.mxu0
    %v2668 = vadd.f32 0.0, %v2667
    %v2669 = vpop.f32.mrf.mxu0
    %v2670 = vadd.f32 0.0, %v2669
    %2671 = vdwg.mxu0
    %2674 = vrot.lane.b32.xlu0 %v2668, 96
    %v2675 = vpop.permute.xlu0 %2674
    %2676 = vrot.lane.b32.xlu0 %v2670, 96
    %v2677 = vpop.permute.xlu0 %2676
    %2680 = vmatpush.msra.mxu0 0.0
    %2681 = vmatpush.msra.mxu0 0.0
    %2682 = vmatpush.msra.mxu0 0.0
    %2683 = vmatpush.msra.mxu0 0.0
    %2684 = vmatpush.msra.mxu0 0.0
    %2685 = vmatpush.msra.mxu0 0.0
    %2686 = vmatpush.msra.mxu0 0.0
    %2687 = vmatpush.msra.mxu0 0.0
    %2688 = vmatpush.msra.mxu0 0.0
    %2689 = vmatpush.msra.mxu0 0.0
    %2690 = vmatpush.msra.mxu0 0.0
    %2691 = vmatpush.msra.mxu0 0.0
    %2692 = vmatpush.msra.mxu0 0.0
    %2693 = vmatpush.msra.mxu0 0.0
    %2694 = vmatpush.msra.mxu0 %v2677
    %2695 = vmatpush.msra.mxu0 %v2675
    %2696 = vmatmul.f32.gmra.mxu0 %v1252
    %v2697 = vpop.f32.mrf.mxu0
    %v2698 = vadd.f32 0.0, %v2697
    %2699 = vmatmul.f32.gmra.mxu0 %v1254
    %v2700 = vpop.f32.mrf.mxu0
    %v2701 = vadd.f32 0.0, %v2700
    %2702 = vmatmul.f32.gmra.mxu0 %v1257
    %v2703 = vpop.f32.mrf.mxu0
    %v2704 = vadd.f32 0.0, %v2703
    %2705 = vmatmul.f32.gmra.mxu0 %v1260
    %v2706 = vpop.f32.mrf.mxu0
    %v2707 = vadd.f32 0.0, %v2706
    %2708 = vdwg.mxu0
    %2709 = vmatpush.msra.mxu0 0.0
    %2710 = vmatpush.msra.mxu0 0.0
    %2711 = vmatpush.msra.mxu0 0.0
    %2712 = vmatpush.msra.mxu0 0.0
    %2713 = vmatpush.msra.mxu0 0.0
    %2714 = vmatpush.msra.mxu0 0.0
    %2715 = vmatpush.msra.mxu0 0.0
    %2716 = vmatpush.msra.mxu0 0.0
    %2717 = vmatpush.msra.mxu0 0.0
    %2718 = vmatpush.msra.mxu0 0.0
    %2719 = vmatpush.msra.mxu0 0.0
    %2720 = vmatpush.msra.mxu0 0.0
    %2721 = vmatpush.msra.mxu0 0.0
    %2722 = vmatpush.msra.mxu0 0.0
    %2723 = vmatpush.msra.mxu0 %v2670
    %2724 = vmatpush.msra.mxu0 %v2668
    %2725 = vmatmul.f32.gmra.mxu0 %v1291
    %v2726 = vpop.f32.mrf.mxu0
    %v2727 = vadd.f32 %v2698, %v2726
    %2728 = vmatmul.f32.gmra.mxu0 %v1293
    %v2729 = vpop.f32.mrf.mxu0
    %v2730 = vadd.f32 %v2701, %v2729
    %2731 = vmatmul.f32.gmra.mxu0 %v1296
    %v2732 = vpop.f32.mrf.mxu0
    %v2733 = vadd.f32 %v2704, %v2732
    %2734 = vmatmul.f32.gmra.mxu0 %v1299
    %v2735 = vpop.f32.mrf.mxu0
    %v2736 = vadd.f32 %v2707, %v2735
    %2737 = vdwg.mxu0
    %2738 = vrot.lane.b32.xlu0 %v2668, 64
    %v2739 = vpop.permute.xlu0 %2738
    %2740 = vrot.lane.b32.xlu0 %v2670, 64
    %v2741 = vpop.permute.xlu0 %2740
    %2744 = vmatpush.msra.mxu0 0.0
    %2745 = vmatpush.msra.mxu0 0.0
    %2746 = vmatpush.msra.mxu0 0.0
    %2747 = vmatpush.msra.mxu0 0.0
    %2748 = vmatpush.msra.mxu0 0.0
    %2749 = vmatpush.msra.mxu0 0.0
    %2750 = vmatpush.msra.mxu0 0.0
    %2751 = vmatpush.msra.mxu0 0.0
    %2752 = vmatpush.msra.mxu0 0.0
    %2753 = vmatpush.msra.mxu0 0.0
    %2754 = vmatpush.msra.mxu0 0.0
    %2755 = vmatpush.msra.mxu0 0.0
    %2756 = vmatpush.msra.mxu0 0.0
    %2757 = vmatpush.msra.mxu0 0.0
    %2758 = vmatpush.msra.mxu0 %v2741
    %2759 = vmatpush.msra.mxu0 %v2739
    %2760 = vmatmul.f32.gmra.mxu0 %v1344
    %v2761 = vpop.f32.mrf.mxu0
    %v2762 = vadd.f32 0.0, %v2761
    %2763 = vmatmul.f32.gmra.mxu0 %v1346
    %v2764 = vpop.f32.mrf.mxu0
    %v2765 = vadd.f32 0.0, %v2764
    %2766 = vmatmul.f32.gmra.mxu0 %v1349
    %v2767 = vpop.f32.mrf.mxu0
    %v2768 = vadd.f32 0.0, %v2767
    %2769 = vmatmul.f32.gmra.mxu0 %v1352
    %v2770 = vpop.f32.mrf.mxu0
    %v2771 = vadd.f32 0.0, %v2770
    %2772 = vdwg.mxu0
    %v2773 = vadd.f32 %v2727, %v2762
    %v2774 = vadd.f32 %v2730, %v2765
    %v2775 = vadd.f32 %v2733, %v2768
    %v2776 = vadd.f32 %v2736, %v2771
    %2777 = vrot.lane.b32.xlu0 %v2668, 32
    %v2778 = vpop.permute.xlu0 %2777
    %2779 = vrot.lane.b32.xlu0 %v2670, 32
    %v2780 = vpop.permute.xlu0 %2779
    %2783 = vmatpush.msra.mxu0 0.0
    %2784 = vmatpush.msra.mxu0 0.0
    %2785 = vmatpush.msra.mxu0 0.0
    %2786 = vmatpush.msra.mxu0 0.0
    %2787 = vmatpush.msra.mxu0 0.0
    %2788 = vmatpush.msra.mxu0 0.0
    %2789 = vmatpush.msra.mxu0 0.0
    %2790 = vmatpush.msra.mxu0 0.0
    %2791 = vmatpush.msra.mxu0 0.0
    %2792 = vmatpush.msra.mxu0 0.0
    %2793 = vmatpush.msra.mxu0 0.0
    %2794 = vmatpush.msra.mxu0 0.0
    %2795 = vmatpush.msra.mxu0 0.0
    %2796 = vmatpush.msra.mxu0 0.0
    %2797 = vmatpush.msra.mxu0 %v2780
    %2798 = vmatpush.msra.mxu0 %v2778
    %2799 = vmatmul.f32.gmra.mxu0 %v1401
    %v2800 = vpop.f32.mrf.mxu0
    %v2801 = vadd.f32 0.0, %v2800
    %2802 = vmatmul.f32.gmra.mxu0 %v1403
    %v2803 = vpop.f32.mrf.mxu0
    %v2804 = vadd.f32 0.0, %v2803
    %2805 = vmatmul.f32.gmra.mxu0 %v1406
    %v2806 = vpop.f32.mrf.mxu0
    %v2807 = vadd.f32 0.0, %v2806
    %2808 = vmatmul.f32.gmra.mxu0 %v1409
    %v2809 = vpop.f32.mrf.mxu0
    %v2810 = vadd.f32 0.0, %v2809
    %2811 = vdwg.mxu0
    %v2812 = vadd.f32 %v2773, %v2801
    %v2813 = vadd.f32 %v2774, %v2804
    %v2814 = vadd.f32 %v2775, %v2807
    %v2815 = vadd.f32 %v2776, %v2810
    %v2816 = vadd.f32 %v2812, %v1445
    %v2817 = vadd.f32 %v2813, %v1445
    %v2818 = vadd.f32 %v2814, %v1445
    %v2819 = vadd.f32 %v2815, %v1445
    %vm2820 = vcmp.ge.f32.partialorder %v2816, 0.0
    %vm2821 = vcmp.ge.f32.partialorder %v2817, 0.0
    %vm2822 = vcmp.ge.f32.partialorder %v2818, 0.0
    %vm2823 = vcmp.ge.f32.partialorder %v2819, 0.0
    %v2824 = vmul.f32 %v2816, 0.25
    %v2825 = vmul.f32 %v2817, 0.25
    %v2826 = vmul.f32 %v2818, 0.25
    %v2827 = vmul.f32 %v2819, 0.25
    %v2828 = vsel %vm2820, %v2816, %v2824
    %v2829 = vsel %vm2821, %v2817, %v2825
    %v2830 = vsel %vm2822, %v2818, %v2826
    %v2831 = vsel %vm2823, %v2819, %v2827
    %2836 = vrot.lane.b32.xlu0 %v2252, 32
    %v2837 = vpop.permute.xlu0 %2836
    %2838 = vrot.lane.b32.xlu0 %v2253, 32
    %v2839 = vpop.permute.xlu0 %2838
    %2840 = vrot.lane.b32.xlu0 %v2254, 32
    %v2841 = vpop.permute.xlu0 %2840
    %2842 = vrot.lane.b32.xlu0 %v2255, 32
    %v2843 = vpop.permute.xlu0 %2842
    %v2848 = vsel %vm539, %v2828, %v2837
    %v2849 = vsel %vm539, %v2829, %v2839
    %v2850 = vsel %vm539, %v2830, %v2841
    %v2851 = vsel %vm539, %v2831, %v2843
    %v2852 = vpack.c.bf16 %v2849, %v2848
    %v2853 = vpack.c.bf16 %v2851, %v2850
    %v2855 = vsel %vm330, %v2852, 0
    %v2858 = vsel %vm330, %v2853, 0
    %2860 = vmatpush.bf16.msra.mxu0 0
    %2861 = vmatpush.bf16.msra.mxu0 0
    %2862 = vmatpush.bf16.msra.mxu0 0
    %2863 = vmatpush.bf16.msra.mxu0 0
    %2864 = vmatpush.bf16.msra.mxu0 %v1504
    %2865 = vmatpush.bf16.msra.mxu0 %v1503
    %2866 = vmatpush.bf16.msra.mxu0 %v1502
    %2867 = vmatpush.bf16.msra.mxu0 %v1501
    %2868 = vmatmul.bf16.gmra.mxu0 %v2855
    %v2869 = vpop.f32.mrf.mxu0
    %v2870 = vadd.f32 0.0, %v2869
    %v2871 = vpop.f32.mrf.mxu0
    %v2872 = vadd.f32 0.0, %v2871
    %2873 = vmatmul.bf16.gmra.mxu0 %v2858
    %v2874 = vpop.f32.mrf.mxu0
    %v2875 = vadd.f32 0.0, %v2874
    %v2876 = vpop.f32.mrf.mxu0
    %v2877 = vadd.f32 0.0, %v2876
    %2878 = vdwg.mxu0
    %2883 = vrot.lane.b32.xlu0 %v2870, 112
    %v2884 = vpop.permute.xlu0 %2883
    %2885 = vrot.lane.b32.xlu0 %v2872, 112
    %v2886 = vpop.permute.xlu0 %2885
    %2887 = vrot.lane.b32.xlu0 %v2875, 112
    %v2888 = vpop.permute.xlu0 %2887
    %2889 = vrot.lane.b32.xlu0 %v2877, 112
    %v2890 = vpop.permute.xlu0 %2889
    %2895 = vmatpush.msra.mxu0 0.0
    %2896 = vmatpush.msra.mxu0 0.0
    %2897 = vmatpush.msra.mxu0 0.0
    %2898 = vmatpush.msra.mxu0 0.0
    %2899 = vmatpush.msra.mxu0 0.0
    %2900 = vmatpush.msra.mxu0 0.0
    %2901 = vmatpush.msra.mxu0 0.0
    %2902 = vmatpush.msra.mxu0 0.0
    %2903 = vmatpush.msra.mxu0 0.0
    %2904 = vmatpush.msra.mxu0 0.0
    %2905 = vmatpush.msra.mxu0 0.0
    %2906 = vmatpush.msra.mxu0 0.0
    %2907 = vmatpush.msra.mxu0 %v2890
    %2908 = vmatpush.msra.mxu0 %v2888
    %2909 = vmatpush.msra.mxu0 %v2886
    %2910 = vmatpush.msra.mxu0 %v2884
    %2911 = vmatmul.f32.gmra.mxu0 %v1582
    %v2912 = vpop.f32.mrf.mxu0
    %v2913 = vadd.f32 0.0, %v2912
    %2914 = vmatmul.f32.gmra.mxu0 %v1584
    %v2915 = vpop.f32.mrf.mxu0
    %v2916 = vadd.f32 0.0, %v2915
    %2917 = vmatmul.f32.gmra.mxu0 %v1586
    %v2918 = vpop.f32.mrf.mxu0
    %v2919 = vadd.f32 0.0, %v2918
    %2920 = vmatmul.f32.gmra.mxu0 %v1588
    %v2921 = vpop.f32.mrf.mxu0
    %v2922 = vadd.f32 0.0, %v2921
    %2923 = vmatmul.f32.gmra.mxu0 %v1591
    %v2924 = vpop.f32.mrf.mxu0
    %v2925 = vadd.f32 0.0, %v2924
    %2926 = vmatmul.f32.gmra.mxu0 %v1594
    %v2927 = vpop.f32.mrf.mxu0
    %v2928 = vadd.f32 0.0, %v2927
    %2929 = vmatmul.f32.gmra.mxu0 %v1597
    %v2930 = vpop.f32.mrf.mxu0
    %v2931 = vadd.f32 0.0, %v2930
    %2932 = vmatmul.f32.gmra.mxu0 %v1600
    %v2933 = vpop.f32.mrf.mxu0
    %v2934 = vadd.f32 0.0, %v2933
    %2935 = vdwg.mxu0
    %2936 = vmatpush.msra.mxu0 0.0
    %2937 = vmatpush.msra.mxu0 0.0
    %2938 = vmatpush.msra.mxu0 0.0
    %2939 = vmatpush.msra.mxu0 0.0
    %2940 = vmatpush.msra.mxu0 0.0
    %2941 = vmatpush.msra.mxu0 0.0
    %2942 = vmatpush.msra.mxu0 0.0
    %2943 = vmatpush.msra.mxu0 0.0
    %2944 = vmatpush.msra.mxu0 0.0
    %2945 = vmatpush.msra.mxu0 0.0
    %2946 = vmatpush.msra.mxu0 0.0
    %2947 = vmatpush.msra.mxu0 0.0
    %2948 = vmatpush.msra.mxu0 %v2877
    %2949 = vmatpush.msra.mxu0 %v2875
    %2950 = vmatpush.msra.mxu0 %v2872
    %2951 = vmatpush.msra.mxu0 %v2870
    %2952 = vmatmul.f32.gmra.mxu0 %v1643
    %v2953 = vpop.f32.mrf.mxu0
    %v2954 = vadd.f32 %v2913, %v2953
    %2955 = vmatmul.f32.gmra.mxu0 %v1645
    %v2956 = vpop.f32.mrf.mxu0
    %v2957 = vadd.f32 %v2916, %v2956
    %2958 = vmatmul.f32.gmra.mxu0 %v1647
    %v2959 = vpop.f32.mrf.mxu0
    %v2960 = vadd.f32 %v2919, %v2959
    %2961 = vmatmul.f32.gmra.mxu0 %v1649
    %v2962 = vpop.f32.mrf.mxu0
    %v2963 = vadd.f32 %v2922, %v2962
    %2964 = vmatmul.f32.gmra.mxu0 %v1652
    %v2965 = vpop.f32.mrf.mxu0
    %v2966 = vadd.f32 %v2925, %v2965
    %2967 = vmatmul.f32.gmra.mxu0 %v1655
    %v2968 = vpop.f32.mrf.mxu0
    %v2969 = vadd.f32 %v2928, %v2968
    %2970 = vmatmul.f32.gmra.mxu0 %v1658
    %v2971 = vpop.f32.mrf.mxu0
    %v2972 = vadd.f32 %v2931, %v2971
    %2973 = vmatmul.f32.gmra.mxu0 %v1661
    %v2974 = vpop.f32.mrf.mxu0
    %v2975 = vadd.f32 %v2934, %v2974
    %2976 = vdwg.mxu0
    %2977 = vrot.lane.b32.xlu0 %v2870, 96
    %v2978 = vpop.permute.xlu0 %2977
    %2979 = vrot.lane.b32.xlu0 %v2872, 96
    %v2980 = vpop.permute.xlu0 %2979
    %2981 = vrot.lane.b32.xlu0 %v2875, 96
    %v2982 = vpop.permute.xlu0 %2981
    %2983 = vrot.lane.b32.xlu0 %v2877, 96
    %v2984 = vpop.permute.xlu0 %2983
    %2989 = vmatpush.msra.mxu0 0.0
    %2990 = vmatpush.msra.mxu0 0.0
    %2991 = vmatpush.msra.mxu0 0.0
    %2992 = vmatpush.msra.mxu0 0.0
    %2993 = vmatpush.msra.mxu0 0.0
    %2994 = vmatpush.msra.mxu0 0.0
    %2995 = vmatpush.msra.mxu0 0.0
    %2996 = vmatpush.msra.mxu0 0.0
    %2997 = vmatpush.msra.mxu0 0.0
    %2998 = vmatpush.msra.mxu0 0.0
    %2999 = vmatpush.msra.mxu0 0.0
    %3000 = vmatpush.msra.mxu0 0.0
    %3001 = vmatpush.msra.mxu0 %v2984
    %3002 = vmatpush.msra.mxu0 %v2982
    %3003 = vmatpush.msra.mxu0 %v2980
    %3004 = vmatpush.msra.mxu0 %v2978
    %3005 = vmatmul.f32.gmra.mxu0 %v1732
    %v3006 = vpop.f32.mrf.mxu0
    %v3007 = vadd.f32 0.0, %v3006
    %3008 = vmatmul.f32.gmra.mxu0 %v1734
    %v3009 = vpop.f32.mrf.mxu0
    %v3010 = vadd.f32 0.0, %v3009
    %3011 = vmatmul.f32.gmra.mxu0 %v1736
    %v3012 = vpop.f32.mrf.mxu0
    %v3013 = vadd.f32 0.0, %v3012
    %3014 = vmatmul.f32.gmra.mxu0 %v1738
    %v3015 = vpop.f32.mrf.mxu0
    %v3016 = vadd.f32 0.0, %v3015
    %3017 = vmatmul.f32.gmra.mxu0 %v1741
    %v3018 = vpop.f32.mrf.mxu0
    %v3019 = vadd.f32 0.0, %v3018
    %3020 = vmatmul.f32.gmra.mxu0 %v1744
    %v3021 = vpop.f32.mrf.mxu0
    %v3022 = vadd.f32 0.0, %v3021
    %3023 = vmatmul.f32.gmra.mxu0 %v1747
    %v3024 = vpop.f32.mrf.mxu0
    %v3025 = vadd.f32 0.0, %v3024
    %3026 = vmatmul.f32.gmra.mxu0 %v1750
    %v3027 = vpop.f32.mrf.mxu0
    %v3028 = vadd.f32 0.0, %v3027
    %3029 = vdwg.mxu0
    %v3030 = vadd.f32 %v2954, %v3007
    %v3031 = vadd.f32 %v2957, %v3010
    %v3032 = vadd.f32 %v2960, %v3013
    %v3033 = vadd.f32 %v2963, %v3016
    %v3034 = vadd.f32 %v2966, %v3019
    %v3035 = vadd.f32 %v2969, %v3022
    %v3036 = vadd.f32 %v2972, %v3025
    %v3037 = vadd.f32 %v2975, %v3028
    %3038 = vrot.lane.b32.xlu0 %v2870, 80
    %v3039 = vpop.permute.xlu0 %3038
    %3040 = vrot.lane.b32.xlu0 %v2872, 80
    %v3041 = vpop.permute.xlu0 %3040
    %3042 = vrot.lane.b32.xlu0 %v2875, 80
    %v3043 = vpop.permute.xlu0 %3042
    %3044 = vrot.lane.b32.xlu0 %v2877, 80
    %v3045 = vpop.permute.xlu0 %3044
    %3050 = vmatpush.msra.mxu0 0.0
    %3051 = vmatpush.msra.mxu0 0.0
    %3052 = vmatpush.msra.mxu0 0.0
    %3053 = vmatpush.msra.mxu0 0.0
    %3054 = vmatpush.msra.mxu0 0.0
    %3055 = vmatpush.msra.mxu0 0.0
    %3056 = vmatpush.msra.mxu0 0.0
    %3057 = vmatpush.msra.mxu0 0.0
    %3058 = vmatpush.msra.mxu0 0.0
    %3059 = vmatpush.msra.mxu0 0.0
    %3060 = vmatpush.msra.mxu0 0.0
    %3061 = vmatpush.msra.mxu0 0.0
    %3062 = vmatpush.msra.mxu0 %v3045
    %3063 = vmatpush.msra.mxu0 %v3043
    %3064 = vmatpush.msra.mxu0 %v3041
    %3065 = vmatpush.msra.mxu0 %v3039
    %3066 = vmatmul.f32.gmra.mxu0 %v1829
    %v3067 = vpop.f32.mrf.mxu0
    %v3068 = vadd.f32 0.0, %v3067
    %3069 = vmatmul.f32.gmra.mxu0 %v1831
    %v3070 = vpop.f32.mrf.mxu0
    %v3071 = vadd.f32 0.0, %v3070
    %3072 = vmatmul.f32.gmra.mxu0 %v1833
    %v3073 = vpop.f32.mrf.mxu0
    %v3074 = vadd.f32 0.0, %v3073
    %3075 = vmatmul.f32.gmra.mxu0 %v1835
    %v3076 = vpop.f32.mrf.mxu0
    %v3077 = vadd.f32 0.0, %v3076
    %3078 = vmatmul.f32.gmra.mxu0 %v1838
    %v3079 = vpop.f32.mrf.mxu0
    %v3080 = vadd.f32 0.0, %v3079
    %3081 = vmatmul.f32.gmra.mxu0 %v1841
    %v3082 = vpop.f32.mrf.mxu0
    %v3083 = vadd.f32 0.0, %v3082
    %3084 = vmatmul.f32.gmra.mxu0 %v1844
    %v3085 = vpop.f32.mrf.mxu0
    %v3086 = vadd.f32 0.0, %v3085
    %3087 = vmatmul.f32.gmra.mxu0 %v1847
    %v3088 = vpop.f32.mrf.mxu0
    %v3089 = vadd.f32 0.0, %v3088
    %3090 = vdwg.mxu0
    %v3091 = vadd.f32 %v3030, %v3068
    %v3092 = vadd.f32 %v3031, %v3071
    %v3093 = vadd.f32 %v3032, %v3074
    %v3094 = vadd.f32 %v3033, %v3077
    %v3095 = vadd.f32 %v3034, %v3080
    %v3096 = vadd.f32 %v3035, %v3083
    %v3097 = vadd.f32 %v3036, %v3086
    %v3098 = vadd.f32 %v3037, %v3089
    %v3099 = vadd.f32 %v3091, %v1899
    %v3100 = vadd.f32 %v3092, %v1899
    %v3101 = vadd.f32 %v3093, %v1899
    %v3102 = vadd.f32 %v3094, %v1899
    %v3103 = vadd.f32 %v3095, %v1899
    %v3104 = vadd.f32 %v3096, %v1899
    %v3105 = vadd.f32 %v3097, %v1899
    %v3106 = vadd.f32 %v3098, %v1899
    %vm3107 = vcmp.ge.f32.partialorder %v3099, 0.0
    %vm3108 = vcmp.ge.f32.partialorder %v3100, 0.0
    %vm3109 = vcmp.ge.f32.partialorder %v3101, 0.0
    %vm3110 = vcmp.ge.f32.partialorder %v3102, 0.0
    %vm3111 = vcmp.ge.f32.partialorder %v3103, 0.0
    %vm3112 = vcmp.ge.f32.partialorder %v3104, 0.0
    %vm3113 = vcmp.ge.f32.partialorder %v3105, 0.0
    %vm3114 = vcmp.ge.f32.partialorder %v3106, 0.0
    %v3115 = vmul.f32 %v3099, 0.25
    %v3116 = vmul.f32 %v3100, 0.25
    %v3117 = vmul.f32 %v3101, 0.25
    %v3118 = vmul.f32 %v3102, 0.25
    %v3119 = vmul.f32 %v3103, 0.25
    %v3120 = vmul.f32 %v3104, 0.25
    %v3121 = vmul.f32 %v3105, 0.25
    %v3122 = vmul.f32 %v3106, 0.25
    %v3123 = vsel %vm3107, %v3099, %v3115
    %v3124 = vsel %vm3108, %v3100, %v3116
    %v3125 = vsel %vm3109, %v3101, %v3117
    %v3126 = vsel %vm3110, %v3102, %v3118
    %v3127 = vsel %vm3111, %v3103, %v3119
    %v3128 = vsel %vm3112, %v3104, %v3120
    %v3129 = vsel %vm3113, %v3105, %v3121
    %v3130 = vsel %vm3114, %v3106, %v3122
    %v3131 = vsel %vm804, %v3123, 0.0
    %v3132 = vsel %vm804, %v3124, 0.0
    %v3133 = vadd.f32 %v3131, %v3132
    %v3134 = vsel %vm804, %v3125, 0.0
    %v3135 = vadd.f32 %v3133, %v3134
    %v3136 = vsel %vm804, %v3126, 0.0
    %v3137 = vadd.f32 %v3135, %v3136
    %v3138 = vsel %vm804, %v3127, 0.0
    %v3139 = vadd.f32 %v3137, %v3138
    %v3140 = vsel %vm804, %v3128, 0.0
    %v3141 = vadd.f32 %v3139, %v3140
    %v3142 = vsel %vm804, %v3129, 0.0
    %v3143 = vadd.f32 %v3141, %v3142
    %v3144 = vsel %vm804, %v3130, 0.0
    %v3145 = vadd.f32 %v3143, %v3144
    %v3146 = vrot.slane %v3145, 4
    %v3147 = vadd.f32 %v3145, %v3146
    %v3148 = vrot.slane %v3147, 2
    %v3149 = vadd.f32 %v3147, %v3148
    %v3150 = vrot.slane %v3149, 1
    %v3151 = vadd.f32 %v3149, %v3150
    %v3152 = vmul.f32 %v3151, %v1960
    %v3153 = vpack.c.bf16 %v3152, %v3152
    %v3155 = vsel %vm804, %v3153, 0
    %3157 = vmatpush.bf16.msra.mxu0 0
    %3158 = vmatpush.bf16.msra.mxu0 0
    %3159 = vmatpush.bf16.msra.mxu0 0
    %3160 = vmatpush.bf16.msra.mxu0 0
    %3161 = vmatpush.bf16.msra.mxu0 0
    %3162 = vmatpush.bf16.msra.mxu0 0
    %3163 = vmatpush.bf16.msra.mxu0 0
    %3164 = vmatpush.bf16.msra.mxu0 %v1967
    %3165 = vmatmul.bf16.gmra.mxu0 %v3155
    %v3166 = vpop.f32.mrf.mxu0
    %v3167 = vadd.f32 %v204, %v3166
    %v3168 = vpop.f32.mrf.mxu0
    %3169 = vdwg.mxu0
    %vm3170 = vcmp.ge.f32.partialorder %v3167, 0.0
    %v3171 = vmul.f32 %v3167, 0.25
    %v3172 = vsel %vm3170, %v3167, %v3171
    %v3173 = vpack.c.bf16 %v3172, %v3172
    %v3175 = vsel %vm1005, %v3173, 0
    %3177 = vmatpush.bf16.msra.mxu0 0
    %3178 = vmatpush.bf16.msra.mxu0 0
    %3179 = vmatpush.bf16.msra.mxu0 0
    %3180 = vmatpush.bf16.msra.mxu0 0
    %3181 = vmatpush.bf16.msra.mxu0 0
    %3182 = vmatpush.bf16.msra.mxu0 0
    %3183 = vmatpush.bf16.msra.mxu0 0
    %3184 = vmatpush.bf16.msra.mxu0 %v1994
    %3185 = vmatmul.bf16.gmra.mxu0 %v3175
    %v3186 = vpop.f32.mrf.mxu0
    %v3187 = vadd.f32 %v206, %v3186
    %v3188 = vpop.f32.mrf.mxu0
    %3189 = vdwg.mxu0
    %vm3190 = vcmp.ge.f32.partialorder %v3187, 0.0
    %v3191 = vmul.f32 %v3187, 0.25
    %v3192 = vsel %vm3190, %v3187, %v3191
    %v3193 = vpack.c.bf16 %v3192, %v3192
    %v3195 = vsel %vm1005, %v3193, 0
    %3197 = vmatpush.bf16.msra.mxu0 0
    %3198 = vmatpush.bf16.msra.mxu0 0
    %3199 = vmatpush.bf16.msra.mxu0 0
    %3200 = vmatpush.bf16.msra.mxu0 0
    %3201 = vmatpush.bf16.msra.mxu0 0
    %3202 = vmatpush.bf16.msra.mxu0 0
    %3203 = vmatpush.bf16.msra.mxu0 0
    %3204 = vmatpush.bf16.msra.mxu0 %v2017
    %3205 = vmatmul.bf16.gmra.mxu0 %v3195
    %v3206 = vpop.f32.mrf.mxu0
    %v3207 = vadd.f32 %v208, %v3206
    %v3208 = vpop.f32.mrf.mxu0
    %3209 = vdwg.mxu0
    %v3210 = vsub.f32 0.0, %v3207
    %v3211 = vmul.f32 %v3210, 1.442695
    %v3212 = vpow.pop %v3211
    %v3213 = vadd.f32 %v3212, 1.0
    %v3214 = vrcp.pop %v3213
    %v3215 = vmul.f32 %v3213, %v3214
    %v3216 = vsub.f32 1.0, %v3215
    %v3217 = vmul.f32 %v3214, %v3216
    %v3218 = vadd.f32 %v3214, %v3217
    %vm3219 = vweird.f32 %v3213
    %vm3220 = vweird.f32 %v3214
    %vm3221 = vmor %vm3219, %vm3220
    %v3222 = vsel %vm3221, %v3214, %v3218
    %v3223 = vand.u32 2147483647, %v3213
    %vm3224 = vcmp.eq.f32.partialorder %v3223, 8.507059e+37
    %v3225 = vand.u32 %v3213, 2147483648
    %v3226 = vor.u32 1.1754944e-38, %v3225
    %v3227 = vsel %vm3224, %v3226, %v3222
    %v3228 = vmul.f32 1.0, %v3227
    %3229 = vst.msk [vmem:[#allocation10 + $0x1] sm:$0x1] %vm2051, %v3228
    // Predicated region
    $region94: #{multiscale_specklenet_forward.1} parent=1 // pred_check
      _
    $region95: #{multiscale_specklenet_forward.1} parent=1 // pred_check_branch
      %3231 = sbr.rel (0) target = $region97
    $region96: #{multiscale_specklenet_forward.1} parent=1 // pred_region
      %3233 = vsyncadd [#allocation4], 0
      %s3235 = sshll.u32 [#allocation10], 4
      %s3236 = int_to_ptr.vmem [resolvable:$true] %s3235
      %s3237 = sshll.u32 %s19, 4
      %s3238 = int_to_ptr.hbm [resolvable:$true] %s3237
      %3240 = dma.vmem_to_hbm [thread:$0]  %s3236, 32, %s3238, [#allocation4]
    $region97: #{multiscale_specklenet_forward.1} parent=1 // pred_fallthru
      _
    // Predicated region
    $region98: #{multiscale_specklenet_forward.1} parent=1 // pred_check
      _
    $region99: #{multiscale_specklenet_forward.1} parent=1 // pred_check_branch
      %3242 = sbr.rel (0) target = $region101
    $region100: #{multiscale_specklenet_forward.1} parent=1 // pred_region
      %3244 = dma.done [#allocation4], 32
    $region101: #{multiscale_specklenet_forward.1} parent=1 // pred_fallthru
      _
    %3245 = vsyncpa [#allocation3], 1
    %3246 = vsyncpa [#allocation6], 1
    %3247 = vsyncpa [#allocation9], 1
    %3248 = vsyncpa [#allocation4], 1

</llo_original>
